<compile_context>
chip_gen: v6e
topology: v6e:2x2x1
jax: 0.10.0
libtpu: 0.0.40
codegen_flags: <defaults>
</compile_context>

<pallas_src>
import functools
import math

import jax
import jax.numpy as jnp
import numpy as np
from jax.experimental import pallas as pl
from jax.experimental.pallas import tpu as pltpu

LN_EPS = 1e-5


def _layer_norm(x, w, b):
    mu = jnp.mean(x, axis=-1, keepdims=True)
    var = jnp.mean((x - mu) ** 2, axis=-1, keepdims=True)
    return (x - mu) * jax.lax.rsqrt(var + LN_EPS) * w + b


def transformer_block_kernel(
    x_ref,
    ln1w_ref, ln1b_ref,
    wq_ref, wk_ref, wv_ref,
    bq_ref, bk_ref, bv_ref,
    wo_ref, bo_ref,
    ln2w_ref, ln2b_ref,
    w1_ref, b1_ref,
    w2_ref, b2_ref,
    o_ref,
    *, num_heads, batched_heads,
):
    Bt, N, E = x_ref.shape
    H = num_heads
    D = E // H
    R = Bt * N
    scale = 1.0 / math.sqrt(D)
    bf16 = jnp.bfloat16
    f32 = jnp.float32

    # Flatten the batch block so QKV / out-proj / MLP matmuls see a single big M dim.
    x = x_ref[...].astype(f32).reshape(R, E)                    # [R, E]

    # ---- LayerNorm 1 (f32 vector math) ----
    xn = _layer_norm(x, ln1w_ref[0], ln1b_ref[0])
    xn_b = xn.astype(bf16)

    # ---- QKV projections: one 2D bf16 matmul each, f32 accumulation ----
    q = jnp.dot(xn_b, wq_ref[...], preferred_element_type=f32) + bq_ref[0]
    k = jnp.dot(xn_b, wk_ref[...], preferred_element_type=f32) + bk_ref[0]
    v = jnp.dot(xn_b, wv_ref[...], preferred_element_type=f32) + bv_ref[0]
    q = q * scale

    if batched_heads:
        # ---- Batched multi-head attention: all (batch, head) pairs in one 3D contraction ----
        def split_heads(t2d):
            # (Bt*N, H*D) f32 -> (H*Bt, N, D) bf16; leading axis enumerates (head, batch).
            t = t2d.astype(bf16)
            return jnp.concatenate(
                [t[:, h * D:(h + 1) * D].reshape(Bt, N, D) for h in range(H)], axis=0)

        def merge_heads(o3d):
            # (H*Bt, N, D) f32 -> (Bt*N, H*D) f32
            return jnp.concatenate(
                [o3d[h * Bt:(h + 1) * Bt] for h in range(H)], axis=-1).reshape(R, E)

        qh, kh, vh = split_heads(q), split_heads(k), split_heads(v)

        # Block over query rows so the score matrix stays bounded at realistic N.
        q_blk = N if N <= 512 else 256
        o_parts = []
        for qs in range(0, N, q_blk):
            qw = min(q_blk, N - qs)
            qb = qh[:, qs:qs + qw, :]                                        # [HB, qw, D]
            s = jnp.einsum("bqd,bkd->bqk", qb, kh, preferred_element_type=f32)
            s = s - jnp.max(s, axis=-1, keepdims=True)
            p = jnp.exp(s)
            p = p * pl.reciprocal(jnp.sum(p, axis=-1, keepdims=True), approx=True)
            o_parts.append(jnp.einsum("bqk,bkd->bqd", p.astype(bf16), vh,
                                      preferred_element_type=f32))           # [HB, qw, D]
        o = o_parts[0] if len(o_parts) == 1 else jnp.concatenate(o_parts, axis=1)
        attn = merge_heads(o)                                                # [R, E]
    else:
        # Fallback: per-(batch, head) 2D matmuls (kept only as a lowering safety net).
        per_batch = []
        for b in range(Bt):
            head_outs = []
            for h in range(H):
                qh = q[b * N:(b + 1) * N, h * D:(h + 1) * D]
                kh = k[b * N:(b + 1) * N, h * D:(h + 1) * D]
                vh = v[b * N:(b + 1) * N, h * D:(h + 1) * D]
                s = jnp.dot(qh, kh.T, preferred_element_type=f32)
                s = s - jnp.max(s, axis=-1, keepdims=True)
                p = jnp.exp(s)
                p = p * pl.reciprocal(jnp.sum(p, axis=-1, keepdims=True), approx=True)
                head_outs.append(jnp.dot(p, vh, preferred_element_type=f32))
            per_batch.append(jnp.concatenate(head_outs, axis=-1))            # [N, E]
        attn = jnp.concatenate(per_batch, axis=0)                            # [R, E]

    # ---- Output projection + residual 1 ----
    attn = jnp.dot(attn.astype(bf16), wo_ref[...], preferred_element_type=f32) + bo_ref[0]
    x1 = x + attn

    # ---- LayerNorm 2 + MLP (hidden dim processed in chunks, f32 accumulator) ----
    x2n = _layer_norm(x1, ln2w_ref[0], ln2b_ref[0]).astype(bf16)
    hidden = w1_ref.shape[1]
    chunk = hidden if hidden <= 1024 else 512
    mlp = jnp.zeros((R, E), f32)
    for c in range(0, hidden, chunk):
        w = min(chunk, hidden - c)
        h1 = jnp.dot(x2n, w1_ref[:, c:c + w], preferred_element_type=f32) + b1_ref[0, c:c + w]
        h1 = jnp.maximum(h1, 0.0).astype(bf16)                               # ReLU
        mlp = mlp + jnp.dot(h1, w2_ref[c:c + w, :], preferred_element_type=f32)
    mlp = mlp + b2_ref[0]

    # ---- Residual 2: full lane-dense (Bt, N, E) slab store ----
    o_ref[...] = (x1 + mlp).reshape(Bt, N, E).astype(o_ref.dtype)


_PARAM_ORDER = ("ln1_w", "ln1_b", "w_q", "w_k", "w_v", "b_q", "b_k", "b_v",
                "w_o", "b_o", "ln2_w", "ln2_b", "w1", "b1", "w2", "b2")
_BF16_PARAMS = {"w_q", "w_k", "w_v", "w_o", "w1", "w2"}   # matmul weights fed to the MXU


def _choose_batch_block(B, N):
    # Largest divisor of B giving <= ~512 rows per grid step (big MXU M dim), but keep at
    # least 2 grid steps when the batch allows it (megacore sharding / DMA pipelining).
    best = 1
    for d in range(1, B + 1):
        if B % d == 0 and d * N <= 512:
            best = d
    while best > 1 and B // best < 2:
        best = max(d for d in range(1, best) if B % d == 0)
    return best


def transformer_block(x, params, *, num_heads, batch_block=None):
    B, N, E = x.shape
    assert E % num_heads == 0, "embed_dim must be divisible by num_heads"
    if batch_block is None:
        batch_block = _choose_batch_block(B, N)
    assert B % batch_block == 0
    grid = (B // batch_block,)

    plist = [params[name].astype(jnp.bfloat16) if name in _BF16_PARAMS else params[name]
             for name in _PARAM_ORDER]
    # Constant index_map -> same weight tile reused across every grid step (no re-DMA).
    param_specs = [pl.BlockSpec(p.shape, lambda b: (0, 0)) for p in plist]

    def build(batched_heads):
        kernel = functools.partial(transformer_block_kernel,
                                   num_heads=num_heads, batched_heads=batched_heads)
        return pl.pallas_call(
            kernel,
            out_shape=jax.ShapeDtypeStruct((B, N, E), x.dtype),
            grid=grid,
            in_specs=[pl.BlockSpec((batch_block, N, E), lambda b: (b, 0, 0))] + param_specs,
            out_specs=pl.BlockSpec((batch_block, N, E), lambda b: (b, 0, 0)),
            compiler_params=pltpu.CompilerParams(
                dimension_semantics=("parallel",),
                vmem_limit_bytes=48 * 1024 * 1024,
            ),
        )

    # Prefer the batched-heads attention; degrade to per-head matmuls only if the local
    # Mosaic build rejects the batched 3D contraction.
    try:
        return build(batched_heads=True)(x, *plist)
    except Exception:                     # lowering / unsupported-feature fallback
        return build(batched_heads=False)(x, *plist)


def transformer_block_ref(x, params, *, num_heads):
    """Pure-JAX reference mirroring the kernel's mixed precision
    (bf16 matmul operands, f32 accumulation; dropout = identity)."""
    B, N, E = x.shape
    H, D = num_heads, E // num_heads
    bf, f32 = jnp.bfloat16, jnp.float32

    def ln(v, w, b):
        mu = jnp.mean(v, axis=-1, keepdims=True)
        var = jnp.mean((v - mu) ** 2, axis=-1, keepdims=True)
        return (v - mu) * jax.lax.rsqrt(var + LN_EPS) * w[0] + b[0]

    def mm(a, w):
        return jnp.dot(a.astype(bf), w.astype(bf), preferred_element_type=f32)

    x = x.astype(f32)
    xn = ln(x, params["ln1_w"], params["ln1_b"])
    q = (mm(xn, params["w_q"]) + params["b_q"][0]) / math.sqrt(D)
    k = mm(xn, params["w_k"]) + params["b_k"][0]
    v = mm(xn, params["w_v"]) + params["b_v"][0]
    qh = q.reshape(B, N, H, D).transpose(0, 2, 1, 3).astype(bf)
    kh = k.reshape(B, N, H, D).transpose(0, 2, 1, 3).astype(bf)
    vh = v.reshape(B, N, H, D).transpose(0, 2, 1, 3).astype(bf)
    s = jnp.einsum("bhnd,bhmd->bhnm", qh, kh, preferred_element_type=f32)
    p = jax.nn.softmax(s, axis=-1)
    o = jnp.einsum("bhnm,bhmd->bhnd", p.astype(bf), vh, preferred_element_type=f32)
    o = o.transpose(0, 2, 1, 3).reshape(B, N, E)
    attn = mm(o, params["w_o"]) + params["b_o"][0]
    x1 = x + attn
    x2n = ln(x1, params["ln2_w"], params["ln2_b"])
    h1 = jnp.maximum(mm(x2n, params["w1"]) + params["b1"][0], 0.0)
    mlp = mm(h1, params["w2"]) + params["b2"][0]
    return x1 + mlp


def init_params(key, embed_dim, mlp_ratio=4.0):
    hidden = int(embed_dim * mlp_ratio)
    ks = jax.random.split(key, 8)
    s_e = 1.0 / math.sqrt(embed_dim)
    s_h = 1.0 / math.sqrt(hidden)
    return {
        "ln1_w": jnp.ones((1, embed_dim), jnp.float32),
        "ln1_b": jnp.zeros((1, embed_dim), jnp.float32),
        "w_q": jax.random.uniform(ks[0], (embed_dim, embed_dim), jnp.float32, -s_e, s_e),
        "w_k": jax.random.uniform(ks[1], (embed_dim, embed_dim), jnp.float32, -s_e, s_e),
        "w_v": jax.random.uniform(ks[2], (embed_dim, embed_dim), jnp.float32, -s_e, s_e),
        "b_q": jnp.zeros((1, embed_dim), jnp.float32),
        "b_k": jnp.zeros((1, embed_dim), jnp.float32),
        "b_v": jnp.zeros((1, embed_dim), jnp.float32),
        "w_o": jax.random.uniform(ks[3], (embed_dim, embed_dim), jnp.float32, -s_e, s_e),
        "b_o": jnp.zeros((1, embed_dim), jnp.float32),
        "ln2_w": jnp.ones((1, embed_dim), jnp.float32),
        "ln2_b": jnp.zeros((1, embed_dim), jnp.float32),
        "w1": jax.random.uniform(ks[4], (embed_dim, hidden), jnp.float32, -s_e, s_e),
        "b1": jax.random.uniform(ks[5], (1, hidden), jnp.float32, -s_e, s_e),
        "w2": jax.random.uniform(ks[6], (hidden, embed_dim), jnp.float32, -s_h, s_h),
        "b2": jax.random.uniform(ks[7], (1, embed_dim), jnp.float32, -s_h, s_h),
    }


if __name__ == "__main__":
    B, N, E = 2, 16, 32          # batch, tokens (H*W flattened), embed_dim
    num_heads = 4                # head_dim = 8
    key = jax.random.PRNGKey(0)
    kx, kp = jax.random.split(key)
    x = jax.random.normal(kx, (B, N, E), dtype=jnp.float32)
    params = init_params(kp, E, mlp_ratio=4.0)

    out = jax.block_until_ready(transformer_block(x, params, num_heads=num_heads))
    ref = jax.block_until_ready(transformer_block_ref(x, params, num_heads=num_heads))
    assert out.shape == (B, N, E)
    np.testing.assert_allclose(np.asarray(out), np.asarray(ref), rtol=2e-2, atol=2e-2)

    print("KERNEL_OK")
</pallas_src>

<mosaic_0001>
module attributes {stable_mosaic.version = 11 : i64} {
  func.func @transformer_block_kernel(%arg0: i32, %arg1: memref<1x16x32xf32, #tpu.memory_space<vmem>>, %arg2: memref<1x32xf32, #tpu.memory_space<vmem>>, %arg3: memref<1x32xf32, #tpu.memory_space<vmem>>, %arg4: memref<32x32xbf16, #tpu.memory_space<vmem>>, %arg5: memref<32x32xbf16, #tpu.memory_space<vmem>>, %arg6: memref<32x32xbf16, #tpu.memory_space<vmem>>, %arg7: memref<1x32xf32, #tpu.memory_space<vmem>>, %arg8: memref<1x32xf32, #tpu.memory_space<vmem>>, %arg9: memref<1x32xf32, #tpu.memory_space<vmem>>, %arg10: memref<32x32xbf16, #tpu.memory_space<vmem>>, %arg11: memref<1x32xf32, #tpu.memory_space<vmem>>, %arg12: memref<1x32xf32, #tpu.memory_space<vmem>>, %arg13: memref<1x32xf32, #tpu.memory_space<vmem>>, %arg14: memref<32x128xbf16, #tpu.memory_space<vmem>>, %arg15: memref<1x128xf32, #tpu.memory_space<vmem>>, %arg16: memref<128x32xbf16, #tpu.memory_space<vmem>>, %arg17: memref<1x32xf32, #tpu.memory_space<vmem>>, %arg18: memref<1x16x32xf32, #tpu.memory_space<vmem>>) attributes {dimension_semantics = [#tpu.dimension_semantics<parallel>], iteration_bounds = array<i64: 2>, scalar_prefetch = 0 : i64, scratch_operands = 0 : i64, tpu.core_type = #tpu.core_type<tc>, window_params = [{transform_indices = @transform_0, window_bounds = array<i64: 1, 16, 32>}, {pipeline_mode = #tpu.pipeline_mode<synchronous>, transform_indices = @transform_1, window_bounds = array<i64: 1, 32>}, {pipeline_mode = #tpu.pipeline_mode<synchronous>, transform_indices = @transform_2, window_bounds = array<i64: 1, 32>}, {pipeline_mode = #tpu.pipeline_mode<synchronous>, transform_indices = @transform_3, window_bounds = array<i64: 32, 32>}, {pipeline_mode = #tpu.pipeline_mode<synchronous>, transform_indices = @transform_4, window_bounds = array<i64: 32, 32>}, {pipeline_mode = #tpu.pipeline_mode<synchronous>, transform_indices = @transform_5, window_bounds = array<i64: 32, 32>}, {pipeline_mode = #tpu.pipeline_mode<synchronous>, transform_indices = @transform_6, window_bounds = array<i64: 1, 32>}, {pipeline_mode = #tpu.pipeline_mode<synchronous>, transform_indices = @transform_7, window_bounds = array<i64: 1, 32>}, {pipeline_mode = #tpu.pipeline_mode<synchronous>, transform_indices = @transform_8, window_bounds = array<i64: 1, 32>}, {pipeline_mode = #tpu.pipeline_mode<synchronous>, transform_indices = @transform_9, window_bounds = array<i64: 32, 32>}, {pipeline_mode = #tpu.pipeline_mode<synchronous>, transform_indices = @transform_10, window_bounds = array<i64: 1, 32>}, {pipeline_mode = #tpu.pipeline_mode<synchronous>, transform_indices = @transform_11, window_bounds = array<i64: 1, 32>}, {pipeline_mode = #tpu.pipeline_mode<synchronous>, transform_indices = @transform_12, window_bounds = array<i64: 1, 32>}, {pipeline_mode = #tpu.pipeline_mode<synchronous>, transform_indices = @transform_13, window_bounds = array<i64: 32, 128>}, {pipeline_mode = #tpu.pipeline_mode<synchronous>, transform_indices = @transform_14, window_bounds = array<i64: 1, 128>}, {pipeline_mode = #tpu.pipeline_mode<synchronous>, transform_indices = @transform_15, window_bounds = array<i64: 128, 32>}, {pipeline_mode = #tpu.pipeline_mode<synchronous>, transform_indices = @transform_16, window_bounds = array<i64: 1, 32>}, {transform_indices = @transform_17, window_bounds = array<i64: 1, 16, 32>}]} {
    %c0 = arith.constant 0 : index
    %c0_0 = arith.constant 0 : index
    %c0_1 = arith.constant 0 : index
    %0 = vector.load %arg1[%c0, %c0_0, %c0_1] : memref<1x16x32xf32, #tpu.memory_space<vmem>>, vector<1x16x32xf32>
    %1 = vector.shape_cast %0 : vector<1x16x32xf32> to vector<16x32xf32>
    %c0_2 = arith.constant 0 : index
    %c0_3 = arith.constant 0 : index
    %2 = vector.load %arg2[%c0_2, %c0_3] : memref<1x32xf32, #tpu.memory_space<vmem>>, vector<1x32xf32>
    %3 = vector.shape_cast %2 : vector<1x32xf32> to vector<32xf32>
    %c0_4 = arith.constant 0 : index
    %c0_5 = arith.constant 0 : index
    %4 = vector.load %arg3[%c0_4, %c0_5] : memref<1x32xf32, #tpu.memory_space<vmem>>, vector<1x32xf32>
    %5 = vector.shape_cast %4 : vector<1x32xf32> to vector<32xf32>
    %cst = arith.constant dense<0.000000e+00> : vector<16xf32>
    %6 = vector.multi_reduction <add>, %1, %cst [1] : vector<16x32xf32> to vector<16xf32>
    %7 = vector.shape_cast %6 : vector<16xf32> to vector<16x1xf32>
    %cst_6 = arith.constant 3.200000e+01 : f32
    %8 = vector.broadcast %cst_6 : f32 to vector<16x1xf32>
    %9 = arith.divf %7, %8 : vector<16x1xf32>
    %10 = vector.broadcast %9 : vector<16x1xf32> to vector<16x32xf32>
    %11 = arith.subf %1, %10 : vector<16x32xf32>
    %12 = arith.mulf %11, %11 : vector<16x32xf32>
    %cst_7 = arith.constant dense<0.000000e+00> : vector<16xf32>
    %13 = vector.multi_reduction <add>, %12, %cst_7 [1] : vector<16x32xf32> to vector<16xf32>
    %14 = vector.shape_cast %13 : vector<16xf32> to vector<16x1xf32>
    %cst_8 = arith.constant 3.200000e+01 : f32
    %15 = vector.broadcast %cst_8 : f32 to vector<16x1xf32>
    %16 = arith.divf %14, %15 : vector<16x1xf32>
    %17 = vector.broadcast %9 : vector<16x1xf32> to vector<16x32xf32>
    %18 = arith.subf %1, %17 : vector<16x32xf32>
    %cst_9 = arith.constant 9.99999974E-6 : f32
    %19 = vector.broadcast %cst_9 : f32 to vector<16x1xf32>
    %20 = arith.addf %16, %19 : vector<16x1xf32>
    %21 = math.rsqrt %20 : vector<16x1xf32>
    %22 = vector.broadcast %21 : vector<16x1xf32> to vector<16x32xf32>
    %23 = arith.mulf %18, %22 : vector<16x32xf32>
    %24 = vector.shape_cast %3 : vector<32xf32> to vector<1x32xf32>
    %25 = vector.broadcast %24 : vector<1x32xf32> to vector<16x32xf32>
    %26 = arith.mulf %23, %25 : vector<16x32xf32>
    %27 = vector.shape_cast %5 : vector<32xf32> to vector<1x32xf32>
    %28 = vector.broadcast %27 : vector<1x32xf32> to vector<16x32xf32>
    %29 = arith.addf %26, %28 : vector<16x32xf32>
    %30 = arith.truncf %29 : vector<16x32xf32> to vector<16x32xbf16>
    %c0_10 = arith.constant 0 : index
    %c0_11 = arith.constant 0 : index
    %31 = vector.load %arg4[%c0_10, %c0_11] : memref<32x32xbf16, #tpu.memory_space<vmem>>, vector<32x32xbf16>
    %cst_12 = arith.constant dense<0.000000e+00> : vector<16x32xf32>
    %32 = tpu.matmul %30, %31, %cst_12 {dimension_numbers = #tpu.dot_dimension_numbers<[1], [0], [0], [1], [0, 0, 1, 1], [], []>} : vector<16x32xbf16>, vector<32x32xbf16>, vector<16x32xf32> -> vector<16x32xf32>
    %c0_13 = arith.constant 0 : index
    %c0_14 = arith.constant 0 : index
    %33 = vector.load %arg7[%c0_13, %c0_14] : memref<1x32xf32, #tpu.memory_space<vmem>>, vector<1x32xf32>
    %34 = vector.shape_cast %33 : vector<1x32xf32> to vector<32xf32>
    %35 = vector.shape_cast %34 : vector<32xf32> to vector<1x32xf32>
    %36 = vector.broadcast %35 : vector<1x32xf32> to vector<16x32xf32>
    %37 = arith.addf %32, %36 : vector<16x32xf32>
    %c0_15 = arith.constant 0 : index
    %c0_16 = arith.constant 0 : index
    %38 = vector.load %arg5[%c0_15, %c0_16] : memref<32x32xbf16, #tpu.memory_space<vmem>>, vector<32x32xbf16>
    %cst_17 = arith.constant dense<0.000000e+00> : vector<16x32xf32>
    %39 = tpu.matmul %30, %38, %cst_17 {dimension_numbers = #tpu.dot_dimension_numbers<[1], [0], [0], [1], [0, 0, 1, 1], [], []>} : vector<16x32xbf16>, vector<32x32xbf16>, vector<16x32xf32> -> vector<16x32xf32>
    %c0_18 = arith.constant 0 : index
    %c0_19 = arith.constant 0 : index
    %40 = vector.load %arg8[%c0_18, %c0_19] : memref<1x32xf32, #tpu.memory_space<vmem>>, vector<1x32xf32>
    %41 = vector.shape_cast %40 : vector<1x32xf32> to vector<32xf32>
    %42 = vector.shape_cast %41 : vector<32xf32> to vector<1x32xf32>
    %43 = vector.broadcast %42 : vector<1x32xf32> to vector<16x32xf32>
    %44 = arith.addf %39, %43 : vector<16x32xf32>
    %c0_20 = arith.constant 0 : index
    %c0_21 = arith.constant 0 : index
    %45 = vector.load %arg6[%c0_20, %c0_21] : memref<32x32xbf16, #tpu.memory_space<vmem>>, vector<32x32xbf16>
    %cst_22 = arith.constant dense<0.000000e+00> : vector<16x32xf32>
    %46 = tpu.matmul %30, %45, %cst_22 {dimension_numbers = #tpu.dot_dimension_numbers<[1], [0], [0], [1], [0, 0, 1, 1], [], []>} : vector<16x32xbf16>, vector<32x32xbf16>, vector<16x32xf32> -> vector<16x32xf32>
    %c0_23 = arith.constant 0 : index
    %c0_24 = arith.constant 0 : index
    %47 = vector.load %arg9[%c0_23, %c0_24] : memref<1x32xf32, #tpu.memory_space<vmem>>, vector<1x32xf32>
    %48 = vector.shape_cast %47 : vector<1x32xf32> to vector<32xf32>
    %49 = vector.shape_cast %48 : vector<32xf32> to vector<1x32xf32>
    %50 = vector.broadcast %49 : vector<1x32xf32> to vector<16x32xf32>
    %51 = arith.addf %46, %50 : vector<16x32xf32>
    %cst_25 = arith.constant 0.353553385 : f32
    %52 = vector.broadcast %cst_25 : f32 to vector<16x32xf32>
    %53 = arith.mulf %37, %52 : vector<16x32xf32>
    %54 = arith.truncf %53 : vector<16x32xf32> to vector<16x32xbf16>
    %55 = vector.extract_strided_slice %54 {offsets = [0, 0], sizes = [16, 8], strides = [1, 1]} : vector<16x32xbf16> to vector<16x8xbf16>
    %56 = vector.shape_cast %55 : vector<16x8xbf16> to vector<1x16x8xbf16>
    %57 = vector.extract_strided_slice %54 {offsets = [0, 8], sizes = [16, 8], strides = [1, 1]} : vector<16x32xbf16> to vector<16x8xbf16>
    %58 = vector.shape_cast %57 : vector<16x8xbf16> to vector<1x16x8xbf16>
    %59 = vector.extract_strided_slice %54 {offsets = [0, 16], sizes = [16, 8], strides = [1, 1]} : vector<16x32xbf16> to vector<16x8xbf16>
    %60 = vector.shape_cast %59 : vector<16x8xbf16> to vector<1x16x8xbf16>
    %61 = vector.extract_strided_slice %54 {offsets = [0, 24], sizes = [16, 8], strides = [1, 1]} : vector<16x32xbf16> to vector<16x8xbf16>
    %62 = vector.shape_cast %61 : vector<16x8xbf16> to vector<1x16x8xbf16>
    %63 = tpu.concatenate %56, %58, %60, %62 in 0 : vector<1x16x8xbf16>, vector<1x16x8xbf16>, vector<1x16x8xbf16>, vector<1x16x8xbf16> -> vector<4x16x8xbf16>
    %64 = arith.truncf %44 : vector<16x32xf32> to vector<16x32xbf16>
    %65 = vector.extract_strided_slice %64 {offsets = [0, 0], sizes = [16, 8], strides = [1, 1]} : vector<16x32xbf16> to vector<16x8xbf16>
    %66 = vector.shape_cast %65 : vector<16x8xbf16> to vector<1x16x8xbf16>
    %67 = vector.extract_strided_slice %64 {offsets = [0, 8], sizes = [16, 8], strides = [1, 1]} : vector<16x32xbf16> to vector<16x8xbf16>
    %68 = vector.shape_cast %67 : vector<16x8xbf16> to vector<1x16x8xbf16>
    %69 = vector.extract_strided_slice %64 {offsets = [0, 16], sizes = [16, 8], strides = [1, 1]} : vector<16x32xbf16> to vector<16x8xbf16>
    %70 = vector.shape_cast %69 : vector<16x8xbf16> to vector<1x16x8xbf16>
    %71 = vector.extract_strided_slice %64 {offsets = [0, 24], sizes = [16, 8], strides = [1, 1]} : vector<16x32xbf16> to vector<16x8xbf16>
    %72 = vector.shape_cast %71 : vector<16x8xbf16> to vector<1x16x8xbf16>
    %73 = tpu.concatenate %66, %68, %70, %72 in 0 : vector<1x16x8xbf16>, vector<1x16x8xbf16>, vector<1x16x8xbf16>, vector<1x16x8xbf16> -> vector<4x16x8xbf16>
    %74 = arith.truncf %51 : vector<16x32xf32> to vector<16x32xbf16>
    %75 = vector.extract_strided_slice %74 {offsets = [0, 0], sizes = [16, 8], strides = [1, 1]} : vector<16x32xbf16> to vector<16x8xbf16>
    %76 = vector.shape_cast %75 : vector<16x8xbf16> to vector<1x16x8xbf16>
    %77 = vector.extract_strided_slice %74 {offsets = [0, 8], sizes = [16, 8], strides = [1, 1]} : vector<16x32xbf16> to vector<16x8xbf16>
    %78 = vector.shape_cast %77 : vector<16x8xbf16> to vector<1x16x8xbf16>
    %79 = vector.extract_strided_slice %74 {offsets = [0, 16], sizes = [16, 8], strides = [1, 1]} : vector<16x32xbf16> to vector<16x8xbf16>
    %80 = vector.shape_cast %79 : vector<16x8xbf16> to vector<1x16x8xbf16>
    %81 = vector.extract_strided_slice %74 {offsets = [0, 24], sizes = [16, 8], strides = [1, 1]} : vector<16x32xbf16> to vector<16x8xbf16>
    %82 = vector.shape_cast %81 : vector<16x8xbf16> to vector<1x16x8xbf16>
    %83 = tpu.concatenate %76, %78, %80, %82 in 0 : vector<1x16x8xbf16>, vector<1x16x8xbf16>, vector<1x16x8xbf16>, vector<1x16x8xbf16> -> vector<4x16x8xbf16>
    "tpu.trace_start"() <{level = 10 : i32, message = "bqd,bkd->bqk"}> : () -> ()
    %cst_26 = arith.constant dense<0.000000e+00> : vector<4x16x16xf32>
    %84 = tpu.matmul %63, %73, %cst_26 {dimension_numbers = #tpu.dot_dimension_numbers<[2], [2], [1], [1], [0, 0, 0, 1, 1, 1], [0], [0]>} : vector<4x16x8xbf16>, vector<4x16x8xbf16>, vector<4x16x16xf32> -> vector<4x16x16xf32>
    "tpu.trace_stop"() : () -> ()
    %cst_27 = arith.constant dense<0xFF800000> : vector<4x16xf32>
    %85 = vector.multi_reduction <maximumf>, %84, %cst_27 [2] : vector<4x16x16xf32> to vector<4x16xf32>
    %86 = vector.shape_cast %85 : vector<4x16xf32> to vector<4x16x1xf32>
    %87 = vector.broadcast %86 : vector<4x16x1xf32> to vector<4x16x16xf32>
    %88 = arith.subf %84, %87 : vector<4x16x16xf32>
    %89 = math.exp %88 : vector<4x16x16xf32>
    %cst_28 = arith.constant dense<0.000000e+00> : vector<4x16xf32>
    %90 = vector.multi_reduction <add>, %89, %cst_28 [2] : vector<4x16x16xf32> to vector<4x16xf32>
    %91 = vector.shape_cast %90 : vector<4x16xf32> to vector<4x16x1xf32>
    %92 = tpu.reciprocal %91 {approx = true} : vector<4x16x1xf32> -> vector<4x16x1xf32>
    %93 = vector.broadcast %92 : vector<4x16x1xf32> to vector<4x16x16xf32>
    %94 = arith.mulf %89, %93 : vector<4x16x16xf32>
    %95 = arith.truncf %94 : vector<4x16x16xf32> to vector<4x16x16xbf16>
    "tpu.trace_start"() <{level = 10 : i32, message = "bqk,bkd->bqd"}> : () -> ()
    %cst_29 = arith.constant dense<0.000000e+00> : vector<4x16x8xf32>
    %96 = tpu.matmul %95, %83, %cst_29 {dimension_numbers = #tpu.dot_dimension_numbers<[2], [1], [1], [2], [0, 0, 0, 1, 1, 2], [0], [0]>} : vector<4x16x16xbf16>, vector<4x16x8xbf16>, vector<4x16x8xf32> -> vector<4x16x8xf32>
    "tpu.trace_stop"() : () -> ()
    %97 = vector.extract_strided_slice %96 {offsets = [0, 0, 0], sizes = [1, 16, 8], strides = [1, 1, 1]} : vector<4x16x8xf32> to vector<1x16x8xf32>
    %98 = vector.extract_strided_slice %96 {offsets = [1, 0, 0], sizes = [1, 16, 8], strides = [1, 1, 1]} : vector<4x16x8xf32> to vector<1x16x8xf32>
    %99 = vector.extract_strided_slice %96 {offsets = [2, 0, 0], sizes = [1, 16, 8], strides = [1, 1, 1]} : vector<4x16x8xf32> to vector<1x16x8xf32>
    %100 = vector.extract_strided_slice %96 {offsets = [3, 0, 0], sizes = [1, 16, 8], strides = [1, 1, 1]} : vector<4x16x8xf32> to vector<1x16x8xf32>
    %101 = tpu.concatenate %97, %98, %99, %100 in 2 : vector<1x16x8xf32>, vector<1x16x8xf32>, vector<1x16x8xf32>, vector<1x16x8xf32> -> vector<1x16x32xf32>
    %102 = vector.shape_cast %101 : vector<1x16x32xf32> to vector<16x32xf32>
    %103 = arith.truncf %102 : vector<16x32xf32> to vector<16x32xbf16>
    %c0_30 = arith.constant 0 : index
    %c0_31 = arith.constant 0 : index
    %104 = vector.load %arg10[%c0_30, %c0_31] : memref<32x32xbf16, #tpu.memory_space<vmem>>, vector<32x32xbf16>
    %cst_32 = arith.constant dense<0.000000e+00> : vector<16x32xf32>
    %105 = tpu.matmul %103, %104, %cst_32 {dimension_numbers = #tpu.dot_dimension_numbers<[1], [0], [0], [1], [0, 0, 1, 1], [], []>} : vector<16x32xbf16>, vector<32x32xbf16>, vector<16x32xf32> -> vector<16x32xf32>
    %c0_33 = arith.constant 0 : index
    %c0_34 = arith.constant 0 : index
    %106 = vector.load %arg11[%c0_33, %c0_34] : memref<1x32xf32, #tpu.memory_space<vmem>>, vector<1x32xf32>
    %107 = vector.shape_cast %106 : vector<1x32xf32> to vector<32xf32>
    %108 = vector.shape_cast %107 : vector<32xf32> to vector<1x32xf32>
    %109 = vector.broadcast %108 : vector<1x32xf32> to vector<16x32xf32>
    %110 = arith.addf %105, %109 : vector<16x32xf32>
    %111 = arith.addf %1, %110 : vector<16x32xf32>
    %c0_35 = arith.constant 0 : index
    %c0_36 = arith.constant 0 : index
    %112 = vector.load %arg12[%c0_35, %c0_36] : memref<1x32xf32, #tpu.memory_space<vmem>>, vector<1x32xf32>
    %113 = vector.shape_cast %112 : vector<1x32xf32> to vector<32xf32>
    %c0_37 = arith.constant 0 : index
    %c0_38 = arith.constant 0 : index
    %114 = vector.load %arg13[%c0_37, %c0_38] : memref<1x32xf32, #tpu.memory_space<vmem>>, vector<1x32xf32>
    %115 = vector.shape_cast %114 : vector<1x32xf32> to vector<32xf32>
    %cst_39 = arith.constant dense<0.000000e+00> : vector<16xf32>
    %116 = vector.multi_reduction <add>, %111, %cst_39 [1] : vector<16x32xf32> to vector<16xf32>
    %117 = vector.shape_cast %116 : vector<16xf32> to vector<16x1xf32>
    %cst_40 = arith.constant 3.200000e+01 : f32
    %118 = vector.broadcast %cst_40 : f32 to vector<16x1xf32>
    %119 = arith.divf %117, %118 : vector<16x1xf32>
    %120 = vector.broadcast %119 : vector<16x1xf32> to vector<16x32xf32>
    %121 = arith.subf %111, %120 : vector<16x32xf32>
    %122 = arith.mulf %121, %121 : vector<16x32xf32>
    %cst_41 = arith.constant dense<0.000000e+00> : vector<16xf32>
    %123 = vector.multi_reduction <add>, %122, %cst_41 [1] : vector<16x32xf32> to vector<16xf32>
    %124 = vector.shape_cast %123 : vector<16xf32> to vector<16x1xf32>
    %cst_42 = arith.constant 3.200000e+01 : f32
    %125 = vector.broadcast %cst_42 : f32 to vector<16x1xf32>
    %126 = arith.divf %124, %125 : vector<16x1xf32>
    %127 = vector.broadcast %119 : vector<16x1xf32> to vector<16x32xf32>
    %128 = arith.subf %111, %127 : vector<16x32xf32>
    %cst_43 = arith.constant 9.99999974E-6 : f32
    %129 = vector.broadcast %cst_43 : f32 to vector<16x1xf32>
    %130 = arith.addf %126, %129 : vector<16x1xf32>
    %131 = math.rsqrt %130 : vector<16x1xf32>
    %132 = vector.broadcast %131 : vector<16x1xf32> to vector<16x32xf32>
    %133 = arith.mulf %128, %132 : vector<16x32xf32>
    %134 = vector.shape_cast %113 : vector<32xf32> to vector<1x32xf32>
    %135 = vector.broadcast %134 : vector<1x32xf32> to vector<16x32xf32>
    %136 = arith.mulf %133, %135 : vector<16x32xf32>
    %137 = vector.shape_cast %115 : vector<32xf32> to vector<1x32xf32>
    %138 = vector.broadcast %137 : vector<1x32xf32> to vector<16x32xf32>
    %139 = arith.addf %136, %138 : vector<16x32xf32>
    %140 = arith.truncf %139 : vector<16x32xf32> to vector<16x32xbf16>
    %cst_44 = arith.constant 0.000000e+00 : f32
    %141 = vector.broadcast %cst_44 : f32 to vector<16x32xf32>
    %c0_45 = arith.constant 0 : index
    %c0_46 = arith.constant 0 : index
    %142 = vector.load %arg14[%c0_45, %c0_46] : memref<32x128xbf16, #tpu.memory_space<vmem>>, vector<32x128xbf16>
    %cst_47 = arith.constant dense<0.000000e+00> : vector<16x128xf32>
    %143 = tpu.matmul %140, %142, %cst_47 {dimension_numbers = #tpu.dot_dimension_numbers<[1], [0], [0], [1], [0, 0, 1, 1], [], []>} : vector<16x32xbf16>, vector<32x128xbf16>, vector<16x128xf32> -> vector<16x128xf32>
    %c0_48 = arith.constant 0 : index
    %c0_49 = arith.constant 0 : index
    %144 = vector.load %arg15[%c0_48, %c0_49] : memref<1x128xf32, #tpu.memory_space<vmem>>, vector<1x128xf32>
    %145 = vector.shape_cast %144 : vector<1x128xf32> to vector<128xf32>
    %146 = vector.shape_cast %145 : vector<128xf32> to vector<1x128xf32>
    %147 = vector.broadcast %146 : vector<1x128xf32> to vector<16x128xf32>
    %148 = arith.addf %143, %147 : vector<16x128xf32>
    %cst_50 = arith.constant 0.000000e+00 : f32
    %149 = vector.broadcast %cst_50 : f32 to vector<16x128xf32>
    %150 = arith.maximumf %148, %149 : vector<16x128xf32>
    %151 = arith.truncf %150 : vector<16x128xf32> to vector<16x128xbf16>
    %c0_51 = arith.constant 0 : index
    %c0_52 = arith.constant 0 : index
    %152 = vector.load %arg16[%c0_51, %c0_52] : memref<128x32xbf16, #tpu.memory_space<vmem>>, vector<128x32xbf16>
    %cst_53 = arith.constant dense<0.000000e+00> : vector<16x32xf32>
    %153 = tpu.matmul %151, %152, %cst_53 {dimension_numbers = #tpu.dot_dimension_numbers<[1], [0], [0], [1], [0, 0, 1, 1], [], []>} : vector<16x128xbf16>, vector<128x32xbf16>, vector<16x32xf32> -> vector<16x32xf32>
    %154 = arith.addf %141, %153 : vector<16x32xf32>
    %c0_54 = arith.constant 0 : index
    %c0_55 = arith.constant 0 : index
    %155 = vector.load %arg17[%c0_54, %c0_55] : memref<1x32xf32, #tpu.memory_space<vmem>>, vector<1x32xf32>
    %156 = vector.shape_cast %155 : vector<1x32xf32> to vector<32xf32>
    %157 = vector.shape_cast %156 : vector<32xf32> to vector<1x32xf32>
    %158 = vector.broadcast %157 : vector<1x32xf32> to vector<16x32xf32>
    %159 = arith.addf %154, %158 : vector<16x32xf32>
    %160 = arith.addf %111, %159 : vector<16x32xf32>
    %161 = vector.shape_cast %160 : vector<16x32xf32> to vector<1x16x32xf32>
    %c0_56 = arith.constant 0 : index
    %c0_57 = arith.constant 0 : index
    %c0_58 = arith.constant 0 : index
    %162 = vector.load %arg18[%c0_56, %c0_57, %c0_58] : memref<1x16x32xf32, #tpu.memory_space<vmem>>, vector<1x16x32xf32>
    tpu.vector_store %arg18[%c0_56, %c0_57, %c0_58], %161 {strides = array<i32>} : memref<1x16x32xf32, #tpu.memory_space<vmem>>, vector<1x16x32xf32>,
    return
  }
  func.func @transform_0(%arg0: i32) -> (i32, i32, i32) {
    %c0_i32 = arith.constant 0 : i32
    %c0_i32_0 = arith.constant 0 : i32
    %c0_i32_1 = arith.constant 0 : i32
    return %arg0, %c0_i32, %c0_i32_0 : i32, i32, i32
  }
  func.func @transform_1(%arg0: i32) -> (i32, i32) {
    %c0_i32 = arith.constant 0 : i32
    %c0_i32_0 = arith.constant 0 : i32
    %c0_i32_1 = arith.constant 0 : i32
    return %c0_i32, %c0_i32_0 : i32, i32
  }
  func.func @transform_2(%arg0: i32) -> (i32, i32) {
    %c0_i32 = arith.constant 0 : i32
    %c0_i32_0 = arith.constant 0 : i32
    %c0_i32_1 = arith.constant 0 : i32
    return %c0_i32, %c0_i32_0 : i32, i32
  }
  func.func @transform_3(%arg0: i32) -> (i32, i32) {
    %c0_i32 = arith.constant 0 : i32
    %c0_i32_0 = arith.constant 0 : i32
    %c0_i32_1 = arith.constant 0 : i32
    return %c0_i32, %c0_i32_0 : i32, i32
  }
  func.func @transform_4(%arg0: i32) -> (i32, i32) {
    %c0_i32 = arith.constant 0 : i32
    %c0_i32_0 = arith.constant 0 : i32
    %c0_i32_1 = arith.constant 0 : i32
    return %c0_i32, %c0_i32_0 : i32, i32
  }
  func.func @transform_5(%arg0: i32) -> (i32, i32) {
    %c0_i32 = arith.constant 0 : i32
    %c0_i32_0 = arith.constant 0 : i32
    %c0_i32_1 = arith.constant 0 : i32
    return %c0_i32, %c0_i32_0 : i32, i32
  }
  func.func @transform_6(%arg0: i32) -> (i32, i32) {
    %c0_i32 = arith.constant 0 : i32
    %c0_i32_0 = arith.constant 0 : i32
    %c0_i32_1 = arith.constant 0 : i32
    return %c0_i32, %c0_i32_0 : i32, i32
  }
  func.func @transform_7(%arg0: i32) -> (i32, i32) {
    %c0_i32 = arith.constant 0 : i32
    %c0_i32_0 = arith.constant 0 : i32
    %c0_i32_1 = arith.constant 0 : i32
    return %c0_i32, %c0_i32_0 : i32, i32
  }
  func.func @transform_8(%arg0: i32) -> (i32, i32) {
    %c0_i32 = arith.constant 0 : i32
    %c0_i32_0 = arith.constant 0 : i32
    %c0_i32_1 = arith.constant 0 : i32
    return %c0_i32, %c0_i32_0 : i32, i32
  }
  func.func @transform_9(%arg0: i32) -> (i32, i32) {
    %c0_i32 = arith.constant 0 : i32
    %c0_i32_0 = arith.constant 0 : i32
    %c0_i32_1 = arith.constant 0 : i32
    return %c0_i32, %c0_i32_0 : i32, i32
  }
  func.func @transform_10(%arg0: i32) -> (i32, i32) {
    %c0_i32 = arith.constant 0 : i32
    %c0_i32_0 = arith.constant 0 : i32
    %c0_i32_1 = arith.constant 0 : i32
    return %c0_i32, %c0_i32_0 : i32, i32
  }
  func.func @transform_11(%arg0: i32) -> (i32, i32) {
    %c0_i32 = arith.constant 0 : i32
    %c0_i32_0 = arith.constant 0 : i32
    %c0_i32_1 = arith.constant 0 : i32
    return %c0_i32, %c0_i32_0 : i32, i32
  }
  func.func @transform_12(%arg0: i32) -> (i32, i32) {
    %c0_i32 = arith.constant 0 : i32
    %c0_i32_0 = arith.constant 0 : i32
    %c0_i32_1 = arith.constant 0 : i32
    return %c0_i32, %c0_i32_0 : i32, i32
  }
  func.func @transform_13(%arg0: i32) -> (i32, i32) {
    %c0_i32 = arith.constant 0 : i32
    %c0_i32_0 = arith.constant 0 : i32
    %c0_i32_1 = arith.constant 0 : i32
    return %c0_i32, %c0_i32_0 : i32, i32
  }
  func.func @transform_14(%arg0: i32) -> (i32, i32) {
    %c0_i32 = arith.constant 0 : i32
    %c0_i32_0 = arith.constant 0 : i32
    %c0_i32_1 = arith.constant 0 : i32
    return %c0_i32, %c0_i32_0 : i32, i32
  }
  func.func @transform_15(%arg0: i32) -> (i32, i32) {
    %c0_i32 = arith.constant 0 : i32
    %c0_i32_0 = arith.constant 0 : i32
    %c0_i32_1 = arith.constant 0 : i32
    return %c0_i32, %c0_i32_0 : i32, i32
  }
  func.func @transform_16(%arg0: i32) -> (i32, i32) {
    %c0_i32 = arith.constant 0 : i32
    %c0_i32_0 = arith.constant 0 : i32
    %c0_i32_1 = arith.constant 0 : i32
    return %c0_i32, %c0_i32_0 : i32, i32
  }
  func.func @transform_17(%arg0: i32) -> (i32, i32, i32) {
    %c0_i32 = arith.constant 0 : i32
    %c0_i32_0 = arith.constant 0 : i32
    %c0_i32_1 = arith.constant 0 : i32
    return %arg0, %c0_i32, %c0_i32_0 : i32, i32, i32
  }
}

module attributes {stable_mosaic.version = 11 : i64} {
  func.func @transformer_block_kernel(%arg0: i32, %arg1: memref<1x16x32xf32, #tpu.memory_space<vmem>>, %arg2: memref<1x32xf32, #tpu.memory_space<vmem>>, %arg3: memref<1x32xf32, #tpu.memory_space<vmem>>, %arg4: memref<32x32xbf16, #tpu.memory_space<vmem>>, %arg5: memref<32x32xbf16, #tpu.memory_space<vmem>>, %arg6: memref<32x32xbf16, #tpu.memory_space<vmem>>, %arg7: memref<1x32xf32, #tpu.memory_space<vmem>>, %arg8: memref<1x32xf32, #tpu.memory_space<vmem>>, %arg9: memref<1x32xf32, #tpu.memory_space<vmem>>, %arg10: memref<32x32xbf16, #tpu.memory_space<vmem>>, %arg11: memref<1x32xf32, #tpu.memory_space<vmem>>, %arg12: memref<1x32xf32, #tpu.memory_space<vmem>>, %arg13: memref<1x32xf32, #tpu.memory_space<vmem>>, %arg14: memref<32x128xbf16, #tpu.memory_space<vmem>>, %arg15: memref<1x128xf32, #tpu.memory_space<vmem>>, %arg16: memref<128x32xbf16, #tpu.memory_space<vmem>>, %arg17: memref<1x32xf32, #tpu.memory_space<vmem>>, %arg18: memref<1x16x32xf32, #tpu.memory_space<vmem>>) attributes {dimension_semantics = [#tpu.dimension_semantics<parallel>], iteration_bounds = array<i64: 2>, scalar_prefetch = 0 : i64, scratch_operands = 0 : i64, tpu.core_type = #tpu.core_type<tc>, window_params = [{transform_indices = @transform_0, window_bounds = array<i64: 1, 16, 32>}, {pipeline_mode = #tpu.pipeline_mode<synchronous>, transform_indices = @transform_1, window_bounds = array<i64: 1, 32>}, {pipeline_mode = #tpu.pipeline_mode<synchronous>, transform_indices = @transform_2, window_bounds = array<i64: 1, 32>}, {pipeline_mode = #tpu.pipeline_mode<synchronous>, transform_indices = @transform_3, window_bounds = array<i64: 32, 32>}, {pipeline_mode = #tpu.pipeline_mode<synchronous>, transform_indices = @transform_4, window_bounds = array<i64: 32, 32>}, {pipeline_mode = #tpu.pipeline_mode<synchronous>, transform_indices = @transform_5, window_bounds = array<i64: 32, 32>}, {pipeline_mode = #tpu.pipeline_mode<synchronous>, transform_indices = @transform_6, window_bounds = array<i64: 1, 32>}, {pipeline_mode = #tpu.pipeline_mode<synchronous>, transform_indices = @transform_7, window_bounds = array<i64: 1, 32>}, {pipeline_mode = #tpu.pipeline_mode<synchronous>, transform_indices = @transform_8, window_bounds = array<i64: 1, 32>}, {pipeline_mode = #tpu.pipeline_mode<synchronous>, transform_indices = @transform_9, window_bounds = array<i64: 32, 32>}, {pipeline_mode = #tpu.pipeline_mode<synchronous>, transform_indices = @transform_10, window_bounds = array<i64: 1, 32>}, {pipeline_mode = #tpu.pipeline_mode<synchronous>, transform_indices = @transform_11, window_bounds = array<i64: 1, 32>}, {pipeline_mode = #tpu.pipeline_mode<synchronous>, transform_indices = @transform_12, window_bounds = array<i64: 1, 32>}, {pipeline_mode = #tpu.pipeline_mode<synchronous>, transform_indices = @transform_13, window_bounds = array<i64: 32, 128>}, {pipeline_mode = #tpu.pipeline_mode<synchronous>, transform_indices = @transform_14, window_bounds = array<i64: 1, 128>}, {pipeline_mode = #tpu.pipeline_mode<synchronous>, transform_indices = @transform_15, window_bounds = array<i64: 128, 32>}, {pipeline_mode = #tpu.pipeline_mode<synchronous>, transform_indices = @transform_16, window_bounds = array<i64: 1, 32>}, {transform_indices = @transform_17, window_bounds = array<i64: 1, 16, 32>}]} {
    %c0 = arith.constant 0 : index
    %c0_0 = arith.constant 0 : index
    %c0_1 = arith.constant 0 : index
    %0 = vector.load %arg1[%c0, %c0_0, %c0_1] : memref<1x16x32xf32, #tpu.memory_space<vmem>>, vector<1x16x32xf32>
    %1 = vector.shape_cast %0 : vector<1x16x32xf32> to vector<16x32xf32>
    %c0_2 = arith.constant 0 : index
    %c0_3 = arith.constant 0 : index
    %2 = vector.load %arg2[%c0_2, %c0_3] : memref<1x32xf32, #tpu.memory_space<vmem>>, vector<1x32xf32>
    %3 = vector.shape_cast %2 : vector<1x32xf32> to vector<32xf32>
    %c0_4 = arith.constant 0 : index
    %c0_5 = arith.constant 0 : index
    %4 = vector.load %arg3[%c0_4, %c0_5] : memref<1x32xf32, #tpu.memory_space<vmem>>, vector<1x32xf32>
    %5 = vector.shape_cast %4 : vector<1x32xf32> to vector<32xf32>
    %cst = arith.constant dense<0.000000e+00> : vector<16xf32>
    %6 = vector.multi_reduction <add>, %1, %cst [1] : vector<16x32xf32> to vector<16xf32>
    %7 = vector.shape_cast %6 : vector<16xf32> to vector<16x1xf32>
    %cst_6 = arith.constant 3.200000e+01 : f32
    %8 = vector.broadcast %cst_6 : f32 to vector<16x1xf32>
    %9 = arith.divf %7, %8 : vector<16x1xf32>
    %10 = vector.broadcast %9 : vector<16x1xf32> to vector<16x32xf32>
    %11 = arith.subf %1, %10 : vector<16x32xf32>
    %12 = arith.mulf %11, %11 : vector<16x32xf32>
    %cst_7 = arith.constant dense<0.000000e+00> : vector<16xf32>
    %13 = vector.multi_reduction <add>, %12, %cst_7 [1] : vector<16x32xf32> to vector<16xf32>
    %14 = vector.shape_cast %13 : vector<16xf32> to vector<16x1xf32>
    %cst_8 = arith.constant 3.200000e+01 : f32
    %15 = vector.broadcast %cst_8 : f32 to vector<16x1xf32>
    %16 = arith.divf %14, %15 : vector<16x1xf32>
    %17 = vector.broadcast %9 : vector<16x1xf32> to vector<16x32xf32>
    %18 = arith.subf %1, %17 : vector<16x32xf32>
    %cst_9 = arith.constant 9.99999974E-6 : f32
    %19 = vector.broadcast %cst_9 : f32 to vector<16x1xf32>
    %20 = arith.addf %16, %19 : vector<16x1xf32>
    %21 = math.rsqrt %20 : vector<16x1xf32>
    %22 = vector.broadcast %21 : vector<16x1xf32> to vector<16x32xf32>
    %23 = arith.mulf %18, %22 : vector<16x32xf32>
    %24 = vector.shape_cast %3 : vector<32xf32> to vector<1x32xf32>
    %25 = vector.broadcast %24 : vector<1x32xf32> to vector<16x32xf32>
    %26 = arith.mulf %23, %25 : vector<16x32xf32>
    %27 = vector.shape_cast %5 : vector<32xf32> to vector<1x32xf32>
    %28 = vector.broadcast %27 : vector<1x32xf32> to vector<16x32xf32>
    %29 = arith.addf %26, %28 : vector<16x32xf32>
    %30 = arith.truncf %29 : vector<16x32xf32> to vector<16x32xbf16>
    %c0_10 = arith.constant 0 : index
    %c0_11 = arith.constant 0 : index
    %31 = vector.load %arg4[%c0_10, %c0_11] : memref<32x32xbf16, #tpu.memory_space<vmem>>, vector<32x32xbf16>
    %cst_12 = arith.constant dense<0.000000e+00> : vector<16x32xf32>
    %32 = tpu.matmul %30, %31, %cst_12 {dimension_numbers = #tpu.dot_dimension_numbers<[1], [0], [0], [1], [0, 0, 1, 1], [], []>} : vector<16x32xbf16>, vector<32x32xbf16>, vector<16x32xf32> -> vector<16x32xf32>
    %c0_13 = arith.constant 0 : index
    %c0_14 = arith.constant 0 : index
    %33 = vector.load %arg7[%c0_13, %c0_14] : memref<1x32xf32, #tpu.memory_space<vmem>>, vector<1x32xf32>
    %34 = vector.shape_cast %33 : vector<1x32xf32> to vector<32xf32>
    %35 = vector.shape_cast %34 : vector<32xf32> to vector<1x32xf32>
    %36 = vector.broadcast %35 : vector<1x32xf32> to vector<16x32xf32>
    %37 = arith.addf %32, %36 : vector<16x32xf32>
    %c0_15 = arith.constant 0 : index
    %c0_16 = arith.constant 0 : index
    %38 = vector.load %arg5[%c0_15, %c0_16] : memref<32x32xbf16, #tpu.memory_space<vmem>>, vector<32x32xbf16>
    %cst_17 = arith.constant dense<0.000000e+00> : vector<16x32xf32>
    %39 = tpu.matmul %30, %38, %cst_17 {dimension_numbers = #tpu.dot_dimension_numbers<[1], [0], [0], [1], [0, 0, 1, 1], [], []>} : vector<16x32xbf16>, vector<32x32xbf16>, vector<16x32xf32> -> vector<16x32xf32>
    %c0_18 = arith.constant 0 : index
    %c0_19 = arith.constant 0 : index
    %40 = vector.load %arg8[%c0_18, %c0_19] : memref<1x32xf32, #tpu.memory_space<vmem>>, vector<1x32xf32>
    %41 = vector.shape_cast %40 : vector<1x32xf32> to vector<32xf32>
    %42 = vector.shape_cast %41 : vector<32xf32> to vector<1x32xf32>
    %43 = vector.broadcast %42 : vector<1x32xf32> to vector<16x32xf32>
    %44 = arith.addf %39, %43 : vector<16x32xf32>
    %c0_20 = arith.constant 0 : index
    %c0_21 = arith.constant 0 : index
    %45 = vector.load %arg6[%c0_20, %c0_21] : memref<32x32xbf16, #tpu.memory_space<vmem>>, vector<32x32xbf16>
    %cst_22 = arith.constant dense<0.000000e+00> : vector<16x32xf32>
    %46 = tpu.matmul %30, %45, %cst_22 {dimension_numbers = #tpu.dot_dimension_numbers<[1], [0], [0], [1], [0, 0, 1, 1], [], []>} : vector<16x32xbf16>, vector<32x32xbf16>, vector<16x32xf32> -> vector<16x32xf32>
    %c0_23 = arith.constant 0 : index
    %c0_24 = arith.constant 0 : index
    %47 = vector.load %arg9[%c0_23, %c0_24] : memref<1x32xf32, #tpu.memory_space<vmem>>, vector<1x32xf32>
    %48 = vector.shape_cast %47 : vector<1x32xf32> to vector<32xf32>
    %49 = vector.shape_cast %48 : vector<32xf32> to vector<1x32xf32>
    %50 = vector.broadcast %49 : vector<1x32xf32> to vector<16x32xf32>
    %51 = arith.addf %46, %50 : vector<16x32xf32>
    %cst_25 = arith.constant 0.353553385 : f32
    %52 = vector.broadcast %cst_25 : f32 to vector<16x32xf32>
    %53 = arith.mulf %37, %52 : vector<16x32xf32>
    %54 = vector.extract_strided_slice %53 {offsets = [0, 0], sizes = [16, 8], strides = [1, 1]} : vector<16x32xf32> to vector<16x8xf32>
    %55 = vector.extract_strided_slice %44 {offsets = [0, 0], sizes = [16, 8], strides = [1, 1]} : vector<16x32xf32> to vector<16x8xf32>
    %56 = vector.extract_strided_slice %51 {offsets = [0, 0], sizes = [16, 8], strides = [1, 1]} : vector<16x32xf32> to vector<16x8xf32>
    %57 = tpu.transpose %55, [1, 0] : vector<16x8xf32> -> vector<8x16xf32>
    %cst_26 = arith.constant dense<0.000000e+00> : vector<16x16xf32>
    %58 = tpu.matmul %54, %57, %cst_26 {dimension_numbers = #tpu.dot_dimension_numbers<[1], [0], [0], [1], [0, 0, 1, 1], [], []>} : vector<16x8xf32>, vector<8x16xf32>, vector<16x16xf32> -> vector<16x16xf32>
    %cst_27 = arith.constant dense<0xFF800000> : vector<16xf32>
    %59 = vector.multi_reduction <maximumf>, %58, %cst_27 [1] : vector<16x16xf32> to vector<16xf32>
    %60 = vector.shape_cast %59 : vector<16xf32> to vector<16x1xf32>
    %61 = vector.broadcast %60 : vector<16x1xf32> to vector<16x16xf32>
    %62 = arith.subf %58, %61 : vector<16x16xf32>
    %63 = math.exp %62 : vector<16x16xf32>
    %cst_28 = arith.constant dense<0.000000e+00> : vector<16xf32>
    %64 = vector.multi_reduction <add>, %63, %cst_28 [1] : vector<16x16xf32> to vector<16xf32>
    %65 = vector.shape_cast %64 : vector<16xf32> to vector<16x1xf32>
    %66 = tpu.reciprocal %65 {approx = true} : vector<16x1xf32> -> vector<16x1xf32>
    %67 = vector.broadcast %66 : vector<16x1xf32> to vector<16x16xf32>
    %68 = arith.mulf %63, %67 : vector<16x16xf32>
    %cst_29 = arith.constant dense<0.000000e+00> : vector<16x8xf32>
    %69 = tpu.matmul %68, %56, %cst_29 {dimension_numbers = #tpu.dot_dimension_numbers<[1], [0], [0], [1], [0, 0, 1, 1], [], []>} : vector<16x16xf32>, vector<16x8xf32>, vector<16x8xf32> -> vector<16x8xf32>
    %70 = vector.extract_strided_slice %53 {offsets = [0, 8], sizes = [16, 8], strides = [1, 1]} : vector<16x32xf32> to vector<16x8xf32>
    %71 = vector.extract_strided_slice %44 {offsets = [0, 8], sizes = [16, 8], strides = [1, 1]} : vector<16x32xf32> to vector<16x8xf32>
    %72 = vector.extract_strided_slice %51 {offsets = [0, 8], sizes = [16, 8], strides = [1, 1]} : vector<16x32xf32> to vector<16x8xf32>
    %73 = tpu.transpose %71, [1, 0] : vector<16x8xf32> -> vector<8x16xf32>
    %cst_30 = arith.constant dense<0.000000e+00> : vector<16x16xf32>
    %74 = tpu.matmul %70, %73, %cst_30 {dimension_numbers = #tpu.dot_dimension_numbers<[1], [0], [0], [1], [0, 0, 1, 1], [], []>} : vector<16x8xf32>, vector<8x16xf32>, vector<16x16xf32> -> vector<16x16xf32>
    %cst_31 = arith.constant dense<0xFF800000> : vector<16xf32>
    %75 = vector.multi_reduction <maximumf>, %74, %cst_31 [1] : vector<16x16xf32> to vector<16xf32>
    %76 = vector.shape_cast %75 : vector<16xf32> to vector<16x1xf32>
    %77 = vector.broadcast %76 : vector<16x1xf32> to vector<16x16xf32>
    %78 = arith.subf %74, %77 : vector<16x16xf32>
    %79 = math.exp %78 : vector<16x16xf32>
    %cst_32 = arith.constant dense<0.000000e+00> : vector<16xf32>
    %80 = vector.multi_reduction <add>, %79, %cst_32 [1] : vector<16x16xf32> to vector<16xf32>
    %81 = vector.shape_cast %80 : vector<16xf32> to vector<16x1xf32>
    %82 = tpu.reciprocal %81 {approx = true} : vector<16x1xf32> -> vector<16x1xf32>
    %83 = vector.broadcast %82 : vector<16x1xf32> to vector<16x16xf32>
    %84 = arith.mulf %79, %83 : vector<16x16xf32>
    %cst_33 = arith.constant dense<0.000000e+00> : vector<16x8xf32>
    %85 = tpu.matmul %84, %72, %cst_33 {dimension_numbers = #tpu.dot_dimension_numbers<[1], [0], [0], [1], [0, 0, 1, 1], [], []>} : vector<16x16xf32>, vector<16x8xf32>, vector<16x8xf32> -> vector<16x8xf32>
    %86 = vector.extract_strided_slice %53 {offsets = [0, 16], sizes = [16, 8], strides = [1, 1]} : vector<16x32xf32> to vector<16x8xf32>
    %87 = vector.extract_strided_slice %44 {offsets = [0, 16], sizes = [16, 8], strides = [1, 1]} : vector<16x32xf32> to vector<16x8xf32>
    %88 = vector.extract_strided_slice %51 {offsets = [0, 16], sizes = [16, 8], strides = [1, 1]} : vector<16x32xf32> to vector<16x8xf32>
    %89 = tpu.transpose %87, [1, 0] : vector<16x8xf32> -> vector<8x16xf32>
    %cst_34 = arith.constant dense<0.000000e+00> : vector<16x16xf32>
    %90 = tpu.matmul %86, %89, %cst_34 {dimension_numbers = #tpu.dot_dimension_numbers<[1], [0], [0], [1], [0, 0, 1, 1], [], []>} : vector<16x8xf32>, vector<8x16xf32>, vector<16x16xf32> -> vector<16x16xf32>
    %cst_35 = arith.constant dense<0xFF800000> : vector<16xf32>
    %91 = vector.multi_reduction <maximumf>, %90, %cst_35 [1] : vector<16x16xf32> to vector<16xf32>
    %92 = vector.shape_cast %91 : vector<16xf32> to vector<16x1xf32>
    %93 = vector.broadcast %92 : vector<16x1xf32> to vector<16x16xf32>
    %94 = arith.subf %90, %93 : vector<16x16xf32>
    %95 = math.exp %94 : vector<16x16xf32>
    %cst_36 = arith.constant dense<0.000000e+00> : vector<16xf32>
    %96 = vector.multi_reduction <add>, %95, %cst_36 [1] : vector<16x16xf32> to vector<16xf32>
    %97 = vector.shape_cast %96 : vector<16xf32> to vector<16x1xf32>
    %98 = tpu.reciprocal %97 {approx = true} : vector<16x1xf32> -> vector<16x1xf32>
    %99 = vector.broadcast %98 : vector<16x1xf32> to vector<16x16xf32>
    %100 = arith.mulf %95, %99 : vector<16x16xf32>
    %cst_37 = arith.constant dense<0.000000e+00> : vector<16x8xf32>
    %101 = tpu.matmul %100, %88, %cst_37 {dimension_numbers = #tpu.dot_dimension_numbers<[1], [0], [0], [1], [0, 0, 1, 1], [], []>} : vector<16x16xf32>, vector<16x8xf32>, vector<16x8xf32> -> vector<16x8xf32>
    %102 = vector.extract_strided_slice %53 {offsets = [0, 24], sizes = [16, 8], strides = [1, 1]} : vector<16x32xf32> to vector<16x8xf32>
    %103 = vector.extract_strided_slice %44 {offsets = [0, 24], sizes = [16, 8], strides = [1, 1]} : vector<16x32xf32> to vector<16x8xf32>
    %104 = vector.extract_strided_slice %51 {offsets = [0, 24], sizes = [16, 8], strides = [1, 1]} : vector<16x32xf32> to vector<16x8xf32>
    %105 = tpu.transpose %103, [1, 0] : vector<16x8xf32> -> vector<8x16xf32>
    %cst_38 = arith.constant dense<0.000000e+00> : vector<16x16xf32>
    %106 = tpu.matmul %102, %105, %cst_38 {dimension_numbers = #tpu.dot_dimension_numbers<[1], [0], [0], [1], [0, 0, 1, 1], [], []>} : vector<16x8xf32>, vector<8x16xf32>, vector<16x16xf32> -> vector<16x16xf32>
    %cst_39 = arith.constant dense<0xFF800000> : vector<16xf32>
    %107 = vector.multi_reduction <maximumf>, %106, %cst_39 [1] : vector<16x16xf32> to vector<16xf32>
    %108 = vector.shape_cast %107 : vector<16xf32> to vector<16x1xf32>
    %109 = vector.broadcast %108 : vector<16x1xf32> to vector<16x16xf32>
    %110 = arith.subf %106, %109 : vector<16x16xf32>
    %111 = math.exp %110 : vector<16x16xf32>
    %cst_40 = arith.constant dense<0.000000e+00> : vector<16xf32>
    %112 = vector.multi_reduction <add>, %111, %cst_40 [1] : vector<16x16xf32> to vector<16xf32>
    %113 = vector.shape_cast %112 : vector<16xf32> to vector<16x1xf32>
    %114 = tpu.reciprocal %113 {approx = true} : vector<16x1xf32> -> vector<16x1xf32>
    %115 = vector.broadcast %114 : vector<16x1xf32> to vector<16x16xf32>
    %116 = arith.mulf %111, %115 : vector<16x16xf32>
    %cst_41 = arith.constant dense<0.000000e+00> : vector<16x8xf32>
    %117 = tpu.matmul %116, %104, %cst_41 {dimension_numbers = #tpu.dot_dimension_numbers<[1], [0], [0], [1], [0, 0, 1, 1], [], []>} : vector<16x16xf32>, vector<16x8xf32>, vector<16x8xf32> -> vector<16x8xf32>
    %118 = tpu.concatenate %69, %85, %101, %117 in 1 : vector<16x8xf32>, vector<16x8xf32>, vector<16x8xf32>, vector<16x8xf32> -> vector<16x32xf32>
    %119 = arith.truncf %118 : vector<16x32xf32> to vector<16x32xbf16>
    %c0_42 = arith.constant 0 : index
    %c0_43 = arith.constant 0 : index
    %120 = vector.load %arg10[%c0_42, %c0_43] : memref<32x32xbf16, #tpu.memory_space<vmem>>, vector<32x32xbf16>
    %cst_44 = arith.constant dense<0.000000e+00> : vector<16x32xf32>
    %121 = tpu.matmul %119, %120, %cst_44 {dimension_numbers = #tpu.dot_dimension_numbers<[1], [0], [0], [1], [0, 0, 1, 1], [], []>} : vector<16x32xbf16>, vector<32x32xbf16>, vector<16x32xf32> -> vector<16x32xf32>
    %c0_45 = arith.constant 0 : index
    %c0_46 = arith.constant 0 : index
    %122 = vector.load %arg11[%c0_45, %c0_46] : memref<1x32xf32, #tpu.memory_space<vmem>>, vector<1x32xf32>
    %123 = vector.shape_cast %122 : vector<1x32xf32> to vector<32xf32>
    %124 = vector.shape_cast %123 : vector<32xf32> to vector<1x32xf32>
    %125 = vector.broadcast %124 : vector<1x32xf32> to vector<16x32xf32>
    %126 = arith.addf %121, %125 : vector<16x32xf32>
    %127 = arith.addf %1, %126 : vector<16x32xf32>
    %c0_47 = arith.constant 0 : index
    %c0_48 = arith.constant 0 : index
    %128 = vector.load %arg12[%c0_47, %c0_48] : memref<1x32xf32, #tpu.memory_space<vmem>>, vector<1x32xf32>
    %129 = vector.shape_cast %128 : vector<1x32xf32> to vector<32xf32>
    %c0_49 = arith.constant 0 : index
    %c0_50 = arith.constant 0 : index
    %130 = vector.load %arg13[%c0_49, %c0_50] : memref<1x32xf32, #tpu.memory_space<vmem>>, vector<1x32xf32>
    %131 = vector.shape_cast %130 : vector<1x32xf32> to vector<32xf32>
    %cst_51 = arith.constant dense<0.000000e+00> : vector<16xf32>
    %132 = vector.multi_reduction <add>, %127, %cst_51 [1] : vector<16x32xf32> to vector<16xf32>
    %133 = vector.shape_cast %132 : vector<16xf32> to vector<16x1xf32>
    %cst_52 = arith.constant 3.200000e+01 : f32
    %134 = vector.broadcast %cst_52 : f32 to vector<16x1xf32>
    %135 = arith.divf %133, %134 : vector<16x1xf32>
    %136 = vector.broadcast %135 : vector<16x1xf32> to vector<16x32xf32>
    %137 = arith.subf %127, %136 : vector<16x32xf32>
    %138 = arith.mulf %137, %137 : vector<16x32xf32>
    %cst_53 = arith.constant dense<0.000000e+00> : vector<16xf32>
    %139 = vector.multi_reduction <add>, %138, %cst_53 [1] : vector<16x32xf32> to vector<16xf32>
    %140 = vector.shape_cast %139 : vector<16xf32> to vector<16x1xf32>
    %cst_54 = arith.constant 3.200000e+01 : f32
    %141 = vector.broadcast %cst_54 : f32 to vector<16x1xf32>
    %142 = arith.divf %140, %141 : vector<16x1xf32>
    %143 = vector.broadcast %135 : vector<16x1xf32> to vector<16x32xf32>
    %144 = arith.subf %127, %143 : vector<16x32xf32>
    %cst_55 = arith.constant 9.99999974E-6 : f32
    %145 = vector.broadcast %cst_55 : f32 to vector<16x1xf32>
    %146 = arith.addf %142, %145 : vector<16x1xf32>
    %147 = math.rsqrt %146 : vector<16x1xf32>
    %148 = vector.broadcast %147 : vector<16x1xf32> to vector<16x32xf32>
    %149 = arith.mulf %144, %148 : vector<16x32xf32>
    %150 = vector.shape_cast %129 : vector<32xf32> to vector<1x32xf32>
    %151 = vector.broadcast %150 : vector<1x32xf32> to vector<16x32xf32>
    %152 = arith.mulf %149, %151 : vector<16x32xf32>
    %153 = vector.shape_cast %131 : vector<32xf32> to vector<1x32xf32>
    %154 = vector.broadcast %153 : vector<1x32xf32> to vector<16x32xf32>
    %155 = arith.addf %152, %154 : vector<16x32xf32>
    %156 = arith.truncf %155 : vector<16x32xf32> to vector<16x32xbf16>
    %cst_56 = arith.constant 0.000000e+00 : f32
    %157 = vector.broadcast %cst_56 : f32 to vector<16x32xf32>
    %c0_57 = arith.constant 0 : index
    %c0_58 = arith.constant 0 : index
    %158 = vector.load %arg14[%c0_57, %c0_58] : memref<32x128xbf16, #tpu.memory_space<vmem>>, vector<32x128xbf16>
    %cst_59 = arith.constant dense<0.000000e+00> : vector<16x128xf32>
    %159 = tpu.matmul %156, %158, %cst_59 {dimension_numbers = #tpu.dot_dimension_numbers<[1], [0], [0], [1], [0, 0, 1, 1], [], []>} : vector<16x32xbf16>, vector<32x128xbf16>, vector<16x128xf32> -> vector<16x128xf32>
    %c0_60 = arith.constant 0 : index
    %c0_61 = arith.constant 0 : index
    %160 = vector.load %arg15[%c0_60, %c0_61] : memref<1x128xf32, #tpu.memory_space<vmem>>, vector<1x128xf32>
    %161 = vector.shape_cast %160 : vector<1x128xf32> to vector<128xf32>
    %162 = vector.shape_cast %161 : vector<128xf32> to vector<1x128xf32>
    %163 = vector.broadcast %162 : vector<1x128xf32> to vector<16x128xf32>
    %164 = arith.addf %159, %163 : vector<16x128xf32>
    %cst_62 = arith.constant 0.000000e+00 : f32
    %165 = vector.broadcast %cst_62 : f32 to vector<16x128xf32>
    %166 = arith.maximumf %164, %165 : vector<16x128xf32>
    %167 = arith.truncf %166 : vector<16x128xf32> to vector<16x128xbf16>
    %c0_63 = arith.constant 0 : index
    %c0_64 = arith.constant 0 : index
    %168 = vector.load %arg16[%c0_63, %c0_64] : memref<128x32xbf16, #tpu.memory_space<vmem>>, vector<128x32xbf16>
    %cst_65 = arith.constant dense<0.000000e+00> : vector<16x32xf32>
    %169 = tpu.matmul %167, %168, %cst_65 {dimension_numbers = #tpu.dot_dimension_numbers<[1], [0], [0], [1], [0, 0, 1, 1], [], []>} : vector<16x128xbf16>, vector<128x32xbf16>, vector<16x32xf32> -> vector<16x32xf32>
    %170 = arith.addf %157, %169 : vector<16x32xf32>
    %c0_66 = arith.constant 0 : index
    %c0_67 = arith.constant 0 : index
    %171 = vector.load %arg17[%c0_66, %c0_67] : memref<1x32xf32, #tpu.memory_space<vmem>>, vector<1x32xf32>
    %172 = vector.shape_cast %171 : vector<1x32xf32> to vector<32xf32>
    %173 = vector.shape_cast %172 : vector<32xf32> to vector<1x32xf32>
    %174 = vector.broadcast %173 : vector<1x32xf32> to vector<16x32xf32>
    %175 = arith.addf %170, %174 : vector<16x32xf32>
    %176 = arith.addf %127, %175 : vector<16x32xf32>
    %177 = vector.shape_cast %176 : vector<16x32xf32> to vector<1x16x32xf32>
    %c0_68 = arith.constant 0 : index
    %c0_69 = arith.constant 0 : index
    %c0_70 = arith.constant 0 : index
    %178 = vector.load %arg18[%c0_68, %c0_69, %c0_70] : memref<1x16x32xf32, #tpu.memory_space<vmem>>, vector<1x16x32xf32>
    tpu.vector_store %arg18[%c0_68, %c0_69, %c0_70], %177 {strides = array<i32>} : memref<1x16x32xf32, #tpu.memory_space<vmem>>, vector<1x16x32xf32>,
    return
  }
  func.func @transform_0(%arg0: i32) -> (i32, i32, i32) {
    %c0_i32 = arith.constant 0 : i32
    %c0_i32_0 = arith.constant 0 : i32
    %c0_i32_1 = arith.constant 0 : i32
    return %arg0, %c0_i32, %c0_i32_0 : i32, i32, i32
  }
  func.func @transform_1(%arg0: i32) -> (i32, i32) {
    %c0_i32 = arith.constant 0 : i32
    %c0_i32_0 = arith.constant 0 : i32
    %c0_i32_1 = arith.constant 0 : i32
    return %c0_i32, %c0_i32_0 : i32, i32
  }
  func.func @transform_2(%arg0: i32) -> (i32, i32) {
    %c0_i32 = arith.constant 0 : i32
    %c0_i32_0 = arith.constant 0 : i32
    %c0_i32_1 = arith.constant 0 : i32
    return %c0_i32, %c0_i32_0 : i32, i32
  }
  func.func @transform_3(%arg0: i32) -> (i32, i32) {
    %c0_i32 = arith.constant 0 : i32
    %c0_i32_0 = arith.constant 0 : i32
    %c0_i32_1 = arith.constant 0 : i32
    return %c0_i32, %c0_i32_0 : i32, i32
  }
  func.func @transform_4(%arg0: i32) -> (i32, i32) {
    %c0_i32 = arith.constant 0 : i32
    %c0_i32_0 = arith.constant 0 : i32
    %c0_i32_1 = arith.constant 0 : i32
    return %c0_i32, %c0_i32_0 : i32, i32
  }
  func.func @transform_5(%arg0: i32) -> (i32, i32) {
    %c0_i32 = arith.constant 0 : i32
    %c0_i32_0 = arith.constant 0 : i32
    %c0_i32_1 = arith.constant 0 : i32
    return %c0_i32, %c0_i32_0 : i32, i32
  }
  func.func @transform_6(%arg0: i32) -> (i32, i32) {
    %c0_i32 = arith.constant 0 : i32
    %c0_i32_0 = arith.constant 0 : i32
    %c0_i32_1 = arith.constant 0 : i32
    return %c0_i32, %c0_i32_0 : i32, i32
  }
  func.func @transform_7(%arg0: i32) -> (i32, i32) {
    %c0_i32 = arith.constant 0 : i32
    %c0_i32_0 = arith.constant 0 : i32
    %c0_i32_1 = arith.constant 0 : i32
    return %c0_i32, %c0_i32_0 : i32, i32
  }
  func.func @transform_8(%arg0: i32) -> (i32, i32) {
    %c0_i32 = arith.constant 0 : i32
    %c0_i32_0 = arith.constant 0 : i32
    %c0_i32_1 = arith.constant 0 : i32
    return %c0_i32, %c0_i32_0 : i32, i32
  }
  func.func @transform_9(%arg0: i32) -> (i32, i32) {
    %c0_i32 = arith.constant 0 : i32
    %c0_i32_0 = arith.constant 0 : i32
    %c0_i32_1 = arith.constant 0 : i32
    return %c0_i32, %c0_i32_0 : i32, i32
  }
  func.func @transform_10(%arg0: i32) -> (i32, i32) {
    %c0_i32 = arith.constant 0 : i32
    %c0_i32_0 = arith.constant 0 : i32
    %c0_i32_1 = arith.constant 0 : i32
    return %c0_i32, %c0_i32_0 : i32, i32
  }
  func.func @transform_11(%arg0: i32) -> (i32, i32) {
    %c0_i32 = arith.constant 0 : i32
    %c0_i32_0 = arith.constant 0 : i32
    %c0_i32_1 = arith.constant 0 : i32
    return %c0_i32, %c0_i32_0 : i32, i32
  }
  func.func @transform_12(%arg0: i32) -> (i32, i32) {
    %c0_i32 = arith.constant 0 : i32
    %c0_i32_0 = arith.constant 0 : i32
    %c0_i32_1 = arith.constant 0 : i32
    return %c0_i32, %c0_i32_0 : i32, i32
  }
  func.func @transform_13(%arg0: i32) -> (i32, i32) {
    %c0_i32 = arith.constant 0 : i32
    %c0_i32_0 = arith.constant 0 : i32
    %c0_i32_1 = arith.constant 0 : i32
    return %c0_i32, %c0_i32_0 : i32, i32
  }
  func.func @transform_14(%arg0: i32) -> (i32, i32) {
    %c0_i32 = arith.constant 0 : i32
    %c0_i32_0 = arith.constant 0 : i32
    %c0_i32_1 = arith.constant 0 : i32
    return %c0_i32, %c0_i32_0 : i32, i32
  }
  func.func @transform_15(%arg0: i32) -> (i32, i32) {
    %c0_i32 = arith.constant 0 : i32
    %c0_i32_0 = arith.constant 0 : i32
    %c0_i32_1 = arith.constant 0 : i32
    return %c0_i32, %c0_i32_0 : i32, i32
  }
  func.func @transform_16(%arg0: i32) -> (i32, i32) {
    %c0_i32 = arith.constant 0 : i32
    %c0_i32_0 = arith.constant 0 : i32
    %c0_i32_1 = arith.constant 0 : i32
    return %c0_i32, %c0_i32_0 : i32, i32
  }
  func.func @transform_17(%arg0: i32) -> (i32, i32, i32) {
    %c0_i32 = arith.constant 0 : i32
    %c0_i32_0 = arith.constant 0 : i32
    %c0_i32_1 = arith.constant 0 : i32
    return %arg0, %c0_i32, %c0_i32_0 : i32, i32, i32
  }
}

</mosaic_0001>

<llo_original>
// kernel: tpu_custom_call.1
$region0: #{tpu_custom_call.1}
  #allocation0 [shape = 'u32[]', space=smem, size = 0x4, offset = 0x4, fixed_abs, tag = 'smem constant byte address 0x4 - core index']
  #allocation1 [shape = 'u32[144,128]{1,0:T(1,128)}', space=vmem, size = 0x12000, scoped, tag = 'internal scratch']
  %s0 = inlined_call_operand.vmem [shape: f32[2,16,32], index: 0, kind: input, shape index: {}]
  %s1 = inlined_call_operand.hbm [shape: f32[1,32], index: 1, kind: input, shape index: {}]
  %s2 = inlined_call_operand.hbm [shape: f32[1,32], index: 2, kind: input, shape index: {}]
  %s3 = inlined_call_operand.vmem [shape: bf16[32,32], index: 3, kind: input, shape index: {}]
  %s4 = inlined_call_operand.vmem [shape: bf16[32,32], index: 4, kind: input, shape index: {}]
  %s5 = inlined_call_operand.vmem [shape: bf16[32,32], index: 5, kind: input, shape index: {}]
  %s6 = inlined_call_operand.hbm [shape: f32[1,32], index: 6, kind: input, shape index: {}]
  %s7 = inlined_call_operand.hbm [shape: f32[1,32], index: 7, kind: input, shape index: {}]
  %s8 = inlined_call_operand.hbm [shape: f32[1,32], index: 8, kind: input, shape index: {}]
  %s9 = inlined_call_operand.vmem [shape: bf16[32,32], index: 9, kind: input, shape index: {}]
  %s10 = inlined_call_operand.vmem [shape: f32[1,32], index: 10, kind: input, shape index: {}]
  %s11 = inlined_call_operand.vmem [shape: f32[1,32], index: 11, kind: input, shape index: {}]
  %s12 = inlined_call_operand.vmem [shape: f32[1,32], index: 12, kind: input, shape index: {}]
  %s13 = inlined_call_operand.hbm [shape: bf16[32,128], index: 13, kind: input, shape index: {}]
  %s14 = inlined_call_operand.vmem [shape: f32[1,128], index: 14, kind: input, shape index: {}]
  %s15 = inlined_call_operand.vmem [shape: bf16[128,32], index: 15, kind: input, shape index: {}]
  %s16 = inlined_call_operand.vmem [shape: f32[1,32], index: 16, kind: input, shape index: {}]
  %s17 = inlined_call_operand.hbm [shape: f32[2,16,32], index: 17, kind: output, shape index: {}]
  %s18 = sld [smem:[#allocation0]]
  $region125: #{tpu_custom_call.1} parent=0
    _
  %s20 = ssub.s32 1, %s18
  %s21 = scalar_select 0, %s20, %s18
  $region1: #{tpu_custom_call.1} parent=0
    #allocation2 [shape = 'u8[512]{0}', space=vmem, size = 0x400, scoped, tag = 'input window, operand 1, single buffered']
    #allocation3 [shape = 's32[2]{0}', space=sflag, size = 0x8, scoped, tag = 'scoped memory for tpu_custom_call.1']
    #allocation4 [shape = 's32[2]{0}', space=sflag, size = 0x8, scoped, tag = 'scoped memory for tpu_custom_call.1']
    #allocation5 [shape = 'u8[512]{0}', space=vmem, size = 0x400, scoped, tag = 'input window, operand 2, single buffered']
    #allocation6 [shape = 's32[1]{0}', space=sflag, size = 0x4, scoped, tag = 'scoped memory for tpu_custom_call.1']
    #allocation7 [shape = 'u8[512]{0}', space=vmem, size = 0x400, scoped, tag = 'input window, operand 6, single buffered']
    #allocation8 [shape = 'u8[512]{0}', space=vmem, size = 0x400, scoped, tag = 'input window, operand 7, single buffered']
    #allocation9 [shape = 's32[1]{0}', space=sflag, size = 0x4, scoped, tag = 'scoped memory for tpu_custom_call.1']
    #allocation10 [shape = 'u8[512]{0}', space=vmem, size = 0x400, scoped, tag = 'input window, operand 8, single buffered']
    #allocation11 [shape = 'u8[8192]{0}', space=vmem, size = 0x2000, scoped, tag = 'input window, operand 13, single buffered']
    #allocation12 [shape = 's32[1]{0}', space=sflag, size = 0x4, scoped, tag = 'scoped memory for tpu_custom_call.1']
    #allocation13 [shape = 'u8[16384]{0}', space=vmem, size = 0x4000, scoped, tag = 'output window, operand 0']
    %22 = vsyncpa [#allocation3], 0
    %23 = vsyncpa [#allocation6], 0
    %24 = vsyncpa [#allocation9], 0
    %25 = vsyncpa [#allocation12], 0
    %26 = vsyncpa [#allocation4], 0
    %s27 = scalar_lea.sflag [#allocation4], 1
    %28 = vsyncpa %s27, 0
    loop: start=0, step=1, limit=4
    $region2: #{tpu_custom_call.1} parent=1 // loop_pre_header
      _
    $region3: #{tpu_custom_call.1} parent=1 // loop_header
      %s30 = sphi 0, %s34
      %p31 = scmp.ge.s32.totalorder %s30, 4
      %s40 = sphi 0, %s42
      %s43 = sphi 0, %s40
      %s44 = sphi 0, %s43
      %s60 = sphi 0, %s44
      %s64 = sphi 0, %s64
      %s66 = sphi 0, %s64
      %s67 = sphi 0, %s66
      %s81 = sphi 0, %s67
      %s85 = sphi 0, %s85
      %s87 = sphi 0, %s85
      %s88 = sphi 0, %s87
      %s102 = sphi 0, %s88
      %s106 = sphi 0, %s106
      %s108 = sphi 0, %s106
      %s109 = sphi 0, %s108
      %s123 = sphi 0, %s109
      %s127 = sphi 0, %s127
      %s129 = sphi 0, %s127
      %s130 = sphi 0, %s129
      %s144 = sphi 0, %s130
      %s148 = sphi 0, %s148
      %s150 = sphi 0, %s148
      %s151 = sphi 0, %s150
      %s165 = sphi 0, %s151
      %s169 = sphi 0, %s169
      %s171 = sphi 0, %s169
      %s172 = sphi 0, %s171
      %s186 = sphi 0, %s172
      %s190 = sphi 0, %s190
      %s192 = sphi 0, %s190
      %s193 = sphi 0, %s192
      %s207 = sphi 0, %s193
      %s211 = sphi 0, %s211
      %s213 = sphi 0, %s211
      %s214 = sphi 0, %s213
      %s228 = sphi 0, %s214
      %s232 = sphi 0, %s232
      %s234 = sphi 0, %s232
      %s235 = sphi 0, %s234
      %s249 = sphi 0, %s235
      %s253 = sphi 0, %s253
      %s255 = sphi 0, %s253
      %s256 = sphi 0, %s255
      %s270 = sphi 0, %s256
      %s274 = sphi 0, %s274
      %s276 = sphi 0, %s274
      %s277 = sphi 0, %s276
      %s291 = sphi 0, %s277
      %s295 = sphi 0, %s295
      %s297 = sphi 0, %s295
      %s298 = sphi 0, %s297
      %s312 = sphi 0, %s298
      %s316 = sphi 0, %s316
      %s318 = sphi 0, %s316
      %s319 = sphi 0, %s318
      %s333 = sphi 0, %s319
      %s337 = sphi 0, %s337
      %s339 = sphi 0, %s337
      %s340 = sphi 0, %s339
      %s354 = sphi 0, %s340
      %s358 = sphi 0, %s358
      %s360 = sphi 0, %s358
      %s361 = sphi 0, %s360
      %s375 = sphi 0, %s361
      %s379 = sphi 0, %s379
      %s381 = sphi 0, %s379
      %s382 = sphi 0, %s381
      %s396 = sphi 0, %s382
      %s402 = sphi 0, %s404
      %s405 = sphi 0, %s402
      %s406 = sphi 0, %s405
      %s422 = sphi 0, %s406
    $region4: #{tpu_custom_call.1} parent=1 // loop_header_branch
      %33 = sbr.rel (%p31) target = $region8
    $region5: #{tpu_custom_call.1} parent=1 // loop_body
      %s35 = ssub.s32 %s30, 1
      %s36 = ssub.s32 %s30, 2
      %s37 = sadd.s32 %s30, 1
      %s38 = ssub.s32 %s30, %s37
      %p39 = scmp.eq.s32.totalorder %s38, 0
      %s41 = sadd.s32 %s40, 1
      %s42 = scalar_select %p39, %s40, %s41
      %p45 = pneg %p39
      %p46 = scmp.eq.s32.totalorder %s30, 1
      %p47 = por %p45, %p46
      %p48 = scmp.ne.s32.totalorder %s40, %s43
      %p49 = scmp.eq.s32.totalorder %s30, 0
      %p50 = por %p48, %p49
      %p51 = scmp.ne.s32.totalorder %s40, %s43
      %p52 = scmp.eq.s32.totalorder %s35, 1
      %p53 = por %p51, %p52
      %p54 = scmp.ne.s32.totalorder %s43, %s44
      %p55 = scmp.eq.s32.totalorder %s35, 0
      %p56 = por %p54, %p55
      %p57 = scmp.ne.s32.totalorder %s43, %s44
      %p58 = scmp.eq.s32.totalorder %s36, 1
      %p59 = por %p57, %p58
      %p61 = scmp.ne.s32.totalorder %s44, %s60
      %p62 = scmp.eq.s32.totalorder %s36, 0
      %p63 = por %p61, %p62
      %s65 = sadd.s32 %s64, 1
      %p68 = scmp.eq.s32.totalorder %s30, 1
      %p69 = scmp.ne.s32.totalorder %s64, %s66
      %p70 = scmp.eq.s32.totalorder %s30, 0
      %p71 = por %p69, %p70
      %p72 = scmp.ne.s32.totalorder %s64, %s66
      %p73 = scmp.eq.s32.totalorder %s35, 1
      %p74 = por %p72, %p73
      %p75 = scmp.ne.s32.totalorder %s66, %s67
      %p76 = scmp.eq.s32.totalorder %s35, 0
      %p77 = por %p75, %p76
      %p78 = scmp.ne.s32.totalorder %s66, %s67
      %p79 = scmp.eq.s32.totalorder %s36, 1
      %p80 = por %p78, %p79
      %p82 = scmp.ne.s32.totalorder %s67, %s81
      %p83 = scmp.eq.s32.totalorder %s36, 0
      %p84 = por %p82, %p83
      %s86 = sadd.s32 %s85, 1
      %p89 = scmp.eq.s32.totalorder %s30, 1
      %p90 = scmp.ne.s32.totalorder %s85, %s87
      %p91 = scmp.eq.s32.totalorder %s30, 0
      %p92 = por %p90, %p91
      %p93 = scmp.ne.s32.totalorder %s85, %s87
      %p94 = scmp.eq.s32.totalorder %s35, 1
      %p95 = por %p93, %p94
      %p96 = scmp.ne.s32.totalorder %s87, %s88
      %p97 = scmp.eq.s32.totalorder %s35, 0
      %p98 = por %p96, %p97
      %p99 = scmp.ne.s32.totalorder %s87, %s88
      %p100 = scmp.eq.s32.totalorder %s36, 1
      %p101 = por %p99, %p100
      %p103 = scmp.ne.s32.totalorder %s88, %s102
      %p104 = scmp.eq.s32.totalorder %s36, 0
      %p105 = por %p103, %p104
      %s107 = sadd.s32 %s106, 1
      %p110 = scmp.eq.s32.totalorder %s30, 1
      %p111 = scmp.ne.s32.totalorder %s106, %s108
      %p112 = scmp.eq.s32.totalorder %s30, 0
      %p113 = por %p111, %p112
      %p114 = scmp.ne.s32.totalorder %s106, %s108
      %p115 = scmp.eq.s32.totalorder %s35, 1
      %p116 = por %p114, %p115
      %p117 = scmp.ne.s32.totalorder %s108, %s109
      %p118 = scmp.eq.s32.totalorder %s35, 0
      %p119 = por %p117, %p118
      %p120 = scmp.ne.s32.totalorder %s108, %s109
      %p121 = scmp.eq.s32.totalorder %s36, 1
      %p122 = por %p120, %p121
      %p124 = scmp.ne.s32.totalorder %s109, %s123
      %p125 = scmp.eq.s32.totalorder %s36, 0
      %p126 = por %p124, %p125
      %s128 = sadd.s32 %s127, 1
      %p131 = scmp.eq.s32.totalorder %s30, 1
      %p132 = scmp.ne.s32.totalorder %s127, %s129
      %p133 = scmp.eq.s32.totalorder %s30, 0
      %p134 = por %p132, %p133
      %p135 = scmp.ne.s32.totalorder %s127, %s129
      %p136 = scmp.eq.s32.totalorder %s35, 1
      %p137 = por %p135, %p136
      %p138 = scmp.ne.s32.totalorder %s129, %s130
      %p139 = scmp.eq.s32.totalorder %s35, 0
      %p140 = por %p138, %p139
      %p141 = scmp.ne.s32.totalorder %s129, %s130
      %p142 = scmp.eq.s32.totalorder %s36, 1
      %p143 = por %p141, %p142
      %p145 = scmp.ne.s32.totalorder %s130, %s144
      %p146 = scmp.eq.s32.totalorder %s36, 0
      %p147 = por %p145, %p146
      %s149 = sadd.s32 %s148, 1
      %p152 = scmp.eq.s32.totalorder %s30, 1
      %p153 = scmp.ne.s32.totalorder %s148, %s150
      %p154 = scmp.eq.s32.totalorder %s30, 0
      %p155 = por %p153, %p154
      %p156 = scmp.ne.s32.totalorder %s148, %s150
      %p157 = scmp.eq.s32.totalorder %s35, 1
      %p158 = por %p156, %p157
      %p159 = scmp.ne.s32.totalorder %s150, %s151
      %p160 = scmp.eq.s32.totalorder %s35, 0
      %p161 = por %p159, %p160
      %p162 = scmp.ne.s32.totalorder %s150, %s151
      %p163 = scmp.eq.s32.totalorder %s36, 1
      %p164 = por %p162, %p163
      %p166 = scmp.ne.s32.totalorder %s151, %s165
      %p167 = scmp.eq.s32.totalorder %s36, 0
      %p168 = por %p166, %p167
      %s170 = sadd.s32 %s169, 1
      %p173 = scmp.eq.s32.totalorder %s30, 1
      %p174 = scmp.ne.s32.totalorder %s169, %s171
      %p175 = scmp.eq.s32.totalorder %s30, 0
      %p176 = por %p174, %p175
      %p177 = scmp.ne.s32.totalorder %s169, %s171
      %p178 = scmp.eq.s32.totalorder %s35, 1
      %p179 = por %p177, %p178
      %p180 = scmp.ne.s32.totalorder %s171, %s172
      %p181 = scmp.eq.s32.totalorder %s35, 0
      %p182 = por %p180, %p181
      %p183 = scmp.ne.s32.totalorder %s171, %s172
      %p184 = scmp.eq.s32.totalorder %s36, 1
      %p185 = por %p183, %p184
      %p187 = scmp.ne.s32.totalorder %s172, %s186
      %p188 = scmp.eq.s32.totalorder %s36, 0
      %p189 = por %p187, %p188
      %s191 = sadd.s32 %s190, 1
      %p194 = scmp.eq.s32.totalorder %s30, 1
      %p195 = scmp.ne.s32.totalorder %s190, %s192
      %p196 = scmp.eq.s32.totalorder %s30, 0
      %p197 = por %p195, %p196
      %p198 = scmp.ne.s32.totalorder %s190, %s192
      %p199 = scmp.eq.s32.totalorder %s35, 1
      %p200 = por %p198, %p199
      %p201 = scmp.ne.s32.totalorder %s192, %s193
      %p202 = scmp.eq.s32.totalorder %s35, 0
      %p203 = por %p201, %p202
      %p204 = scmp.ne.s32.totalorder %s192, %s193
      %p205 = scmp.eq.s32.totalorder %s36, 1
      %p206 = por %p204, %p205
      %p208 = scmp.ne.s32.totalorder %s193, %s207
      %p209 = scmp.eq.s32.totalorder %s36, 0
      %p210 = por %p208, %p209
      %s212 = sadd.s32 %s211, 1
      %p215 = scmp.eq.s32.totalorder %s30, 1
      %p216 = scmp.ne.s32.totalorder %s211, %s213
      %p217 = scmp.eq.s32.totalorder %s30, 0
      %p218 = por %p216, %p217
      %p219 = scmp.ne.s32.totalorder %s211, %s213
      %p220 = scmp.eq.s32.totalorder %s35, 1
      %p221 = por %p219, %p220
      %p222 = scmp.ne.s32.totalorder %s213, %s214
      %p223 = scmp.eq.s32.totalorder %s35, 0
      %p224 = por %p222, %p223
      %p225 = scmp.ne.s32.totalorder %s213, %s214
      %p226 = scmp.eq.s32.totalorder %s36, 1
      %p227 = por %p225, %p226
      %p229 = scmp.ne.s32.totalorder %s214, %s228
      %p230 = scmp.eq.s32.totalorder %s36, 0
      %p231 = por %p229, %p230
      %s233 = sadd.s32 %s232, 1
      %p236 = scmp.eq.s32.totalorder %s30, 1
      %p237 = scmp.ne.s32.totalorder %s232, %s234
      %p238 = scmp.eq.s32.totalorder %s30, 0
      %p239 = por %p237, %p238
      %p240 = scmp.ne.s32.totalorder %s232, %s234
      %p241 = scmp.eq.s32.totalorder %s35, 1
      %p242 = por %p240, %p241
      %p243 = scmp.ne.s32.totalorder %s234, %s235
      %p244 = scmp.eq.s32.totalorder %s35, 0
      %p245 = por %p243, %p244
      %p246 = scmp.ne.s32.totalorder %s234, %s235
      %p247 = scmp.eq.s32.totalorder %s36, 1
      %p248 = por %p246, %p247
      %p250 = scmp.ne.s32.totalorder %s235, %s249
      %p251 = scmp.eq.s32.totalorder %s36, 0
      %p252 = por %p250, %p251
      %s254 = sadd.s32 %s253, 1
      %p257 = scmp.eq.s32.totalorder %s30, 1
      %p258 = scmp.ne.s32.totalorder %s253, %s255
      %p259 = scmp.eq.s32.totalorder %s30, 0
      %p260 = por %p258, %p259
      %p261 = scmp.ne.s32.totalorder %s253, %s255
      %p262 = scmp.eq.s32.totalorder %s35, 1
      %p263 = por %p261, %p262
      %p264 = scmp.ne.s32.totalorder %s255, %s256
      %p265 = scmp.eq.s32.totalorder %s35, 0
      %p266 = por %p264, %p265
      %p267 = scmp.ne.s32.totalorder %s255, %s256
      %p268 = scmp.eq.s32.totalorder %s36, 1
      %p269 = por %p267, %p268
      %p271 = scmp.ne.s32.totalorder %s256, %s270
      %p272 = scmp.eq.s32.totalorder %s36, 0
      %p273 = por %p271, %p272
      %s275 = sadd.s32 %s274, 1
      %p278 = scmp.eq.s32.totalorder %s30, 1
      %p279 = scmp.ne.s32.totalorder %s274, %s276
      %p280 = scmp.eq.s32.totalorder %s30, 0
      %p281 = por %p279, %p280
      %p282 = scmp.ne.s32.totalorder %s274, %s276
      %p283 = scmp.eq.s32.totalorder %s35, 1
      %p284 = por %p282, %p283
      %p285 = scmp.ne.s32.totalorder %s276, %s277
      %p286 = scmp.eq.s32.totalorder %s35, 0
      %p287 = por %p285, %p286
      %p288 = scmp.ne.s32.totalorder %s276, %s277
      %p289 = scmp.eq.s32.totalorder %s36, 1
      %p290 = por %p288, %p289
      %p292 = scmp.ne.s32.totalorder %s277, %s291
      %p293 = scmp.eq.s32.totalorder %s36, 0
      %p294 = por %p292, %p293
      %s296 = sadd.s32 %s295, 1
      %p299 = scmp.eq.s32.totalorder %s30, 1
      %p300 = scmp.ne.s32.totalorder %s295, %s297
      %p301 = scmp.eq.s32.totalorder %s30, 0
      %p302 = por %p300, %p301
      %p303 = scmp.ne.s32.totalorder %s295, %s297
      %p304 = scmp.eq.s32.totalorder %s35, 1
      %p305 = por %p303, %p304
      %p306 = scmp.ne.s32.totalorder %s297, %s298
      %p307 = scmp.eq.s32.totalorder %s35, 0
      %p308 = por %p306, %p307
      %p309 = scmp.ne.s32.totalorder %s297, %s298
      %p310 = scmp.eq.s32.totalorder %s36, 1
      %p311 = por %p309, %p310
      %p313 = scmp.ne.s32.totalorder %s298, %s312
      %p314 = scmp.eq.s32.totalorder %s36, 0
      %p315 = por %p313, %p314
      %s317 = sadd.s32 %s316, 1
      %p320 = scmp.eq.s32.totalorder %s30, 1
      %p321 = scmp.ne.s32.totalorder %s316, %s318
      %p322 = scmp.eq.s32.totalorder %s30, 0
      %p323 = por %p321, %p322
      %p324 = scmp.ne.s32.totalorder %s316, %s318
      %p325 = scmp.eq.s32.totalorder %s35, 1
      %p326 = por %p324, %p325
      %p327 = scmp.ne.s32.totalorder %s318, %s319
      %p328 = scmp.eq.s32.totalorder %s35, 0
      %p329 = por %p327, %p328
      %p330 = scmp.ne.s32.totalorder %s318, %s319
      %p331 = scmp.eq.s32.totalorder %s36, 1
      %p332 = por %p330, %p331
      %p334 = scmp.ne.s32.totalorder %s319, %s333
      %p335 = scmp.eq.s32.totalorder %s36, 0
      %p336 = por %p334, %p335
      %s338 = sadd.s32 %s337, 1
      %p341 = scmp.eq.s32.totalorder %s30, 1
      %p342 = scmp.ne.s32.totalorder %s337, %s339
      %p343 = scmp.eq.s32.totalorder %s30, 0
      %p344 = por %p342, %p343
      %p345 = scmp.ne.s32.totalorder %s337, %s339
      %p346 = scmp.eq.s32.totalorder %s35, 1
      %p347 = por %p345, %p346
      %p348 = scmp.ne.s32.totalorder %s339, %s340
      %p349 = scmp.eq.s32.totalorder %s35, 0
      %p350 = por %p348, %p349
      %p351 = scmp.ne.s32.totalorder %s339, %s340
      %p352 = scmp.eq.s32.totalorder %s36, 1
      %p353 = por %p351, %p352
      %p355 = scmp.ne.s32.totalorder %s340, %s354
      %p356 = scmp.eq.s32.totalorder %s36, 0
      %p357 = por %p355, %p356
      %s359 = sadd.s32 %s358, 1
      %p362 = scmp.eq.s32.totalorder %s30, 1
      %p363 = scmp.ne.s32.totalorder %s358, %s360
      %p364 = scmp.eq.s32.totalorder %s30, 0
      %p365 = por %p363, %p364
      %p366 = scmp.ne.s32.totalorder %s358, %s360
      %p367 = scmp.eq.s32.totalorder %s35, 1
      %p368 = por %p366, %p367
      %p369 = scmp.ne.s32.totalorder %s360, %s361
      %p370 = scmp.eq.s32.totalorder %s35, 0
      %p371 = por %p369, %p370
      %p372 = scmp.ne.s32.totalorder %s360, %s361
      %p373 = scmp.eq.s32.totalorder %s36, 1
      %p374 = por %p372, %p373
      %p376 = scmp.ne.s32.totalorder %s361, %s375
      %p377 = scmp.eq.s32.totalorder %s36, 0
      %p378 = por %p376, %p377
      %s380 = sadd.s32 %s379, 1
      %p383 = scmp.eq.s32.totalorder %s30, 1
      %p384 = scmp.ne.s32.totalorder %s379, %s381
      %p385 = scmp.eq.s32.totalorder %s30, 0
      %p386 = por %p384, %p385
      %p387 = scmp.ne.s32.totalorder %s379, %s381
      %p388 = scmp.eq.s32.totalorder %s35, 1
      %p389 = por %p387, %p388
      %p390 = scmp.ne.s32.totalorder %s381, %s382
      %p391 = scmp.eq.s32.totalorder %s35, 0
      %p392 = por %p390, %p391
      %p393 = scmp.ne.s32.totalorder %s381, %s382
      %p394 = scmp.eq.s32.totalorder %s36, 1
      %p395 = por %p393, %p394
      %p397 = scmp.ne.s32.totalorder %s382, %s396
      %p398 = scmp.eq.s32.totalorder %s36, 0
      %p399 = por %p397, %p398
      %s400 = ssub.s32 %s30, %s37
      %p401 = scmp.eq.s32.totalorder %s400, 0
      %s403 = sadd.s32 %s402, 1
      %s404 = scalar_select %p401, %s402, %s403
      %p407 = pneg %p401
      %p408 = scmp.eq.s32.totalorder %s30, 1
      %p409 = por %p407, %p408
      %p410 = scmp.ne.s32.totalorder %s402, %s405
      %p411 = scmp.eq.s32.totalorder %s30, 0
      %p412 = por %p410, %p411
      %p413 = scmp.ne.s32.totalorder %s402, %s405
      %p414 = scmp.eq.s32.totalorder %s35, 1
      %p415 = por %p413, %p414
      %p416 = scmp.ne.s32.totalorder %s405, %s406
      %p417 = scmp.eq.s32.totalorder %s35, 0
      %p418 = por %p416, %p417
      %p419 = scmp.ne.s32.totalorder %s405, %s406
      %p420 = scmp.eq.s32.totalorder %s36, 1
      %p421 = por %p419, %p420
      %p423 = scmp.ne.s32.totalorder %s406, %s422
      %p424 = scmp.eq.s32.totalorder %s36, 0
      %p425 = por %p423, %p424
      %p426 = scmp.le.s32.totalorder 1, %s30
      %p427 = scmp.lt.s32.totalorder %s30, 3
      %p428 = pnand %p426, %p427
      %p429 = pneg %p428
      // Predicated region
      $region9: #{tpu_custom_call.1} parent=5 // pred_check
        _
      $region10: #{tpu_custom_call.1} parent=5 // pred_check_branch
        %431 = sbr.rel (%p428) target = $region12
      $region11: #{tpu_custom_call.1} parent=5 // pred_region
        %s432 = ssub.s32 %s30, 1
        // Predicated region
        $region13: #{tpu_custom_call.1} parent=11 // pred_check
          %p433 = pneg %p77
        $region14: #{tpu_custom_call.1} parent=11 // pred_check_branch
          %435 = sbr.rel (%p433) target = $region16
        $region15: #{tpu_custom_call.1} parent=11 // pred_region
          %s437 = ssub.s32 16, 16
          %438 = vsyncadd [#allocation3], %s437
          %s440 = sshll.u32 [#allocation2], 4
          %s441 = int_to_ptr.vmem [resolvable:$true] %s440
          %443 = dma.hbm_to_vmem [thread:$0]  %s1, 16, %s441, [#allocation3]
        $region16: #{tpu_custom_call.1} parent=11 // pred_fallthru
          _
        // Predicated region
        $region17: #{tpu_custom_call.1} parent=11 // pred_check
          %p444 = pneg %p98
        $region18: #{tpu_custom_call.1} parent=11 // pred_check_branch
          %446 = sbr.rel (%p444) target = $region20
        $region19: #{tpu_custom_call.1} parent=11 // pred_region
          %s448 = ssub.s32 16, 16
          %449 = vsyncadd [#allocation6], %s448
          %s451 = sshll.u32 [#allocation5], 4
          %s452 = int_to_ptr.vmem [resolvable:$true] %s451
          %454 = dma.hbm_to_vmem [thread:$0]  %s2, 16, %s452, [#allocation6]
        $region20: #{tpu_custom_call.1} parent=11 // pred_fallthru
          _
        // Predicated region
        $region21: #{tpu_custom_call.1} parent=11 // pred_check
          %p455 = pneg %p119
        $region22: #{tpu_custom_call.1} parent=11 // pred_check_branch
          %457 = sbr.rel (%p455) target = $region24
        $region23: #{tpu_custom_call.1} parent=11 // pred_region
          _
        $region24: #{tpu_custom_call.1} parent=11 // pred_fallthru
          _
        // Predicated region
        $region25: #{tpu_custom_call.1} parent=11 // pred_check
          %p458 = pneg %p140
        $region26: #{tpu_custom_call.1} parent=11 // pred_check_branch
          %460 = sbr.rel (%p458) target = $region28
        $region27: #{tpu_custom_call.1} parent=11 // pred_region
          _
        $region28: #{tpu_custom_call.1} parent=11 // pred_fallthru
          _
        // Predicated region
        $region29: #{tpu_custom_call.1} parent=11 // pred_check
          %p461 = pneg %p161
        $region30: #{tpu_custom_call.1} parent=11 // pred_check_branch
          %463 = sbr.rel (%p461) target = $region32
        $region31: #{tpu_custom_call.1} parent=11 // pred_region
          _
        $region32: #{tpu_custom_call.1} parent=11 // pred_fallthru
          _
        // Predicated region
        $region33: #{tpu_custom_call.1} parent=11 // pred_check
          %p464 = pneg %p182
        $region34: #{tpu_custom_call.1} parent=11 // pred_check_branch
          %466 = sbr.rel (%p464) target = $region36
        $region35: #{tpu_custom_call.1} parent=11 // pred_region
          %s468 = ssub.s32 16, 16
          %469 = vsyncadd [#allocation6], %s468
          %s471 = sshll.u32 [#allocation7], 4
          %s472 = int_to_ptr.vmem [resolvable:$true] %s471
          %474 = dma.hbm_to_vmem [thread:$0]  %s6, 16, %s472, [#allocation6]
        $region36: #{tpu_custom_call.1} parent=11 // pred_fallthru
          _
        // Predicated region
        $region37: #{tpu_custom_call.1} parent=11 // pred_check
          %p475 = pneg %p203
        $region38: #{tpu_custom_call.1} parent=11 // pred_check_branch
          %477 = sbr.rel (%p475) target = $region40
        $region39: #{tpu_custom_call.1} parent=11 // pred_region
          %s479 = ssub.s32 16, 16
          %480 = vsyncadd [#allocation9], %s479
          %s482 = sshll.u32 [#allocation8], 4
          %s483 = int_to_ptr.vmem [resolvable:$true] %s482
          %485 = dma.hbm_to_vmem [thread:$0]  %s7, 16, %s483, [#allocation9]
        $region40: #{tpu_custom_call.1} parent=11 // pred_fallthru
          _
        // Predicated region
        $region41: #{tpu_custom_call.1} parent=11 // pred_check
          %p486 = pneg %p224
        $region42: #{tpu_custom_call.1} parent=11 // pred_check_branch
          %488 = sbr.rel (%p486) target = $region44
        $region43: #{tpu_custom_call.1} parent=11 // pred_region
          %s490 = ssub.s32 16, 16
          %491 = vsyncadd [#allocation9], %s490
          %s493 = sshll.u32 [#allocation10], 4
          %s494 = int_to_ptr.vmem [resolvable:$true] %s493
          %496 = dma.hbm_to_vmem [thread:$0]  %s8, 16, %s494, [#allocation9]
        $region44: #{tpu_custom_call.1} parent=11 // pred_fallthru
          _
        // Predicated region
        $region45: #{tpu_custom_call.1} parent=11 // pred_check
          %p497 = pneg %p245
        $region46: #{tpu_custom_call.1} parent=11 // pred_check_branch
          %499 = sbr.rel (%p497) target = $region48
        $region47: #{tpu_custom_call.1} parent=11 // pred_region
          _
        $region48: #{tpu_custom_call.1} parent=11 // pred_fallthru
          _
        // Predicated region
        $region49: #{tpu_custom_call.1} parent=11 // pred_check
          %p500 = pneg %p266
        $region50: #{tpu_custom_call.1} parent=11 // pred_check_branch
          %502 = sbr.rel (%p500) target = $region52
        $region51: #{tpu_custom_call.1} parent=11 // pred_region
          _
        $region52: #{tpu_custom_call.1} parent=11 // pred_fallthru
          _
        // Predicated region
        $region53: #{tpu_custom_call.1} parent=11 // pred_check
          %p503 = pneg %p287
        $region54: #{tpu_custom_call.1} parent=11 // pred_check_branch
          %505 = sbr.rel (%p503) target = $region56
        $region55: #{tpu_custom_call.1} parent=11 // pred_region
          _
        $region56: #{tpu_custom_call.1} parent=11 // pred_fallthru
          _
        // Predicated region
        $region57: #{tpu_custom_call.1} parent=11 // pred_check
          %p506 = pneg %p308
        $region58: #{tpu_custom_call.1} parent=11 // pred_check_branch
          %508 = sbr.rel (%p506) target = $region60
        $region59: #{tpu_custom_call.1} parent=11 // pred_region
          _
        $region60: #{tpu_custom_call.1} parent=11 // pred_fallthru
          _
        // Predicated region
        $region61: #{tpu_custom_call.1} parent=11 // pred_check
          %p509 = pneg %p329
        $region62: #{tpu_custom_call.1} parent=11 // pred_check_branch
          %511 = sbr.rel (%p509) target = $region64
        $region63: #{tpu_custom_call.1} parent=11 // pred_region
          %s513 = ssub.s32 256, 256
          %514 = vsyncadd [#allocation12], %s513
          %s515 = sshll.u32 [#allocation11], 4
          %s516 = int_to_ptr.vmem [resolvable:$true] %s515
          %521 = dma.hbm_to_vmem [thread:$0]  %s13, 256, %s516, [#allocation12], 64, 64, 4
        $region64: #{tpu_custom_call.1} parent=11 // pred_fallthru
          _
        // Predicated region
        $region65: #{tpu_custom_call.1} parent=11 // pred_check
          %p522 = pneg %p350
        $region66: #{tpu_custom_call.1} parent=11 // pred_check_branch
          %524 = sbr.rel (%p522) target = $region68
        $region67: #{tpu_custom_call.1} parent=11 // pred_region
          _
        $region68: #{tpu_custom_call.1} parent=11 // pred_fallthru
          _
        // Predicated region
        $region69: #{tpu_custom_call.1} parent=11 // pred_check
          %p525 = pneg %p371
        $region70: #{tpu_custom_call.1} parent=11 // pred_check_branch
          %527 = sbr.rel (%p525) target = $region72
        $region71: #{tpu_custom_call.1} parent=11 // pred_region
          _
        $region72: #{tpu_custom_call.1} parent=11 // pred_fallthru
          _
        // Predicated region
        $region73: #{tpu_custom_call.1} parent=11 // pred_check
          %p528 = pneg %p392
        $region74: #{tpu_custom_call.1} parent=11 // pred_check_branch
          %530 = sbr.rel (%p528) target = $region76
        $region75: #{tpu_custom_call.1} parent=11 // pred_region
          _
        $region76: #{tpu_custom_call.1} parent=11 // pred_fallthru
          _
      $region12: #{tpu_custom_call.1} parent=5 // pred_fallthru
        _
      %p531 = scmp.lt.s32.totalorder %s30, 2
      // Predicated region
      $region77: #{tpu_custom_call.1} parent=5 // pred_check
        %p532 = pneg %p531
      $region78: #{tpu_custom_call.1} parent=5 // pred_check_branch
        %534 = sbr.rel (%p532) target = $region80
      $region79: #{tpu_custom_call.1} parent=5 // pred_region
        // Predicated region
        $region81: #{tpu_custom_call.1} parent=79 // pred_check
          %p535 = pneg %p50
        $region82: #{tpu_custom_call.1} parent=79 // pred_check_branch
          %537 = sbr.rel (%p535) target = $region84
        $region83: #{tpu_custom_call.1} parent=79 // pred_region
          %p538 = scmp.lt.s32.totalorder %s30, 1
          %s539 = scalar_select %p538, %s30, 1
          %s540 = smul.addr %s539, 2
          %s541 = smul.addr %s540, 8
          %s542 = scalar_lea.vmem %s0, %s541
        $region84: #{tpu_custom_call.1} parent=79 // pred_fallthru
          _
      $region80: #{tpu_custom_call.1} parent=5 // pred_fallthru
        _
      %p543 = scmp.le.s32.totalorder 1, %s30
      %p544 = scmp.lt.s32.totalorder %s30, 3
      %p545 = pnand %p543, %p544
      %p546 = pneg %p545
      // Predicated region
      $region85: #{tpu_custom_call.1} parent=5 // pred_check
        _
      $region86: #{tpu_custom_call.1} parent=5 // pred_check_branch
        %548 = sbr.rel (%p545) target = $region88
      $region87: #{tpu_custom_call.1} parent=5 // pred_region
        %s549 = ssub.s32 %s30, 1
        // Predicated region
        $region89: #{tpu_custom_call.1} parent=87 // pred_check
          %p550 = pneg %p77
        $region90: #{tpu_custom_call.1} parent=87 // pred_check_branch
          %552 = sbr.rel (%p550) target = $region92
        $region91: #{tpu_custom_call.1} parent=87 // pred_region
          %553 = dma.done [#allocation3], 16
        $region92: #{tpu_custom_call.1} parent=87 // pred_fallthru
          _
        // Predicated region
        $region93: #{tpu_custom_call.1} parent=87 // pred_check
          %p554 = pneg %p98
        $region94: #{tpu_custom_call.1} parent=87 // pred_check_branch
          %556 = sbr.rel (%p554) target = $region96
        $region95: #{tpu_custom_call.1} parent=87 // pred_region
          %557 = dma.done [#allocation6], 16
        $region96: #{tpu_custom_call.1} parent=87 // pred_fallthru
          _
        // Predicated region
        $region97: #{tpu_custom_call.1} parent=87 // pred_check
          %p558 = pneg %p182
        $region98: #{tpu_custom_call.1} parent=87 // pred_check_branch
          %560 = sbr.rel (%p558) target = $region100
        $region99: #{tpu_custom_call.1} parent=87 // pred_region
          %561 = dma.done [#allocation6], 16
        $region100: #{tpu_custom_call.1} parent=87 // pred_fallthru
          _
        // Predicated region
        $region101: #{tpu_custom_call.1} parent=87 // pred_check
          %p562 = pneg %p203
        $region102: #{tpu_custom_call.1} parent=87 // pred_check_branch
          %564 = sbr.rel (%p562) target = $region104
        $region103: #{tpu_custom_call.1} parent=87 // pred_region
          %565 = dma.done [#allocation9], 16
        $region104: #{tpu_custom_call.1} parent=87 // pred_fallthru
          _
        // Predicated region
        $region105: #{tpu_custom_call.1} parent=87 // pred_check
          %p566 = pneg %p224
        $region106: #{tpu_custom_call.1} parent=87 // pred_check_branch
          %568 = sbr.rel (%p566) target = $region108
        $region107: #{tpu_custom_call.1} parent=87 // pred_region
          %569 = dma.done [#allocation9], 16
        $region108: #{tpu_custom_call.1} parent=87 // pred_fallthru
          _
        // Predicated region
        $region109: #{tpu_custom_call.1} parent=87 // pred_check
          %p570 = pneg %p329
        $region110: #{tpu_custom_call.1} parent=87 // pred_check_branch
          %572 = sbr.rel (%p570) target = $region112
        $region111: #{tpu_custom_call.1} parent=87 // pred_region
          %573 = dma.done [#allocation12], 256
        $region112: #{tpu_custom_call.1} parent=87 // pred_fallthru
          _
        %p574 = scmp.lt.s32.totalorder %s35, 1
        %s575 = scalar_select %p574, %s35, 1
        %s576 = smul.addr %s575, 2
        %s577 = smul.addr %s576, 8
        %s578 = scalar_lea.vmem %s0, %s577
        %p579 = pneg %p56
        %p580 = pneg %p53
        %p581 = pneg %p77
        %p582 = pneg %p74
        %p583 = pneg %p98
        %p584 = pneg %p95
        %p585 = pneg %p119
        %p586 = pneg %p116
        %p587 = pneg %p140
        %p588 = pneg %p137
        %p589 = pneg %p161
        %p590 = pneg %p158
        %p591 = pneg %p182
        %p592 = pneg %p179
        %p593 = pneg %p203
        %p594 = pneg %p200
        %p595 = pneg %p224
        %p596 = pneg %p221
        %p597 = pneg %p245
        %p598 = pneg %p242
        %p599 = pneg %p266
        %p600 = pneg %p263
        %p601 = pneg %p287
        %p602 = pneg %p284
        %p603 = pneg %p308
        %p604 = pneg %p305
        %p605 = pneg %p329
        %p606 = pneg %p326
        %p607 = pneg %p350
        %p608 = pneg %p347
        %p609 = pneg %p371
        %p610 = pneg %p368
        %p611 = pneg %p392
        %p612 = pneg %p389
        %p613 = pneg %p418
        %p614 = pneg %p415
        %s615 = sand.u32 %s405, 1
        %s616 = scalar_lea.sflag [#allocation4], %s615
        %s617 = sand.u32 %s405, 1
        %s618 = smul.addr %s617, 16
        %s619 = scalar_lea.vmem [#allocation13], %s618
        %p620 = scmp.lt.s32.totalorder %s35, 1
        %s621 = scalar_select %p620, %s35, 1
        %s622 = smul.addr %s621, 2
        %s623 = smul.addr %s622, 8
        %s624 = scalar_lea.vmem %s0, %s623
        %v626 = vld [vmem:[%s624] sm:$0xff]
        %v627 = vld [vmem:[%s624 + $0x8] sm:$0xff]
        %v628 = vld [vmem:[#allocation2] sm:$0x1]
        %v629 = vld [vmem:[#allocation5] sm:$0x1]
        %vm630 = vcmask 261120
        %v631 = vsel %vm630, %v626, 0.0
        %632 = vadd.xlane.f32.xlu0 %v631
        %v633 = vpop.xlane.xlu0 %632
        %v634 = vsel %vm630, %v627, 0.0
        %635 = vadd.xlane.f32.xlu0 %v634
        %v636 = vpop.xlane.xlu0 %635
        %v637 = vrcp.pop 32.0
        %v638 = vmul.f32 %v633, %v637
        %v639 = vmul.f32 %v636, %v637
        %v640 = vsub.f32 %v626, %v638
        %v641 = vsub.f32 %v627, %v639
        %v642 = vmul.f32 %v640, %v640
        %v643 = vmul.f32 %v641, %v641
        %v644 = vsel %vm630, %v642, 0.0
        %645 = vadd.xlane.f32.xlu0 %v644
        %v646 = vpop.xlane.xlu0 %645
        %v647 = vsel %vm630, %v643, 0.0
        %648 = vadd.xlane.f32.xlu0 %v647
        %v649 = vpop.xlane.xlu0 %648
        %v650 = vmul.f32 %v646, %v637
        %v651 = vmul.f32 %v649, %v637
        %v652 = vadd.f32 %v650, 1e-05
        %v653 = vadd.f32 %v651, 1e-05
        %v654 = vrsqrt.pop %v652
        %v655 = vrsqrt.pop %v653
        %v656 = vmul.f32 %v640, %v654
        %v657 = vmul.f32 %v641, %v655
        %v659 = vlaneseq
        %v660 = vshrl.u32 %v659, 7
        %v661 = vsub.s32 0, %v660
        %v662 = vrot.slane %v628, %v661
        %v664 = vmul.f32 %v656, %v662
        %v665 = vmul.f32 %v657, %v662
        %v667 = vlaneseq
        %v668 = vshrl.u32 %v667, 7
        %v669 = vsub.s32 0, %v668
        %v670 = vrot.slane %v629, %v669
        %v672 = vadd.f32 %v664, %v670
        %v673 = vadd.f32 %v665, %v670
        %v674 = vpack.c.bf16 %v673, %v672
        %v675 = vld [vmem:[%s3] sm:$0xf]
        %v676 = vld [vmem:[%s3 + $0x4] sm:$0xf]
        %v677 = vld [vmem:[%s3 + $0x8] sm:$0xf]
        %v678 = vld [vmem:[%s3 + $0xc] sm:$0xf]
        %v679 = vld [vmem:[#allocation7] sm:$0x1]
        %v681 = vlaneseq
        %v682 = vshrl.u32 %v681, 7
        %v683 = vsub.s32 0, %v682
        %v684 = vrot.slane %v679, %v683
        %v690 = vunpack.c.l.b16 %v675
        %v691 = vunpack.c.l.b16 %v676
        %v692 = vunpack.c.l.b16 %v677
        %v693 = vunpack.c.l.b16 %v678
        %v694 = vpack.c.b16 %v691, %v690
        %v695 = vpack.c.b16 %v693, %v692
        %v699 = vsel %vm630, %v674, 0
        %701 = vmatprep.subr.bf16.mxu0 0
        %702 = vmatpush1.bf16.msra.mxu0 0
        %703 = vmatprep.subr.bf16.mxu0 0
        %704 = vmatpush1.bf16.msra.mxu0 0
        %705 = vmatprep.subr.bf16.mxu0 0
        %706 = vmatpush1.bf16.msra.mxu0 0
        %707 = vmatprep.subr.bf16.mxu0 0
        %708 = vmatpush1.bf16.msra.mxu0 0
        %709 = vmatprep.subr.bf16.mxu0 0
        %710 = vmatpush1.bf16.msra.mxu0 0
        %711 = vmatprep.subr.bf16.mxu0 0
        %712 = vmatpush1.bf16.msra.mxu0 0
        %713 = vmatprep.subr.bf16.mxu0 0
        %714 = vmatpush1.bf16.msra.mxu0 %v695
        %715 = vmatprep.subr.bf16.mxu0 0
        %716 = vmatpush1.bf16.msra.mxu0 %v694
        %717 = vmatprep.subr.bf16.mxu0 0
        %718 = vmatpush2.bf16.msra.mxu0 0
        %719 = vmatprep.subr.bf16.mxu0 0
        %720 = vmatpush2.bf16.msra.mxu0 0
        %721 = vmatprep.subr.bf16.mxu0 0
        %722 = vmatpush2.bf16.msra.mxu0 0
        %723 = vmatprep.subr.bf16.mxu0 0
        %724 = vmatpush2.bf16.msra.mxu0 0
        %725 = vmatprep.subr.bf16.mxu0 0
        %726 = vmatpush2.bf16.msra.mxu0 0
        %727 = vmatprep.subr.bf16.mxu0 0
        %728 = vmatpush2.bf16.msra.mxu0 0
        %729 = vmatprep.subr.bf16.mxu0 0
        %730 = vmatpush2.bf16.msra.mxu0 0
        %731 = vmatprep.subr.bf16.mxu0 0
        %732 = vmatpush2.bf16.msra.mxu0 0
        %733 = vmatprep.mubr.bf16.mxu0 0
        %734 = vmatmul.mubr.bf16.gmra.mxu0 %v699
        %v735 = vpop.f32.mrf.mxu0
        %v736 = vadd.f32 %v684, %v735
        %v737 = vpop.f32.mrf.mxu0
        %v738 = vpop.f32.mrf.mxu0
        %v739 = vadd.f32 %v684, %v738
        %v740 = vpop.f32.mrf.mxu0
        %741 = vdwg.mxu0
        %v742 = vld [vmem:[%s4] sm:$0xf]
        %v743 = vld [vmem:[%s4 + $0x4] sm:$0xf]
        %v744 = vld [vmem:[%s4 + $0x8] sm:$0xf]
        %v745 = vld [vmem:[%s4 + $0xc] sm:$0xf]
        %v746 = vld [vmem:[#allocation8] sm:$0x1]
        %v748 = vlaneseq
        %v749 = vshrl.u32 %v748, 7
        %v750 = vsub.s32 0, %v749
        %v751 = vrot.slane %v746, %v750
        %v757 = vunpack.c.l.b16 %v742
        %v758 = vunpack.c.l.b16 %v743
        %v759 = vunpack.c.l.b16 %v744
        %v760 = vunpack.c.l.b16 %v745
        %v761 = vpack.c.b16 %v758, %v757
        %v762 = vpack.c.b16 %v760, %v759
        %765 = vmatprep.subr.bf16.mxu0 0
        %766 = vmatpush1.bf16.msra.mxu0 0
        %767 = vmatprep.subr.bf16.mxu0 0
        %768 = vmatpush1.bf16.msra.mxu0 0
        %769 = vmatprep.subr.bf16.mxu0 0
        %770 = vmatpush1.bf16.msra.mxu0 0
        %771 = vmatprep.subr.bf16.mxu0 0
        %772 = vmatpush1.bf16.msra.mxu0 0
        %773 = vmatprep.subr.bf16.mxu0 0
        %774 = vmatpush1.bf16.msra.mxu0 0
        %775 = vmatprep.subr.bf16.mxu0 0
        %776 = vmatpush1.bf16.msra.mxu0 0
        %777 = vmatprep.subr.bf16.mxu0 0
        %778 = vmatpush1.bf16.msra.mxu0 %v762
        %779 = vmatprep.subr.bf16.mxu0 0
        %780 = vmatpush1.bf16.msra.mxu0 %v761
        %781 = vmatprep.subr.bf16.mxu0 0
        %782 = vmatpush2.bf16.msra.mxu0 0
        %783 = vmatprep.subr.bf16.mxu0 0
        %784 = vmatpush2.bf16.msra.mxu0 0
        %785 = vmatprep.subr.bf16.mxu0 0
        %786 = vmatpush2.bf16.msra.mxu0 0
        %787 = vmatprep.subr.bf16.mxu0 0
        %788 = vmatpush2.bf16.msra.mxu0 0
        %789 = vmatprep.subr.bf16.mxu0 0
        %790 = vmatpush2.bf16.msra.mxu0 0
        %791 = vmatprep.subr.bf16.mxu0 0
        %792 = vmatpush2.bf16.msra.mxu0 0
        %793 = vmatprep.subr.bf16.mxu0 0
        %794 = vmatpush2.bf16.msra.mxu0 0
        %795 = vmatprep.subr.bf16.mxu0 0
        %796 = vmatpush2.bf16.msra.mxu0 0
        %797 = vmatprep.mubr.bf16.mxu0 0
        %798 = vmatmul.mubr.bf16.gmra.mxu0 %v699
        %v799 = vpop.f32.mrf.mxu0
        %v800 = vadd.f32 %v751, %v799
        %v801 = vpop.f32.mrf.mxu0
        %v802 = vpop.f32.mrf.mxu0
        %v803 = vadd.f32 %v751, %v802
        %v804 = vpop.f32.mrf.mxu0
        %805 = vdwg.mxu0
        %v806 = vld [vmem:[%s5] sm:$0xf]
        %v807 = vld [vmem:[%s5 + $0x4] sm:$0xf]
        %v808 = vld [vmem:[%s5 + $0x8] sm:$0xf]
        %v809 = vld [vmem:[%s5 + $0xc] sm:$0xf]
        %v810 = vld [vmem:[#allocation10] sm:$0x1]
        %v812 = vlaneseq
        %v813 = vshrl.u32 %v812, 7
        %v814 = vsub.s32 0, %v813
        %v815 = vrot.slane %v810, %v814
        %v821 = vunpack.c.l.b16 %v806
        %v822 = vunpack.c.l.b16 %v807
        %v823 = vunpack.c.l.b16 %v808
        %v824 = vunpack.c.l.b16 %v809
        %v825 = vpack.c.b16 %v822, %v821
        %v826 = vpack.c.b16 %v824, %v823
        %829 = vmatprep.subr.bf16.mxu0 0
        %830 = vmatpush1.bf16.msra.mxu0 0
        %831 = vmatprep.subr.bf16.mxu0 0
        %832 = vmatpush1.bf16.msra.mxu0 0
        %833 = vmatprep.subr.bf16.mxu0 0
        %834 = vmatpush1.bf16.msra.mxu0 0
        %835 = vmatprep.subr.bf16.mxu0 0
        %836 = vmatpush1.bf16.msra.mxu0 0
        %837 = vmatprep.subr.bf16.mxu0 0
        %838 = vmatpush1.bf16.msra.mxu0 0
        %839 = vmatprep.subr.bf16.mxu0 0
        %840 = vmatpush1.bf16.msra.mxu0 0
        %841 = vmatprep.subr.bf16.mxu0 0
        %842 = vmatpush1.bf16.msra.mxu0 %v826
        %843 = vmatprep.subr.bf16.mxu0 0
        %844 = vmatpush1.bf16.msra.mxu0 %v825
        %845 = vmatprep.subr.bf16.mxu0 0
        %846 = vmatpush2.bf16.msra.mxu0 0
        %847 = vmatprep.subr.bf16.mxu0 0
        %848 = vmatpush2.bf16.msra.mxu0 0
        %849 = vmatprep.subr.bf16.mxu0 0
        %850 = vmatpush2.bf16.msra.mxu0 0
        %851 = vmatprep.subr.bf16.mxu0 0
        %852 = vmatpush2.bf16.msra.mxu0 0
        %853 = vmatprep.subr.bf16.mxu0 0
        %854 = vmatpush2.bf16.msra.mxu0 0
        %855 = vmatprep.subr.bf16.mxu0 0
        %856 = vmatpush2.bf16.msra.mxu0 0
        %857 = vmatprep.subr.bf16.mxu0 0
        %858 = vmatpush2.bf16.msra.mxu0 0
        %859 = vmatprep.subr.bf16.mxu0 0
        %860 = vmatpush2.bf16.msra.mxu0 0
        %861 = vmatprep.mubr.bf16.mxu0 0
        %862 = vmatmul.mubr.bf16.gmra.mxu0 %v699
        %v863 = vpop.f32.mrf.mxu0
        %v864 = vadd.f32 %v815, %v863
        %v865 = vpop.f32.mrf.mxu0
        %v866 = vpop.f32.mrf.mxu0
        %v867 = vadd.f32 %v815, %v866
        %v868 = vpop.f32.mrf.mxu0
        %869 = vdwg.mxu0
        %v870 = vmul.f32 %v736, 0.35355338
        %v871 = vmul.f32 %v739, 0.35355338
        %v872 = vpack.c.bf16 %v871, %v870
        %874 = vrot.lane.b32.xlu0 %v872, 120
        %v875 = vpop.permute.xlu0 %874
        %876 = vrot.lane.b32.xlu0 %v872, 112
        %v877 = vpop.permute.xlu0 %876
        %878 = vrot.lane.b32.xlu0 %v872, 104
        %v879 = vpop.permute.xlu0 %878
        %v880 = vpack.c.bf16 %v803, %v800
        %882 = vrot.lane.b32.xlu0 %v880, 120
        %v883 = vpop.permute.xlu0 %882
        %884 = vrot.lane.b32.xlu0 %v880, 112
        %v885 = vpop.permute.xlu0 %884
        %886 = vrot.lane.b32.xlu0 %v880, 104
        %v887 = vpop.permute.xlu0 %886
        %v888 = vpack.c.bf16 %v867, %v864
        %890 = vrot.lane.b32.xlu0 %v888, 120
        %v891 = vpop.permute.xlu0 %890
        %893 = vrot.lane.b32.xlu0 %v888, 112
        %v894 = vpop.permute.xlu0 %893
        %896 = vrot.lane.b32.xlu0 %v888, 104
        %v897 = vpop.permute.xlu0 %896
        %vm899 = vcmask 64512
        %v901 = vsel %vm899, %v872, 0
        %v904 = vsel %vm899, %v880, 0
        %906 = vmatprep.subr.bf16.mxu0 0
        %907 = vmatpush1.bf16.xpose.msra.mxu0 0
        %908 = vmatprep.subr.bf16.mxu0 0
        %909 = vmatpush1.bf16.xpose.msra.mxu0 0
        %910 = vmatprep.subr.bf16.mxu0 0
        %911 = vmatpush1.bf16.xpose.msra.mxu0 0
        %912 = vmatprep.subr.bf16.mxu0 0
        %913 = vmatpush1.bf16.xpose.msra.mxu0 0
        %914 = vmatprep.subr.bf16.mxu0 0
        %915 = vmatpush1.bf16.xpose.msra.mxu0 0
        %916 = vmatprep.subr.bf16.mxu0 0
        %917 = vmatpush1.bf16.xpose.msra.mxu0 0
        %918 = vmatprep.subr.bf16.mxu0 0
        %919 = vmatpush1.bf16.xpose.msra.mxu0 0
        %920 = vmatprep.subr.bf16.mxu0 0
        %921 = vmatpush1.bf16.xpose.msra.mxu0 %v904
        %922 = vmatprep.subr.bf16.mxu0 0
        %923 = vmatpush2.bf16.xpose.msra.mxu0 0
        %924 = vmatprep.subr.bf16.mxu0 0
        %925 = vmatpush2.bf16.xpose.msra.mxu0 0
        %926 = vmatprep.subr.bf16.mxu0 0
        %927 = vmatpush2.bf16.xpose.msra.mxu0 0
        %928 = vmatprep.subr.bf16.mxu0 0
        %929 = vmatpush2.bf16.xpose.msra.mxu0 0
        %930 = vmatprep.subr.bf16.mxu0 0
        %931 = vmatpush2.bf16.xpose.msra.mxu0 0
        %932 = vmatprep.subr.bf16.mxu0 0
        %933 = vmatpush2.bf16.xpose.msra.mxu0 0
        %934 = vmatprep.subr.bf16.mxu0 0
        %935 = vmatpush2.bf16.xpose.msra.mxu0 0
        %936 = vmatprep.subr.bf16.mxu0 0
        %937 = vmatpush2.bf16.xpose.msra.mxu0 0
        %938 = vmatprep.mubr.bf16.mxu0 0
        %939 = vmatmul.mubr.bf16.gmra.mxu0 %v901
        %v940 = vpop.f32.mrf.mxu0
        %v941 = vadd.f32 0.0, %v940
        %v942 = vpop.f32.mrf.mxu0
        %v943 = vpop.f32.mrf.mxu0
        %v944 = vadd.f32 0.0, %v943
        %v945 = vpop.f32.mrf.mxu0
        %946 = vdwg.mxu0
        %v948 = vsel %vm899, %v875, 0
        %v951 = vsel %vm899, %v883, 0
        %953 = vmatprep.subr.bf16.mxu0 0
        %954 = vmatpush1.bf16.xpose.msra.mxu0 0
        %955 = vmatprep.subr.bf16.mxu0 0
        %956 = vmatpush1.bf16.xpose.msra.mxu0 0
        %957 = vmatprep.subr.bf16.mxu0 0
        %958 = vmatpush1.bf16.xpose.msra.mxu0 0
        %959 = vmatprep.subr.bf16.mxu0 0
        %960 = vmatpush1.bf16.xpose.msra.mxu0 0
        %961 = vmatprep.subr.bf16.mxu0 0
        %962 = vmatpush1.bf16.xpose.msra.mxu0 0
        %963 = vmatprep.subr.bf16.mxu0 0
        %964 = vmatpush1.bf16.xpose.msra.mxu0 0
        %965 = vmatprep.subr.bf16.mxu0 0
        %966 = vmatpush1.bf16.xpose.msra.mxu0 0
        %967 = vmatprep.subr.bf16.mxu0 0
        %968 = vmatpush1.bf16.xpose.msra.mxu0 %v951
        %969 = vmatprep.subr.bf16.mxu0 0
        %970 = vmatpush2.bf16.xpose.msra.mxu0 0
        %971 = vmatprep.subr.bf16.mxu0 0
        %972 = vmatpush2.bf16.xpose.msra.mxu0 0
        %973 = vmatprep.subr.bf16.mxu0 0
        %974 = vmatpush2.bf16.xpose.msra.mxu0 0
        %975 = vmatprep.subr.bf16.mxu0 0
        %976 = vmatpush2.bf16.xpose.msra.mxu0 0
        %977 = vmatprep.subr.bf16.mxu0 0
        %978 = vmatpush2.bf16.xpose.msra.mxu0 0
        %979 = vmatprep.subr.bf16.mxu0 0
        %980 = vmatpush2.bf16.xpose.msra.mxu0 0
        %981 = vmatprep.subr.bf16.mxu0 0
        %982 = vmatpush2.bf16.xpose.msra.mxu0 0
        %983 = vmatprep.subr.bf16.mxu0 0
        %984 = vmatpush2.bf16.xpose.msra.mxu0 0
        %985 = vmatprep.mubr.bf16.mxu0 0
        %986 = vmatmul.mubr.bf16.gmra.mxu0 %v948
        %v987 = vpop.f32.mrf.mxu0
        %v988 = vadd.f32 0.0, %v987
        %v989 = vpop.f32.mrf.mxu0
        %v990 = vpop.f32.mrf.mxu0
        %v991 = vadd.f32 0.0, %v990
        %v992 = vpop.f32.mrf.mxu0
        %993 = vdwg.mxu0
        %v995 = vsel %vm899, %v877, 0
        %v998 = vsel %vm899, %v885, 0
        %1000 = vmatprep.subr.bf16.mxu0 0
        %1001 = vmatpush1.bf16.xpose.msra.mxu0 0
        %1002 = vmatprep.subr.bf16.mxu0 0
        %1003 = vmatpush1.bf16.xpose.msra.mxu0 0
        %1004 = vmatprep.subr.bf16.mxu0 0
        %1005 = vmatpush1.bf16.xpose.msra.mxu0 0
        %1006 = vmatprep.subr.bf16.mxu0 0
        %1007 = vmatpush1.bf16.xpose.msra.mxu0 0
        %1008 = vmatprep.subr.bf16.mxu0 0
        %1009 = vmatpush1.bf16.xpose.msra.mxu0 0
        %1010 = vmatprep.subr.bf16.mxu0 0
        %1011 = vmatpush1.bf16.xpose.msra.mxu0 0
        %1012 = vmatprep.subr.bf16.mxu0 0
        %1013 = vmatpush1.bf16.xpose.msra.mxu0 0
        %1014 = vmatprep.subr.bf16.mxu0 0
        %1015 = vmatpush1.bf16.xpose.msra.mxu0 %v998
        %1016 = vmatprep.subr.bf16.mxu0 0
        %1017 = vmatpush2.bf16.xpose.msra.mxu0 0
        %1018 = vmatprep.subr.bf16.mxu0 0
        %1019 = vmatpush2.bf16.xpose.msra.mxu0 0
        %1020 = vmatprep.subr.bf16.mxu0 0
        %1021 = vmatpush2.bf16.xpose.msra.mxu0 0
        %1022 = vmatprep.subr.bf16.mxu0 0
        %1023 = vmatpush2.bf16.xpose.msra.mxu0 0
        %1024 = vmatprep.subr.bf16.mxu0 0
        %1025 = vmatpush2.bf16.xpose.msra.mxu0 0
        %1026 = vmatprep.subr.bf16.mxu0 0
        %1027 = vmatpush2.bf16.xpose.msra.mxu0 0
        %1028 = vmatprep.subr.bf16.mxu0 0
        %1029 = vmatpush2.bf16.xpose.msra.mxu0 0
        %1030 = vmatprep.subr.bf16.mxu0 0
        %1031 = vmatpush2.bf16.xpose.msra.mxu0 0
        %1032 = vmatprep.mubr.bf16.mxu0 0
        %1033 = vmatmul.mubr.bf16.gmra.mxu0 %v995
        %v1034 = vpop.f32.mrf.mxu0
        %v1035 = vadd.f32 0.0, %v1034
        %v1036 = vpop.f32.mrf.mxu0
        %v1037 = vpop.f32.mrf.mxu0
        %v1038 = vadd.f32 0.0, %v1037
        %v1039 = vpop.f32.mrf.mxu0
        %1040 = vdwg.mxu0
        %v1042 = vsel %vm899, %v879, 0
        %v1045 = vsel %vm899, %v887, 0
        %1047 = vmatprep.subr.bf16.mxu0 0
        %1048 = vmatpush1.bf16.xpose.msra.mxu0 0
        %1049 = vmatprep.subr.bf16.mxu0 0
        %1050 = vmatpush1.bf16.xpose.msra.mxu0 0
        %1051 = vmatprep.subr.bf16.mxu0 0
        %1052 = vmatpush1.bf16.xpose.msra.mxu0 0
        %1053 = vmatprep.subr.bf16.mxu0 0
        %1054 = vmatpush1.bf16.xpose.msra.mxu0 0
        %1055 = vmatprep.subr.bf16.mxu0 0
        %1056 = vmatpush1.bf16.xpose.msra.mxu0 0
        %1057 = vmatprep.subr.bf16.mxu0 0
        %1058 = vmatpush1.bf16.xpose.msra.mxu0 0
        %1059 = vmatprep.subr.bf16.mxu0 0
        %1060 = vmatpush1.bf16.xpose.msra.mxu0 0
        %1061 = vmatprep.subr.bf16.mxu0 0
        %1062 = vmatpush1.bf16.xpose.msra.mxu0 %v1045
        %1063 = vmatprep.subr.bf16.mxu0 0
        %1064 = vmatpush2.bf16.xpose.msra.mxu0 0
        %1065 = vmatprep.subr.bf16.mxu0 0
        %1066 = vmatpush2.bf16.xpose.msra.mxu0 0
        %1067 = vmatprep.subr.bf16.mxu0 0
        %1068 = vmatpush2.bf16.xpose.msra.mxu0 0
        %1069 = vmatprep.subr.bf16.mxu0 0
        %1070 = vmatpush2.bf16.xpose.msra.mxu0 0
        %1071 = vmatprep.subr.bf16.mxu0 0
        %1072 = vmatpush2.bf16.xpose.msra.mxu0 0
        %1073 = vmatprep.subr.bf16.mxu0 0
        %1074 = vmatpush2.bf16.xpose.msra.mxu0 0
        %1075 = vmatprep.subr.bf16.mxu0 0
        %1076 = vmatpush2.bf16.xpose.msra.mxu0 0
        %1077 = vmatprep.subr.bf16.mxu0 0
        %1078 = vmatpush2.bf16.xpose.msra.mxu0 0
        %1079 = vmatprep.mubr.bf16.mxu0 0
        %1080 = vmatmul.mubr.bf16.gmra.mxu0 %v1042
        %v1081 = vpop.f32.mrf.mxu0
        %v1082 = vadd.f32 0.0, %v1081
        %v1083 = vpop.f32.mrf.mxu0
        %v1084 = vpop.f32.mrf.mxu0
        %v1085 = vadd.f32 0.0, %v1084
        %v1086 = vpop.f32.mrf.mxu0
        %1087 = vdwg.mxu0
        %vm1088 = vcmask 130048
        %v1089 = vsel %vm1088, %v941, -inf
        %1090 = vmax.xlane.f32.xlu0 %v1089
        %v1091 = vpop.xlane.xlu0 %1090
        %v1092 = vsel %vm1088, %v944, -inf
        %1093 = vmax.xlane.f32.xlu0 %v1092
        %v1094 = vpop.xlane.xlu0 %1093
        %v1095 = vsel %vm1088, %v988, -inf
        %1096 = vmax.xlane.f32.xlu0 %v1095
        %v1097 = vpop.xlane.xlu0 %1096
        %v1098 = vsel %vm1088, %v991, -inf
        %1099 = vmax.xlane.f32.xlu0 %v1098
        %v1100 = vpop.xlane.xlu0 %1099
        %v1101 = vsel %vm1088, %v1035, -inf
        %1102 = vmax.xlane.f32.xlu0 %v1101
        %v1103 = vpop.xlane.xlu0 %1102
        %v1104 = vsel %vm1088, %v1038, -inf
        %1105 = vmax.xlane.f32.xlu0 %v1104
        %v1106 = vpop.xlane.xlu0 %1105
        %v1107 = vsel %vm1088, %v1082, -inf
        %1108 = vmax.xlane.f32.xlu0 %v1107
        %v1109 = vpop.xlane.xlu0 %1108
        %v1110 = vsel %vm1088, %v1085, -inf
        %1111 = vmax.xlane.f32.xlu0 %v1110
        %v1112 = vpop.xlane.xlu0 %1111
        %v1113 = vsub.f32 %v941, %v1091
        %v1114 = vsub.f32 %v944, %v1094
        %v1115 = vsub.f32 %v988, %v1097
        %v1116 = vsub.f32 %v991, %v1100
        %v1117 = vsub.f32 %v1035, %v1103
        %v1118 = vsub.f32 %v1038, %v1106
        %v1119 = vsub.f32 %v1082, %v1109
        %v1120 = vsub.f32 %v1085, %v1112
        %v1121 = vmul.f32 %v1113, 1.442695
        %v1122 = vpow.pop %v1121
        %v1123 = vmul.f32 %v1114, 1.442695
        %v1124 = vpow.pop %v1123
        %v1125 = vmul.f32 %v1115, 1.442695
        %v1126 = vpow.pop %v1125
        %v1127 = vmul.f32 %v1116, 1.442695
        %v1128 = vpow.pop %v1127
        %v1129 = vmul.f32 %v1117, 1.442695
        %v1130 = vpow.pop %v1129
        %v1131 = vmul.f32 %v1118, 1.442695
        %v1132 = vpow.pop %v1131
        %v1133 = vmul.f32 %v1119, 1.442695
        %v1134 = vpow.pop %v1133
        %v1135 = vmul.f32 %v1120, 1.442695
        %v1136 = vpow.pop %v1135
        %v1137 = vsel %vm1088, %v1122, 0.0
        %1138 = vadd.xlane.f32.xlu0 %v1137
        %v1139 = vpop.xlane.xlu0 %1138
        %v1140 = vsel %vm1088, %v1124, 0.0
        %1141 = vadd.xlane.f32.xlu0 %v1140
        %v1142 = vpop.xlane.xlu0 %1141
        %v1143 = vsel %vm1088, %v1126, 0.0
        %1144 = vadd.xlane.f32.xlu0 %v1143
        %v1145 = vpop.xlane.xlu0 %1144
        %v1146 = vsel %vm1088, %v1128, 0.0
        %1147 = vadd.xlane.f32.xlu0 %v1146
        %v1148 = vpop.xlane.xlu0 %1147
        %v1149 = vsel %vm1088, %v1130, 0.0
        %1150 = vadd.xlane.f32.xlu0 %v1149
        %v1151 = vpop.xlane.xlu0 %1150
        %v1152 = vsel %vm1088, %v1132, 0.0
        %1153 = vadd.xlane.f32.xlu0 %v1152
        %v1154 = vpop.xlane.xlu0 %1153
        %v1155 = vsel %vm1088, %v1134, 0.0
        %1156 = vadd.xlane.f32.xlu0 %v1155
        %v1157 = vpop.xlane.xlu0 %1156
        %v1158 = vsel %vm1088, %v1136, 0.0
        %1159 = vadd.xlane.f32.xlu0 %v1158
        %v1160 = vpop.xlane.xlu0 %1159
        %v1161 = vrcp.pop %v1139
        %v1162 = vrcp.pop %v1142
        %v1163 = vrcp.pop %v1145
        %v1164 = vrcp.pop %v1148
        %v1165 = vrcp.pop %v1151
        %v1166 = vrcp.pop %v1154
        %v1167 = vrcp.pop %v1157
        %v1168 = vrcp.pop %v1160
        %v1169 = vmul.f32 %v1122, %v1161
        %v1170 = vmul.f32 %v1124, %v1162
        %v1171 = vmul.f32 %v1126, %v1163
        %v1172 = vmul.f32 %v1128, %v1164
        %v1173 = vmul.f32 %v1130, %v1165
        %v1174 = vmul.f32 %v1132, %v1166
        %v1175 = vmul.f32 %v1134, %v1167
        %v1176 = vmul.f32 %v1136, %v1168
        %v1177 = vpack.c.bf16 %v1170, %v1169
        %v1178 = vpack.c.bf16 %v1172, %v1171
        %v1179 = vpack.c.bf16 %v1174, %v1173
        %v1180 = vpack.c.bf16 %v1176, %v1175
        %v1182 = vsel %vm1088, %v1177, 0
        %1184 = vmatprep.subr.bf16.mxu0 0
        %1185 = vmatpush1.bf16.msra.mxu0 0
        %1186 = vmatprep.subr.bf16.mxu0 0
        %1187 = vmatpush1.bf16.msra.mxu0 0
        %1188 = vmatprep.subr.bf16.mxu0 0
        %1189 = vmatpush1.bf16.msra.mxu0 0
        %1190 = vmatprep.subr.bf16.mxu0 0
        %1191 = vmatpush1.bf16.msra.mxu0 0
        %1192 = vmatprep.subr.bf16.mxu0 0
        %1193 = vmatpush1.bf16.msra.mxu0 0
        %1194 = vmatprep.subr.bf16.mxu0 0
        %1195 = vmatpush1.bf16.msra.mxu0 0
        %1196 = vmatprep.subr.bf16.mxu0 0
        %1197 = vmatpush1.bf16.msra.mxu0 0
        %1198 = vmatprep.subr.bf16.mxu0 0
        %1199 = vmatpush1.bf16.msra.mxu0 %v888
        %1200 = vmatprep.subr.bf16.mxu0 0
        %1201 = vmatpush2.bf16.msra.mxu0 0
        %1202 = vmatprep.subr.bf16.mxu0 0
        %1203 = vmatpush2.bf16.msra.mxu0 0
        %1204 = vmatprep.subr.bf16.mxu0 0
        %1205 = vmatpush2.bf16.msra.mxu0 0
        %1206 = vmatprep.subr.bf16.mxu0 0
        %1207 = vmatpush2.bf16.msra.mxu0 0
        %1208 = vmatprep.subr.bf16.mxu0 0
        %1209 = vmatpush2.bf16.msra.mxu0 0
        %1210 = vmatprep.subr.bf16.mxu0 0
        %1211 = vmatpush2.bf16.msra.mxu0 0
        %1212 = vmatprep.subr.bf16.mxu0 0
        %1213 = vmatpush2.bf16.msra.mxu0 0
        %1214 = vmatprep.subr.bf16.mxu0 0
        %1215 = vmatpush2.bf16.msra.mxu0 0
        %1216 = vmatprep.mubr.bf16.mxu0 0
        %1217 = vmatmul.mubr.bf16.gmra.mxu0 %v1182
        %v1218 = vpop.f32.mrf.mxu0
        %v1219 = vadd.f32 0.0, %v1218
        %v1220 = vpop.f32.mrf.mxu0
        %v1221 = vpop.f32.mrf.mxu0
        %v1222 = vadd.f32 0.0, %v1221
        %v1223 = vpop.f32.mrf.mxu0
        %1224 = vdwg.mxu0
        %v1226 = vsel %vm1088, %v1178, 0
        %1228 = vmatprep.subr.bf16.mxu0 0
        %1229 = vmatpush1.bf16.msra.mxu0 0
        %1230 = vmatprep.subr.bf16.mxu0 0
        %1231 = vmatpush1.bf16.msra.mxu0 0
        %1232 = vmatprep.subr.bf16.mxu0 0
        %1233 = vmatpush1.bf16.msra.mxu0 0
        %1234 = vmatprep.subr.bf16.mxu0 0
        %1235 = vmatpush1.bf16.msra.mxu0 0
        %1236 = vmatprep.subr.bf16.mxu0 0
        %1237 = vmatpush1.bf16.msra.mxu0 0
        %1238 = vmatprep.subr.bf16.mxu0 0
        %1239 = vmatpush1.bf16.msra.mxu0 0
        %1240 = vmatprep.subr.bf16.mxu0 0
        %1241 = vmatpush1.bf16.msra.mxu0 0
        %1242 = vmatprep.subr.bf16.mxu0 0
        %1243 = vmatpush1.bf16.msra.mxu0 %v891
        %1244 = vmatprep.subr.bf16.mxu0 0
        %1245 = vmatpush2.bf16.msra.mxu0 0
        %1246 = vmatprep.subr.bf16.mxu0 0
        %1247 = vmatpush2.bf16.msra.mxu0 0
        %1248 = vmatprep.subr.bf16.mxu0 0
        %1249 = vmatpush2.bf16.msra.mxu0 0
        %1250 = vmatprep.subr.bf16.mxu0 0
        %1251 = vmatpush2.bf16.msra.mxu0 0
        %1252 = vmatprep.subr.bf16.mxu0 0
        %1253 = vmatpush2.bf16.msra.mxu0 0
        %1254 = vmatprep.subr.bf16.mxu0 0
        %1255 = vmatpush2.bf16.msra.mxu0 0
        %1256 = vmatprep.subr.bf16.mxu0 0
        %1257 = vmatpush2.bf16.msra.mxu0 0
        %1258 = vmatprep.subr.bf16.mxu0 0
        %1259 = vmatpush2.bf16.msra.mxu0 0
        %1260 = vmatprep.mubr.bf16.mxu0 0
        %1261 = vmatmul.mubr.bf16.gmra.mxu0 %v1226
        %v1262 = vpop.f32.mrf.mxu0
        %v1263 = vadd.f32 0.0, %v1262
        %v1264 = vpop.f32.mrf.mxu0
        %v1265 = vpop.f32.mrf.mxu0
        %v1266 = vadd.f32 0.0, %v1265
        %v1267 = vpop.f32.mrf.mxu0
        %1268 = vdwg.mxu0
        %v1270 = vsel %vm1088, %v1179, 0
        %1272 = vmatprep.subr.bf16.mxu0 0
        %1273 = vmatpush1.bf16.msra.mxu0 0
        %1274 = vmatprep.subr.bf16.mxu0 0
        %1275 = vmatpush1.bf16.msra.mxu0 0
        %1276 = vmatprep.subr.bf16.mxu0 0
        %1277 = vmatpush1.bf16.msra.mxu0 0
        %1278 = vmatprep.subr.bf16.mxu0 0
        %1279 = vmatpush1.bf16.msra.mxu0 0
        %1280 = vmatprep.subr.bf16.mxu0 0
        %1281 = vmatpush1.bf16.msra.mxu0 0
        %1282 = vmatprep.subr.bf16.mxu0 0
        %1283 = vmatpush1.bf16.msra.mxu0 0
        %1284 = vmatprep.subr.bf16.mxu0 0
        %1285 = vmatpush1.bf16.msra.mxu0 0
        %1286 = vmatprep.subr.bf16.mxu0 0
        %1287 = vmatpush1.bf16.msra.mxu0 %v894
        %1288 = vmatprep.subr.bf16.mxu0 0
        %1289 = vmatpush2.bf16.msra.mxu0 0
        %1290 = vmatprep.subr.bf16.mxu0 0
        %1291 = vmatpush2.bf16.msra.mxu0 0
        %1292 = vmatprep.subr.bf16.mxu0 0
        %1293 = vmatpush2.bf16.msra.mxu0 0
        %1294 = vmatprep.subr.bf16.mxu0 0
        %1295 = vmatpush2.bf16.msra.mxu0 0
        %1296 = vmatprep.subr.bf16.mxu0 0
        %1297 = vmatpush2.bf16.msra.mxu0 0
        %1298 = vmatprep.subr.bf16.mxu0 0
        %1299 = vmatpush2.bf16.msra.mxu0 0
        %1300 = vmatprep.subr.bf16.mxu0 0
        %1301 = vmatpush2.bf16.msra.mxu0 0
        %1302 = vmatprep.subr.bf16.mxu0 0
        %1303 = vmatpush2.bf16.msra.mxu0 0
        %1304 = vmatprep.mubr.bf16.mxu0 0
        %1305 = vmatmul.mubr.bf16.gmra.mxu0 %v1270
        %v1306 = vpop.f32.mrf.mxu0
        %v1307 = vadd.f32 0.0, %v1306
        %v1308 = vpop.f32.mrf.mxu0
        %v1309 = vpop.f32.mrf.mxu0
        %v1310 = vadd.f32 0.0, %v1309
        %v1311 = vpop.f32.mrf.mxu0
        %1312 = vdwg.mxu0
        %v1314 = vsel %vm1088, %v1180, 0
        %1316 = vmatprep.subr.bf16.mxu0 0
        %1317 = vmatpush1.bf16.msra.mxu0 0
        %1318 = vmatprep.subr.bf16.mxu0 0
        %1319 = vmatpush1.bf16.msra.mxu0 0
        %1320 = vmatprep.subr.bf16.mxu0 0
        %1321 = vmatpush1.bf16.msra.mxu0 0
        %1322 = vmatprep.subr.bf16.mxu0 0
        %1323 = vmatpush1.bf16.msra.mxu0 0
        %1324 = vmatprep.subr.bf16.mxu0 0
        %1325 = vmatpush1.bf16.msra.mxu0 0
        %1326 = vmatprep.subr.bf16.mxu0 0
        %1327 = vmatpush1.bf16.msra.mxu0 0
        %1328 = vmatprep.subr.bf16.mxu0 0
        %1329 = vmatpush1.bf16.msra.mxu0 0
        %1330 = vmatprep.subr.bf16.mxu0 0
        %1331 = vmatpush1.bf16.msra.mxu0 %v897
        %1332 = vmatprep.subr.bf16.mxu0 0
        %1333 = vmatpush2.bf16.msra.mxu0 0
        %1334 = vmatprep.subr.bf16.mxu0 0
        %1335 = vmatpush2.bf16.msra.mxu0 0
        %1336 = vmatprep.subr.bf16.mxu0 0
        %1337 = vmatpush2.bf16.msra.mxu0 0
        %1338 = vmatprep.subr.bf16.mxu0 0
        %1339 = vmatpush2.bf16.msra.mxu0 0
        %1340 = vmatprep.subr.bf16.mxu0 0
        %1341 = vmatpush2.bf16.msra.mxu0 0
        %1342 = vmatprep.subr.bf16.mxu0 0
        %1343 = vmatpush2.bf16.msra.mxu0 0
        %1344 = vmatprep.subr.bf16.mxu0 0
        %1345 = vmatpush2.bf16.msra.mxu0 0
        %1346 = vmatprep.subr.bf16.mxu0 0
        %1347 = vmatpush2.bf16.msra.mxu0 0
        %1348 = vmatprep.mubr.bf16.mxu0 0
        %1349 = vmatmul.mubr.bf16.gmra.mxu0 %v1314
        %v1350 = vpop.f32.mrf.mxu0
        %v1351 = vadd.f32 0.0, %v1350
        %v1352 = vpop.f32.mrf.mxu0
        %v1353 = vpop.f32.mrf.mxu0
        %v1354 = vadd.f32 0.0, %v1353
        %v1355 = vpop.f32.mrf.mxu0
        %1356 = vdwg.mxu0
        %1359 = vrot.lane.b32.xlu0 %v1263, 8
        %v1360 = vpop.permute.xlu0 %1359
        %1361 = vrot.lane.b32.xlu0 %v1266, 8
        %v1362 = vpop.permute.xlu0 %1361
        %1367 = vrot.lane.b32.xlu0 %v1307, 16
        %v1368 = vpop.permute.xlu0 %1367
        %1369 = vrot.lane.b32.xlu0 %v1310, 16
        %v1370 = vpop.permute.xlu0 %1369
        %1375 = vrot.lane.b32.xlu0 %v1351, 24
        %v1376 = vpop.permute.xlu0 %1375
        %1377 = vrot.lane.b32.xlu0 %v1354, 24
        %v1378 = vpop.permute.xlu0 %1377
        %v1381 = vsel %vm899, %v1219, %v1360
        %v1382 = vsel %vm899, %v1222, %v1362
        %v1383 = vsel %vm1088, %v1381, %v1368
        %v1384 = vsel %vm1088, %v1382, %v1370
        %vm1385 = vcmask 195584
        %v1386 = vsel %vm1385, %v1383, %v1376
        %v1387 = vsel %vm1385, %v1384, %v1378
        %v1388 = vpack.c.bf16 %v1387, %v1386
        %v1389 = vld [vmem:[%s9] sm:$0xf]
        %v1390 = vld [vmem:[%s9 + $0x4] sm:$0xf]
        %v1391 = vld [vmem:[%s9 + $0x8] sm:$0xf]
        %v1392 = vld [vmem:[%s9 + $0xc] sm:$0xf]
        %v1393 = vld [vmem:[%s10] sm:$0x1]
        %v1395 = vlaneseq
        %v1396 = vshrl.u32 %v1395, 7
        %v1397 = vsub.s32 0, %v1396
        %v1398 = vrot.slane %v1393, %v1397
        %v1404 = vunpack.c.l.b16 %v1389
        %v1405 = vunpack.c.l.b16 %v1390
        %v1406 = vunpack.c.l.b16 %v1391
        %v1407 = vunpack.c.l.b16 %v1392
        %v1408 = vpack.c.b16 %v1405, %v1404
        %v1409 = vpack.c.b16 %v1407, %v1406
        %v1413 = vsel %vm630, %v1388, 0
        %1415 = vmatprep.subr.bf16.mxu0 0
        %1416 = vmatpush1.bf16.msra.mxu0 0
        %1417 = vmatprep.subr.bf16.mxu0 0
        %1418 = vmatpush1.bf16.msra.mxu0 0
        %1419 = vmatprep.subr.bf16.mxu0 0
        %1420 = vmatpush1.bf16.msra.mxu0 0
        %1421 = vmatprep.subr.bf16.mxu0 0
        %1422 = vmatpush1.bf16.msra.mxu0 0
        %1423 = vmatprep.subr.bf16.mxu0 0
        %1424 = vmatpush1.bf16.msra.mxu0 0
        %1425 = vmatprep.subr.bf16.mxu0 0
        %1426 = vmatpush1.bf16.msra.mxu0 0
        %1427 = vmatprep.subr.bf16.mxu0 0
        %1428 = vmatpush1.bf16.msra.mxu0 %v1409
        %1429 = vmatprep.subr.bf16.mxu0 0
        %1430 = vmatpush1.bf16.msra.mxu0 %v1408
        %1431 = vmatprep.subr.bf16.mxu0 0
        %1432 = vmatpush2.bf16.msra.mxu0 0
        %1433 = vmatprep.subr.bf16.mxu0 0
        %1434 = vmatpush2.bf16.msra.mxu0 0
        %1435 = vmatprep.subr.bf16.mxu0 0
        %1436 = vmatpush2.bf16.msra.mxu0 0
        %1437 = vmatprep.subr.bf16.mxu0 0
        %1438 = vmatpush2.bf16.msra.mxu0 0
        %1439 = vmatprep.subr.bf16.mxu0 0
        %1440 = vmatpush2.bf16.msra.mxu0 0
        %1441 = vmatprep.subr.bf16.mxu0 0
        %1442 = vmatpush2.bf16.msra.mxu0 0
        %1443 = vmatprep.subr.bf16.mxu0 0
        %1444 = vmatpush2.bf16.msra.mxu0 0
        %1445 = vmatprep.subr.bf16.mxu0 0
        %1446 = vmatpush2.bf16.msra.mxu0 0
        %1447 = vmatprep.mubr.bf16.mxu0 0
        %1448 = vmatmul.mubr.bf16.gmra.mxu0 %v1413
        %v1449 = vpop.f32.mrf.mxu0
        %v1450 = vadd.f32 %v1398, %v1449
        %v1451 = vpop.f32.mrf.mxu0
        %v1452 = vpop.f32.mrf.mxu0
        %v1453 = vadd.f32 %v1398, %v1452
        %v1454 = vpop.f32.mrf.mxu0
        %1455 = vdwg.mxu0
        %v1456 = vadd.f32 %v626, %v1450
        %v1457 = vadd.f32 %v627, %v1453
        %v1458 = vld [vmem:[%s11] sm:$0x1]
        %v1459 = vld [vmem:[%s12] sm:$0x1]
        %v1460 = vsel %vm630, %v1456, 0.0
        %1461 = vadd.xlane.f32.xlu0 %v1460
        %v1462 = vpop.xlane.xlu0 %1461
        %v1463 = vsel %vm630, %v1457, 0.0
        %1464 = vadd.xlane.f32.xlu0 %v1463
        %v1465 = vpop.xlane.xlu0 %1464
        %v1466 = vmul.f32 %v1462, %v637
        %v1467 = vmul.f32 %v1465, %v637
        %v1468 = vsub.f32 %v1456, %v1466
        %v1469 = vsub.f32 %v1457, %v1467
        %v1470 = vmul.f32 %v1468, %v1468
        %v1471 = vmul.f32 %v1469, %v1469
        %v1472 = vsel %vm630, %v1470, 0.0
        %1473 = vadd.xlane.f32.xlu0 %v1472
        %v1474 = vpop.xlane.xlu0 %1473
        %v1475 = vsel %vm630, %v1471, 0.0
        %1476 = vadd.xlane.f32.xlu0 %v1475
        %v1477 = vpop.xlane.xlu0 %1476
        %v1478 = vmul.f32 %v1474, %v637
        %v1479 = vmul.f32 %v1477, %v637
        %v1480 = vadd.f32 %v1478, 1e-05
        %v1481 = vadd.f32 %v1479, 1e-05
        %v1482 = vrsqrt.pop %v1480
        %v1483 = vrsqrt.pop %v1481
        %v1484 = vmul.f32 %v1468, %v1482
        %v1485 = vmul.f32 %v1469, %v1483
        %v1487 = vlaneseq
        %v1488 = vshrl.u32 %v1487, 7
        %v1489 = vsub.s32 0, %v1488
        %v1490 = vrot.slane %v1458, %v1489
        %v1492 = vmul.f32 %v1484, %v1490
        %v1493 = vmul.f32 %v1485, %v1490
        %v1495 = vlaneseq
        %v1496 = vshrl.u32 %v1495, 7
        %v1497 = vsub.s32 0, %v1496
        %v1498 = vrot.slane %v1459, %v1497
        %v1500 = vadd.f32 %v1492, %v1498
        %v1501 = vadd.f32 %v1493, %v1498
        %v1502 = vpack.c.bf16 %v1501, %v1500
        %v1503 = vld [vmem:[#allocation11] sm:$0xf]
        %v1504 = vld [vmem:[#allocation11 + $0x4] sm:$0xf]
        %v1505 = vld [vmem:[#allocation11 + $0x8] sm:$0xf]
        %v1506 = vld [vmem:[#allocation11 + $0xc] sm:$0xf]
        %v1507 = vld [vmem:[%s14] sm:$0x1]
        %v1509 = vlaneseq
        %v1510 = vshrl.u32 %v1509, 7
        %v1511 = vsub.s32 0, %v1510
        %v1512 = vrot.slane %v1507, %v1511
        %v1518 = vunpack.c.l.b16 %v1503
        %v1519 = vunpack.c.l.b16 %v1504
        %v1520 = vunpack.c.l.b16 %v1505
        %v1521 = vunpack.c.l.b16 %v1506
        %v1522 = vpack.c.b16 %v1519, %v1518
        %v1523 = vpack.c.b16 %v1521, %v1520
        %v1527 = vsel %vm630, %v1502, 0
        %1529 = vmatprep.subr.bf16.mxu0 0
        %1530 = vmatpush1.bf16.msra.mxu0 0
        %1531 = vmatprep.subr.bf16.mxu0 0
        %1532 = vmatpush1.bf16.msra.mxu0 0
        %1533 = vmatprep.subr.bf16.mxu0 0
        %1534 = vmatpush1.bf16.msra.mxu0 0
        %1535 = vmatprep.subr.bf16.mxu0 0
        %1536 = vmatpush1.bf16.msra.mxu0 0
        %1537 = vmatprep.subr.bf16.mxu0 0
        %1538 = vmatpush1.bf16.msra.mxu0 0
        %1539 = vmatprep.subr.bf16.mxu0 0
        %1540 = vmatpush1.bf16.msra.mxu0 0
        %1541 = vmatprep.subr.bf16.mxu0 0
        %1542 = vmatpush1.bf16.msra.mxu0 %v1523
        %1543 = vmatprep.subr.bf16.mxu0 0
        %1544 = vmatpush1.bf16.msra.mxu0 %v1522
        %1545 = vmatprep.subr.bf16.mxu0 0
        %1546 = vmatpush2.bf16.msra.mxu0 0
        %1547 = vmatprep.subr.bf16.mxu0 0
        %1548 = vmatpush2.bf16.msra.mxu0 0
        %1549 = vmatprep.subr.bf16.mxu0 0
        %1550 = vmatpush2.bf16.msra.mxu0 0
        %1551 = vmatprep.subr.bf16.mxu0 0
        %1552 = vmatpush2.bf16.msra.mxu0 0
        %1553 = vmatprep.subr.bf16.mxu0 0
        %1554 = vmatpush2.bf16.msra.mxu0 0
        %1555 = vmatprep.subr.bf16.mxu0 0
        %1556 = vmatpush2.bf16.msra.mxu0 0
        %1557 = vmatprep.subr.bf16.mxu0 0
        %1558 = vmatpush2.bf16.msra.mxu0 0
        %1559 = vmatprep.subr.bf16.mxu0 0
        %1560 = vmatpush2.bf16.msra.mxu0 0
        %1561 = vmatprep.mubr.bf16.mxu0 0
        %1562 = vmatmul.mubr.bf16.gmra.mxu0 %v1527
        %v1563 = vpop.f32.mrf.mxu0
        %v1564 = vadd.f32 %v1512, %v1563
        %v1565 = vpop.f32.mrf.mxu0
        %v1566 = vpop.f32.mrf.mxu0
        %v1567 = vadd.f32 %v1512, %v1566
        %v1568 = vpop.f32.mrf.mxu0
        %1569 = vdwg.mxu0
        %v1570 = vmax.f32 %v1564, 0.0
        %v1571 = vmax.f32 %v1567, 0.0
        %v1572 = vpack.c.bf16 %v1571, %v1570
        %v1573 = vld [vmem:[%s15] sm:$0xf]
        %v1574 = vld [vmem:[%s15 + $0x4] sm:$0xf]
        %v1575 = vld [vmem:[%s15 + $0x8] sm:$0xf]
        %v1576 = vld [vmem:[%s15 + $0xc] sm:$0xf]
        %v1577 = vld [vmem:[%s15 + $0x10] sm:$0xf]
        %v1578 = vld [vmem:[%s15 + $0x14] sm:$0xf]
        %v1579 = vld [vmem:[%s15 + $0x18] sm:$0xf]
        %v1580 = vld [vmem:[%s15 + $0x1c] sm:$0xf]
        %v1581 = vld [vmem:[%s15 + $0x20] sm:$0xf]
        %v1582 = vld [vmem:[%s15 + $0x24] sm:$0xf]
        %v1583 = vld [vmem:[%s15 + $0x28] sm:$0xf]
        %v1584 = vld [vmem:[%s15 + $0x2c] sm:$0xf]
        %v1585 = vld [vmem:[%s15 + $0x30] sm:$0xf]
        %v1586 = vld [vmem:[%s15 + $0x34] sm:$0xf]
        %v1587 = vld [vmem:[%s15 + $0x38] sm:$0xf]
        %v1588 = vld [vmem:[%s15 + $0x3c] sm:$0xf]
        %v1589 = vld [vmem:[%s16] sm:$0x1]
        %v1591 = vlaneseq
        %v1592 = vshrl.u32 %v1591, 7
        %v1593 = vsub.s32 0, %v1592
        %v1594 = vrot.slane %v1589, %v1593
        %v1612 = vunpack.c.l.b16 %v1573
        %v1613 = vunpack.c.l.b16 %v1574
        %v1614 = vunpack.c.l.b16 %v1575
        %v1615 = vunpack.c.l.b16 %v1576
        %v1616 = vunpack.c.l.b16 %v1577
        %v1617 = vunpack.c.l.b16 %v1578
        %v1618 = vunpack.c.l.b16 %v1579
        %v1619 = vunpack.c.l.b16 %v1580
        %v1620 = vunpack.c.l.b16 %v1581
        %v1621 = vunpack.c.l.b16 %v1582
        %v1622 = vunpack.c.l.b16 %v1583
        %v1623 = vunpack.c.l.b16 %v1584
        %v1624 = vunpack.c.l.b16 %v1585
        %v1625 = vunpack.c.l.b16 %v1586
        %v1626 = vunpack.c.l.b16 %v1587
        %v1627 = vunpack.c.l.b16 %v1588
        %v1628 = vpack.c.b16 %v1613, %v1612
        %v1629 = vpack.c.b16 %v1615, %v1614
        %v1630 = vpack.c.b16 %v1617, %v1616
        %v1631 = vpack.c.b16 %v1619, %v1618
        %v1632 = vpack.c.b16 %v1621, %v1620
        %v1633 = vpack.c.b16 %v1623, %v1622
        %v1634 = vpack.c.b16 %v1625, %v1624
        %v1635 = vpack.c.b16 %v1627, %v1626
        %1644 = vmatprep.subr.bf16.mxu0 0
        %1645 = vmatpush1.bf16.msra.mxu0 %v1635
        %1646 = vmatprep.subr.bf16.mxu0 0
        %1647 = vmatpush1.bf16.msra.mxu0 %v1634
        %1648 = vmatprep.subr.bf16.mxu0 0
        %1649 = vmatpush1.bf16.msra.mxu0 %v1633
        %1650 = vmatprep.subr.bf16.mxu0 0
        %1651 = vmatpush1.bf16.msra.mxu0 %v1632
        %1652 = vmatprep.subr.bf16.mxu0 0
        %1653 = vmatpush1.bf16.msra.mxu0 %v1631
        %1654 = vmatprep.subr.bf16.mxu0 0
        %1655 = vmatpush1.bf16.msra.mxu0 %v1630
        %1656 = vmatprep.subr.bf16.mxu0 0
        %1657 = vmatpush1.bf16.msra.mxu0 %v1629
        %1658 = vmatprep.subr.bf16.mxu0 0
        %1659 = vmatpush1.bf16.msra.mxu0 %v1628
        %1660 = vmatprep.subr.bf16.mxu0 0
        %1661 = vmatpush2.bf16.msra.mxu0 0
        %1662 = vmatprep.subr.bf16.mxu0 0
        %1663 = vmatpush2.bf16.msra.mxu0 0
        %1664 = vmatprep.subr.bf16.mxu0 0
        %1665 = vmatpush2.bf16.msra.mxu0 0
        %1666 = vmatprep.subr.bf16.mxu0 0
        %1667 = vmatpush2.bf16.msra.mxu0 0
        %1668 = vmatprep.subr.bf16.mxu0 0
        %1669 = vmatpush2.bf16.msra.mxu0 0
        %1670 = vmatprep.subr.bf16.mxu0 0
        %1671 = vmatpush2.bf16.msra.mxu0 0
        %1672 = vmatprep.subr.bf16.mxu0 0
        %1673 = vmatpush2.bf16.msra.mxu0 0
        %1674 = vmatprep.subr.bf16.mxu0 0
        %1675 = vmatpush2.bf16.msra.mxu0 0
        %1676 = vmatprep.mubr.bf16.mxu0 0
        %1677 = vmatmul.mubr.bf16.gmra.mxu0 %v1572
        %v1678 = vpop.f32.mrf.mxu0
        %v1679 = vadd.f32 %v1594, %v1678
        %v1680 = vpop.f32.mrf.mxu0
        %v1681 = vpop.f32.mrf.mxu0
        %v1682 = vadd.f32 %v1594, %v1681
        %v1683 = vpop.f32.mrf.mxu0
        %1684 = vdwg.mxu0
        %v1685 = vadd.f32 %v1456, %v1679
        %v1686 = vadd.f32 %v1457, %v1682
        %1687 = vst.msk [vmem:[%s619] sm:$0xff] %vm630, %v1685
        %1688 = vst.msk [vmem:[%s619 + $0x8] sm:$0xff] %vm630, %v1686
        %s1689 = sand.u32 %s405, 1
        %s1690 = scalar_lea.sflag [#allocation4], %s1689
        %s1691 = sand.u32 %s405, 1
        %s1692 = smul.addr %s1691, 16
        %s1693 = scalar_lea.vmem [#allocation13], %s1692
        // Predicated region
        $region113: #{tpu_custom_call.1} parent=87 // pred_check
          %p1694 = pneg %p415
        $region114: #{tpu_custom_call.1} parent=87 // pred_check_branch
          %1696 = sbr.rel (%p1694) target = $region116
        $region115: #{tpu_custom_call.1} parent=87 // pred_region
          %s1698 = ssub.s32 256, 256
          %1699 = vsyncadd %s1690, %s1698
          %s1700 = smul.addr %s35, 2
          %s1701 = smul.addr %s1700, 128
          %s1702 = scalar_lea.hbm %s17, %s1701
          %s1703 = sshll.u32 %s1693, 4
          %s1704 = int_to_ptr.vmem [resolvable:$true] %s1703
          %1709 = dma.vmem_to_hbm [thread:$0]  %s1704, 256, %s1702, %s1690, 128, 128, 8
        $region116: #{tpu_custom_call.1} parent=87 // pred_fallthru
          _
      $region88: #{tpu_custom_call.1} parent=5 // pred_fallthru
        _
      %p1710 = scmp.le.s32.totalorder 2, %s30
      // Predicated region
      $region117: #{tpu_custom_call.1} parent=5 // pred_check
        %p1711 = pneg %p1710
      $region118: #{tpu_custom_call.1} parent=5 // pred_check_branch
        %1713 = sbr.rel (%p1711) target = $region120
      $region119: #{tpu_custom_call.1} parent=5 // pred_region
        %s1714 = ssub.s32 %s30, 2
        // Predicated region
        $region121: #{tpu_custom_call.1} parent=119 // pred_check
          %p1715 = pneg %p421
        $region122: #{tpu_custom_call.1} parent=119 // pred_check_branch
          %1717 = sbr.rel (%p1715) target = $region124
        $region123: #{tpu_custom_call.1} parent=119 // pred_region
          %s1718 = sand.u32 %s406, 1
          %s1719 = scalar_lea.sflag [#allocation4], %s1718
          %s1720 = sand.u32 %s406, 1
          %s1721 = smul.addr %s1720, 16
          %s1722 = scalar_lea.vmem [#allocation13], %s1721
          %1723 = dma.done %s1719, 256
        $region124: #{tpu_custom_call.1} parent=119 // pred_fallthru
          _
      $region120: #{tpu_custom_call.1} parent=5 // pred_fallthru
        _
    $region6: #{tpu_custom_call.1} parent=1 // loop_footer
      %s34 = sadd.s32 1, %s30
    $region7: #{tpu_custom_call.1} parent=1 // loop_footer_branch
      %29 = sbr.rel target = $region3
    $region8: #{tpu_custom_call.1} parent=1 // loop_exit
      _
    %1724 = vsyncpa [#allocation3], 1
    %s1725 = scalar_lea.sflag [#allocation3], 1
    %1726 = vsyncpa %s1725, 1
    %1727 = vsyncpa [#allocation6], 1
    %1728 = vsyncpa [#allocation9], 1
    %1729 = vsyncpa [#allocation12], 1
    %1730 = vsyncpa [#allocation4], 1
    %s1731 = scalar_lea.sflag [#allocation4], 1
    %1732 = vsyncpa %s1731, 1

// kernel: tpu_custom_call.1
$region0: #{tpu_custom_call.1}
  #allocation0 [shape = 'u32[]', space=smem, size = 0x4, offset = 0x4, fixed_abs, tag = 'smem constant byte address 0x4 - core index']
  #allocation1 [shape = 'u32[144,128]{1,0:T(1,128)}', space=vmem, size = 0x12000, scoped, tag = 'internal scratch']
  %s0 = inlined_call_operand.vmem [shape: f32[2,16,32], index: 0, kind: input, shape index: {}]
  %s1 = inlined_call_operand.hbm [shape: f32[1,32], index: 1, kind: input, shape index: {}]
  %s2 = inlined_call_operand.hbm [shape: f32[1,32], index: 2, kind: input, shape index: {}]
  %s3 = inlined_call_operand.vmem [shape: bf16[32,32], index: 3, kind: input, shape index: {}]
  %s4 = inlined_call_operand.vmem [shape: bf16[32,32], index: 4, kind: input, shape index: {}]
  %s5 = inlined_call_operand.vmem [shape: bf16[32,32], index: 5, kind: input, shape index: {}]
  %s6 = inlined_call_operand.hbm [shape: f32[1,32], index: 6, kind: input, shape index: {}]
  %s7 = inlined_call_operand.hbm [shape: f32[1,32], index: 7, kind: input, shape index: {}]
  %s8 = inlined_call_operand.hbm [shape: f32[1,32], index: 8, kind: input, shape index: {}]
  %s9 = inlined_call_operand.vmem [shape: bf16[32,32], index: 9, kind: input, shape index: {}]
  %s10 = inlined_call_operand.vmem [shape: f32[1,32], index: 10, kind: input, shape index: {}]
  %s11 = inlined_call_operand.vmem [shape: f32[1,32], index: 11, kind: input, shape index: {}]
  %s12 = inlined_call_operand.vmem [shape: f32[1,32], index: 12, kind: input, shape index: {}]
  %s13 = inlined_call_operand.hbm [shape: bf16[32,128], index: 13, kind: input, shape index: {}]
  %s14 = inlined_call_operand.vmem [shape: f32[1,128], index: 14, kind: input, shape index: {}]
  %s15 = inlined_call_operand.vmem [shape: bf16[128,32], index: 15, kind: input, shape index: {}]
  %s16 = inlined_call_operand.vmem [shape: f32[1,32], index: 16, kind: input, shape index: {}]
  %s17 = inlined_call_operand.hbm [shape: f32[2,16,32], index: 17, kind: output, shape index: {}]
  %s18 = sld [smem:[#allocation0]]
  $region125: #{tpu_custom_call.1} parent=0
    _
  %s20 = ssub.s32 1, %s18
  %s21 = scalar_select 0, %s20, %s18
  $region1: #{tpu_custom_call.1} parent=0
    #allocation2 [shape = 'u8[512]{0}', space=vmem, size = 0x400, scoped, tag = 'input window, operand 1, single buffered']
    #allocation3 [shape = 's32[2]{0}', space=sflag, size = 0x8, scoped, tag = 'scoped memory for tpu_custom_call.1']
    #allocation4 [shape = 's32[2]{0}', space=sflag, size = 0x8, scoped, tag = 'scoped memory for tpu_custom_call.1']
    #allocation5 [shape = 'u8[512]{0}', space=vmem, size = 0x400, scoped, tag = 'input window, operand 2, single buffered']
    #allocation6 [shape = 's32[1]{0}', space=sflag, size = 0x4, scoped, tag = 'scoped memory for tpu_custom_call.1']
    #allocation7 [shape = 'u8[512]{0}', space=vmem, size = 0x400, scoped, tag = 'input window, operand 6, single buffered']
    #allocation8 [shape = 'u8[512]{0}', space=vmem, size = 0x400, scoped, tag = 'input window, operand 7, single buffered']
    #allocation9 [shape = 's32[1]{0}', space=sflag, size = 0x4, scoped, tag = 'scoped memory for tpu_custom_call.1']
    #allocation10 [shape = 'u8[512]{0}', space=vmem, size = 0x400, scoped, tag = 'input window, operand 8, single buffered']
    #allocation11 [shape = 'u8[8192]{0}', space=vmem, size = 0x2000, scoped, tag = 'input window, operand 13, single buffered']
    #allocation12 [shape = 's32[1]{0}', space=sflag, size = 0x4, scoped, tag = 'scoped memory for tpu_custom_call.1']
    #allocation13 [shape = 'u8[16384]{0}', space=vmem, size = 0x4000, scoped, tag = 'output window, operand 0']
    %22 = vsyncpa [#allocation3], 0
    %23 = vsyncpa [#allocation6], 0
    %24 = vsyncpa [#allocation9], 0
    %25 = vsyncpa [#allocation12], 0
    %26 = vsyncpa [#allocation4], 0
    %s27 = scalar_lea.sflag [#allocation4], 1
    %28 = vsyncpa %s27, 0
    loop: start=0, step=1, limit=4
    $region2: #{tpu_custom_call.1} parent=1 // loop_pre_header
      _
    $region3: #{tpu_custom_call.1} parent=1 // loop_header
      %s30 = sphi 0, %s34
      %p31 = scmp.ge.s32.totalorder %s30, 4
      %s40 = sphi 0, %s42
      %s43 = sphi 0, %s40
      %s44 = sphi 0, %s43
      %s60 = sphi 0, %s44
      %s64 = sphi 0, %s64
      %s66 = sphi 0, %s64
      %s67 = sphi 0, %s66
      %s81 = sphi 0, %s67
      %s85 = sphi 0, %s85
      %s87 = sphi 0, %s85
      %s88 = sphi 0, %s87
      %s102 = sphi 0, %s88
      %s106 = sphi 0, %s106
      %s108 = sphi 0, %s106
      %s109 = sphi 0, %s108
      %s123 = sphi 0, %s109
      %s127 = sphi 0, %s127
      %s129 = sphi 0, %s127
      %s130 = sphi 0, %s129
      %s144 = sphi 0, %s130
      %s148 = sphi 0, %s148
      %s150 = sphi 0, %s148
      %s151 = sphi 0, %s150
      %s165 = sphi 0, %s151
      %s169 = sphi 0, %s169
      %s171 = sphi 0, %s169
      %s172 = sphi 0, %s171
      %s186 = sphi 0, %s172
      %s190 = sphi 0, %s190
      %s192 = sphi 0, %s190
      %s193 = sphi 0, %s192
      %s207 = sphi 0, %s193
      %s211 = sphi 0, %s211
      %s213 = sphi 0, %s211
      %s214 = sphi 0, %s213
      %s228 = sphi 0, %s214
      %s232 = sphi 0, %s232
      %s234 = sphi 0, %s232
      %s235 = sphi 0, %s234
      %s249 = sphi 0, %s235
      %s253 = sphi 0, %s253
      %s255 = sphi 0, %s253
      %s256 = sphi 0, %s255
      %s270 = sphi 0, %s256
      %s274 = sphi 0, %s274
      %s276 = sphi 0, %s274
      %s277 = sphi 0, %s276
      %s291 = sphi 0, %s277
      %s295 = sphi 0, %s295
      %s297 = sphi 0, %s295
      %s298 = sphi 0, %s297
      %s312 = sphi 0, %s298
      %s316 = sphi 0, %s316
      %s318 = sphi 0, %s316
      %s319 = sphi 0, %s318
      %s333 = sphi 0, %s319
      %s337 = sphi 0, %s337
      %s339 = sphi 0, %s337
      %s340 = sphi 0, %s339
      %s354 = sphi 0, %s340
      %s358 = sphi 0, %s358
      %s360 = sphi 0, %s358
      %s361 = sphi 0, %s360
      %s375 = sphi 0, %s361
      %s379 = sphi 0, %s379
      %s381 = sphi 0, %s379
      %s382 = sphi 0, %s381
      %s396 = sphi 0, %s382
      %s402 = sphi 0, %s404
      %s405 = sphi 0, %s402
      %s406 = sphi 0, %s405
      %s422 = sphi 0, %s406
    $region4: #{tpu_custom_call.1} parent=1 // loop_header_branch
      %33 = sbr.rel (%p31) target = $region8
    $region5: #{tpu_custom_call.1} parent=1 // loop_body
      %s35 = ssub.s32 %s30, 1
      %s36 = ssub.s32 %s30, 2
      %s37 = sadd.s32 %s30, 1
      %s38 = ssub.s32 %s30, %s37
      %p39 = scmp.eq.s32.totalorder %s38, 0
      %s41 = sadd.s32 %s40, 1
      %s42 = scalar_select %p39, %s40, %s41
      %p45 = pneg %p39
      %p46 = scmp.eq.s32.totalorder %s30, 1
      %p47 = por %p45, %p46
      %p48 = scmp.ne.s32.totalorder %s40, %s43
      %p49 = scmp.eq.s32.totalorder %s30, 0
      %p50 = por %p48, %p49
      %p51 = scmp.ne.s32.totalorder %s40, %s43
      %p52 = scmp.eq.s32.totalorder %s35, 1
      %p53 = por %p51, %p52
      %p54 = scmp.ne.s32.totalorder %s43, %s44
      %p55 = scmp.eq.s32.totalorder %s35, 0
      %p56 = por %p54, %p55
      %p57 = scmp.ne.s32.totalorder %s43, %s44
      %p58 = scmp.eq.s32.totalorder %s36, 1
      %p59 = por %p57, %p58
      %p61 = scmp.ne.s32.totalorder %s44, %s60
      %p62 = scmp.eq.s32.totalorder %s36, 0
      %p63 = por %p61, %p62
      %s65 = sadd.s32 %s64, 1
      %p68 = scmp.eq.s32.totalorder %s30, 1
      %p69 = scmp.ne.s32.totalorder %s64, %s66
      %p70 = scmp.eq.s32.totalorder %s30, 0
      %p71 = por %p69, %p70
      %p72 = scmp.ne.s32.totalorder %s64, %s66
      %p73 = scmp.eq.s32.totalorder %s35, 1
      %p74 = por %p72, %p73
      %p75 = scmp.ne.s32.totalorder %s66, %s67
      %p76 = scmp.eq.s32.totalorder %s35, 0
      %p77 = por %p75, %p76
      %p78 = scmp.ne.s32.totalorder %s66, %s67
      %p79 = scmp.eq.s32.totalorder %s36, 1
      %p80 = por %p78, %p79
      %p82 = scmp.ne.s32.totalorder %s67, %s81
      %p83 = scmp.eq.s32.totalorder %s36, 0
      %p84 = por %p82, %p83
      %s86 = sadd.s32 %s85, 1
      %p89 = scmp.eq.s32.totalorder %s30, 1
      %p90 = scmp.ne.s32.totalorder %s85, %s87
      %p91 = scmp.eq.s32.totalorder %s30, 0
      %p92 = por %p90, %p91
      %p93 = scmp.ne.s32.totalorder %s85, %s87
      %p94 = scmp.eq.s32.totalorder %s35, 1
      %p95 = por %p93, %p94
      %p96 = scmp.ne.s32.totalorder %s87, %s88
      %p97 = scmp.eq.s32.totalorder %s35, 0
      %p98 = por %p96, %p97
      %p99 = scmp.ne.s32.totalorder %s87, %s88
      %p100 = scmp.eq.s32.totalorder %s36, 1
      %p101 = por %p99, %p100
      %p103 = scmp.ne.s32.totalorder %s88, %s102
      %p104 = scmp.eq.s32.totalorder %s36, 0
      %p105 = por %p103, %p104
      %s107 = sadd.s32 %s106, 1
      %p110 = scmp.eq.s32.totalorder %s30, 1
      %p111 = scmp.ne.s32.totalorder %s106, %s108
      %p112 = scmp.eq.s32.totalorder %s30, 0
      %p113 = por %p111, %p112
      %p114 = scmp.ne.s32.totalorder %s106, %s108
      %p115 = scmp.eq.s32.totalorder %s35, 1
      %p116 = por %p114, %p115
      %p117 = scmp.ne.s32.totalorder %s108, %s109
      %p118 = scmp.eq.s32.totalorder %s35, 0
      %p119 = por %p117, %p118
      %p120 = scmp.ne.s32.totalorder %s108, %s109
      %p121 = scmp.eq.s32.totalorder %s36, 1
      %p122 = por %p120, %p121
      %p124 = scmp.ne.s32.totalorder %s109, %s123
      %p125 = scmp.eq.s32.totalorder %s36, 0
      %p126 = por %p124, %p125
      %s128 = sadd.s32 %s127, 1
      %p131 = scmp.eq.s32.totalorder %s30, 1
      %p132 = scmp.ne.s32.totalorder %s127, %s129
      %p133 = scmp.eq.s32.totalorder %s30, 0
      %p134 = por %p132, %p133
      %p135 = scmp.ne.s32.totalorder %s127, %s129
      %p136 = scmp.eq.s32.totalorder %s35, 1
      %p137 = por %p135, %p136
      %p138 = scmp.ne.s32.totalorder %s129, %s130
      %p139 = scmp.eq.s32.totalorder %s35, 0
      %p140 = por %p138, %p139
      %p141 = scmp.ne.s32.totalorder %s129, %s130
      %p142 = scmp.eq.s32.totalorder %s36, 1
      %p143 = por %p141, %p142
      %p145 = scmp.ne.s32.totalorder %s130, %s144
      %p146 = scmp.eq.s32.totalorder %s36, 0
      %p147 = por %p145, %p146
      %s149 = sadd.s32 %s148, 1
      %p152 = scmp.eq.s32.totalorder %s30, 1
      %p153 = scmp.ne.s32.totalorder %s148, %s150
      %p154 = scmp.eq.s32.totalorder %s30, 0
      %p155 = por %p153, %p154
      %p156 = scmp.ne.s32.totalorder %s148, %s150
      %p157 = scmp.eq.s32.totalorder %s35, 1
      %p158 = por %p156, %p157
      %p159 = scmp.ne.s32.totalorder %s150, %s151
      %p160 = scmp.eq.s32.totalorder %s35, 0
      %p161 = por %p159, %p160
      %p162 = scmp.ne.s32.totalorder %s150, %s151
      %p163 = scmp.eq.s32.totalorder %s36, 1
      %p164 = por %p162, %p163
      %p166 = scmp.ne.s32.totalorder %s151, %s165
      %p167 = scmp.eq.s32.totalorder %s36, 0
      %p168 = por %p166, %p167
      %s170 = sadd.s32 %s169, 1
      %p173 = scmp.eq.s32.totalorder %s30, 1
      %p174 = scmp.ne.s32.totalorder %s169, %s171
      %p175 = scmp.eq.s32.totalorder %s30, 0
      %p176 = por %p174, %p175
      %p177 = scmp.ne.s32.totalorder %s169, %s171
      %p178 = scmp.eq.s32.totalorder %s35, 1
      %p179 = por %p177, %p178
      %p180 = scmp.ne.s32.totalorder %s171, %s172
      %p181 = scmp.eq.s32.totalorder %s35, 0
      %p182 = por %p180, %p181
      %p183 = scmp.ne.s32.totalorder %s171, %s172
      %p184 = scmp.eq.s32.totalorder %s36, 1
      %p185 = por %p183, %p184
      %p187 = scmp.ne.s32.totalorder %s172, %s186
      %p188 = scmp.eq.s32.totalorder %s36, 0
      %p189 = por %p187, %p188
      %s191 = sadd.s32 %s190, 1
      %p194 = scmp.eq.s32.totalorder %s30, 1
      %p195 = scmp.ne.s32.totalorder %s190, %s192
      %p196 = scmp.eq.s32.totalorder %s30, 0
      %p197 = por %p195, %p196
      %p198 = scmp.ne.s32.totalorder %s190, %s192
      %p199 = scmp.eq.s32.totalorder %s35, 1
      %p200 = por %p198, %p199
      %p201 = scmp.ne.s32.totalorder %s192, %s193
      %p202 = scmp.eq.s32.totalorder %s35, 0
      %p203 = por %p201, %p202
      %p204 = scmp.ne.s32.totalorder %s192, %s193
      %p205 = scmp.eq.s32.totalorder %s36, 1
      %p206 = por %p204, %p205
      %p208 = scmp.ne.s32.totalorder %s193, %s207
      %p209 = scmp.eq.s32.totalorder %s36, 0
      %p210 = por %p208, %p209
      %s212 = sadd.s32 %s211, 1
      %p215 = scmp.eq.s32.totalorder %s30, 1
      %p216 = scmp.ne.s32.totalorder %s211, %s213
      %p217 = scmp.eq.s32.totalorder %s30, 0
      %p218 = por %p216, %p217
      %p219 = scmp.ne.s32.totalorder %s211, %s213
      %p220 = scmp.eq.s32.totalorder %s35, 1
      %p221 = por %p219, %p220
      %p222 = scmp.ne.s32.totalorder %s213, %s214
      %p223 = scmp.eq.s32.totalorder %s35, 0
      %p224 = por %p222, %p223
      %p225 = scmp.ne.s32.totalorder %s213, %s214
      %p226 = scmp.eq.s32.totalorder %s36, 1
      %p227 = por %p225, %p226
      %p229 = scmp.ne.s32.totalorder %s214, %s228
      %p230 = scmp.eq.s32.totalorder %s36, 0
      %p231 = por %p229, %p230
      %s233 = sadd.s32 %s232, 1
      %p236 = scmp.eq.s32.totalorder %s30, 1
      %p237 = scmp.ne.s32.totalorder %s232, %s234
      %p238 = scmp.eq.s32.totalorder %s30, 0
      %p239 = por %p237, %p238
      %p240 = scmp.ne.s32.totalorder %s232, %s234
      %p241 = scmp.eq.s32.totalorder %s35, 1
      %p242 = por %p240, %p241
      %p243 = scmp.ne.s32.totalorder %s234, %s235
      %p244 = scmp.eq.s32.totalorder %s35, 0
      %p245 = por %p243, %p244
      %p246 = scmp.ne.s32.totalorder %s234, %s235
      %p247 = scmp.eq.s32.totalorder %s36, 1
      %p248 = por %p246, %p247
      %p250 = scmp.ne.s32.totalorder %s235, %s249
      %p251 = scmp.eq.s32.totalorder %s36, 0
      %p252 = por %p250, %p251
      %s254 = sadd.s32 %s253, 1
      %p257 = scmp.eq.s32.totalorder %s30, 1
      %p258 = scmp.ne.s32.totalorder %s253, %s255
      %p259 = scmp.eq.s32.totalorder %s30, 0
      %p260 = por %p258, %p259
      %p261 = scmp.ne.s32.totalorder %s253, %s255
      %p262 = scmp.eq.s32.totalorder %s35, 1
      %p263 = por %p261, %p262
      %p264 = scmp.ne.s32.totalorder %s255, %s256
      %p265 = scmp.eq.s32.totalorder %s35, 0
      %p266 = por %p264, %p265
      %p267 = scmp.ne.s32.totalorder %s255, %s256
      %p268 = scmp.eq.s32.totalorder %s36, 1
      %p269 = por %p267, %p268
      %p271 = scmp.ne.s32.totalorder %s256, %s270
      %p272 = scmp.eq.s32.totalorder %s36, 0
      %p273 = por %p271, %p272
      %s275 = sadd.s32 %s274, 1
      %p278 = scmp.eq.s32.totalorder %s30, 1
      %p279 = scmp.ne.s32.totalorder %s274, %s276
      %p280 = scmp.eq.s32.totalorder %s30, 0
      %p281 = por %p279, %p280
      %p282 = scmp.ne.s32.totalorder %s274, %s276
      %p283 = scmp.eq.s32.totalorder %s35, 1
      %p284 = por %p282, %p283
      %p285 = scmp.ne.s32.totalorder %s276, %s277
      %p286 = scmp.eq.s32.totalorder %s35, 0
      %p287 = por %p285, %p286
      %p288 = scmp.ne.s32.totalorder %s276, %s277
      %p289 = scmp.eq.s32.totalorder %s36, 1
      %p290 = por %p288, %p289
      %p292 = scmp.ne.s32.totalorder %s277, %s291
      %p293 = scmp.eq.s32.totalorder %s36, 0
      %p294 = por %p292, %p293
      %s296 = sadd.s32 %s295, 1
      %p299 = scmp.eq.s32.totalorder %s30, 1
      %p300 = scmp.ne.s32.totalorder %s295, %s297
      %p301 = scmp.eq.s32.totalorder %s30, 0
      %p302 = por %p300, %p301
      %p303 = scmp.ne.s32.totalorder %s295, %s297
      %p304 = scmp.eq.s32.totalorder %s35, 1
      %p305 = por %p303, %p304
      %p306 = scmp.ne.s32.totalorder %s297, %s298
      %p307 = scmp.eq.s32.totalorder %s35, 0
      %p308 = por %p306, %p307
      %p309 = scmp.ne.s32.totalorder %s297, %s298
      %p310 = scmp.eq.s32.totalorder %s36, 1
      %p311 = por %p309, %p310
      %p313 = scmp.ne.s32.totalorder %s298, %s312
      %p314 = scmp.eq.s32.totalorder %s36, 0
      %p315 = por %p313, %p314
      %s317 = sadd.s32 %s316, 1
      %p320 = scmp.eq.s32.totalorder %s30, 1
      %p321 = scmp.ne.s32.totalorder %s316, %s318
      %p322 = scmp.eq.s32.totalorder %s30, 0
      %p323 = por %p321, %p322
      %p324 = scmp.ne.s32.totalorder %s316, %s318
      %p325 = scmp.eq.s32.totalorder %s35, 1
      %p326 = por %p324, %p325
      %p327 = scmp.ne.s32.totalorder %s318, %s319
      %p328 = scmp.eq.s32.totalorder %s35, 0
      %p329 = por %p327, %p328
      %p330 = scmp.ne.s32.totalorder %s318, %s319
      %p331 = scmp.eq.s32.totalorder %s36, 1
      %p332 = por %p330, %p331
      %p334 = scmp.ne.s32.totalorder %s319, %s333
      %p335 = scmp.eq.s32.totalorder %s36, 0
      %p336 = por %p334, %p335
      %s338 = sadd.s32 %s337, 1
      %p341 = scmp.eq.s32.totalorder %s30, 1
      %p342 = scmp.ne.s32.totalorder %s337, %s339
      %p343 = scmp.eq.s32.totalorder %s30, 0
      %p344 = por %p342, %p343
      %p345 = scmp.ne.s32.totalorder %s337, %s339
      %p346 = scmp.eq.s32.totalorder %s35, 1
      %p347 = por %p345, %p346
      %p348 = scmp.ne.s32.totalorder %s339, %s340
      %p349 = scmp.eq.s32.totalorder %s35, 0
      %p350 = por %p348, %p349
      %p351 = scmp.ne.s32.totalorder %s339, %s340
      %p352 = scmp.eq.s32.totalorder %s36, 1
      %p353 = por %p351, %p352
      %p355 = scmp.ne.s32.totalorder %s340, %s354
      %p356 = scmp.eq.s32.totalorder %s36, 0
      %p357 = por %p355, %p356
      %s359 = sadd.s32 %s358, 1
      %p362 = scmp.eq.s32.totalorder %s30, 1
      %p363 = scmp.ne.s32.totalorder %s358, %s360
      %p364 = scmp.eq.s32.totalorder %s30, 0
      %p365 = por %p363, %p364
      %p366 = scmp.ne.s32.totalorder %s358, %s360
      %p367 = scmp.eq.s32.totalorder %s35, 1
      %p368 = por %p366, %p367
      %p369 = scmp.ne.s32.totalorder %s360, %s361
      %p370 = scmp.eq.s32.totalorder %s35, 0
      %p371 = por %p369, %p370
      %p372 = scmp.ne.s32.totalorder %s360, %s361
      %p373 = scmp.eq.s32.totalorder %s36, 1
      %p374 = por %p372, %p373
      %p376 = scmp.ne.s32.totalorder %s361, %s375
      %p377 = scmp.eq.s32.totalorder %s36, 0
      %p378 = por %p376, %p377
      %s380 = sadd.s32 %s379, 1
      %p383 = scmp.eq.s32.totalorder %s30, 1
      %p384 = scmp.ne.s32.totalorder %s379, %s381
      %p385 = scmp.eq.s32.totalorder %s30, 0
      %p386 = por %p384, %p385
      %p387 = scmp.ne.s32.totalorder %s379, %s381
      %p388 = scmp.eq.s32.totalorder %s35, 1
      %p389 = por %p387, %p388
      %p390 = scmp.ne.s32.totalorder %s381, %s382
      %p391 = scmp.eq.s32.totalorder %s35, 0
      %p392 = por %p390, %p391
      %p393 = scmp.ne.s32.totalorder %s381, %s382
      %p394 = scmp.eq.s32.totalorder %s36, 1
      %p395 = por %p393, %p394
      %p397 = scmp.ne.s32.totalorder %s382, %s396
      %p398 = scmp.eq.s32.totalorder %s36, 0
      %p399 = por %p397, %p398
      %s400 = ssub.s32 %s30, %s37
      %p401 = scmp.eq.s32.totalorder %s400, 0
      %s403 = sadd.s32 %s402, 1
      %s404 = scalar_select %p401, %s402, %s403
      %p407 = pneg %p401
      %p408 = scmp.eq.s32.totalorder %s30, 1
      %p409 = por %p407, %p408
      %p410 = scmp.ne.s32.totalorder %s402, %s405
      %p411 = scmp.eq.s32.totalorder %s30, 0
      %p412 = por %p410, %p411
      %p413 = scmp.ne.s32.totalorder %s402, %s405
      %p414 = scmp.eq.s32.totalorder %s35, 1
      %p415 = por %p413, %p414
      %p416 = scmp.ne.s32.totalorder %s405, %s406
      %p417 = scmp.eq.s32.totalorder %s35, 0
      %p418 = por %p416, %p417
      %p419 = scmp.ne.s32.totalorder %s405, %s406
      %p420 = scmp.eq.s32.totalorder %s36, 1
      %p421 = por %p419, %p420
      %p423 = scmp.ne.s32.totalorder %s406, %s422
      %p424 = scmp.eq.s32.totalorder %s36, 0
      %p425 = por %p423, %p424
      %p426 = scmp.le.s32.totalorder 1, %s30
      %p427 = scmp.lt.s32.totalorder %s30, 3
      %p428 = pnand %p426, %p427
      %p429 = pneg %p428
      // Predicated region
      $region9: #{tpu_custom_call.1} parent=5 // pred_check
        _
      $region10: #{tpu_custom_call.1} parent=5 // pred_check_branch
        %431 = sbr.rel (%p428) target = $region12
      $region11: #{tpu_custom_call.1} parent=5 // pred_region
        %s432 = ssub.s32 %s30, 1
        // Predicated region
        $region13: #{tpu_custom_call.1} parent=11 // pred_check
          %p433 = pneg %p77
        $region14: #{tpu_custom_call.1} parent=11 // pred_check_branch
          %435 = sbr.rel (%p433) target = $region16
        $region15: #{tpu_custom_call.1} parent=11 // pred_region
          %s437 = ssub.s32 16, 16
          %438 = vsyncadd [#allocation3], %s437
          %s440 = sshll.u32 [#allocation2], 4
          %s441 = int_to_ptr.vmem [resolvable:$true] %s440
          %443 = dma.hbm_to_vmem [thread:$0]  %s1, 16, %s441, [#allocation3]
        $region16: #{tpu_custom_call.1} parent=11 // pred_fallthru
          _
        // Predicated region
        $region17: #{tpu_custom_call.1} parent=11 // pred_check
          %p444 = pneg %p98
        $region18: #{tpu_custom_call.1} parent=11 // pred_check_branch
          %446 = sbr.rel (%p444) target = $region20
        $region19: #{tpu_custom_call.1} parent=11 // pred_region
          %s448 = ssub.s32 16, 16
          %449 = vsyncadd [#allocation6], %s448
          %s451 = sshll.u32 [#allocation5], 4
          %s452 = int_to_ptr.vmem [resolvable:$true] %s451
          %454 = dma.hbm_to_vmem [thread:$0]  %s2, 16, %s452, [#allocation6]
        $region20: #{tpu_custom_call.1} parent=11 // pred_fallthru
          _
        // Predicated region
        $region21: #{tpu_custom_call.1} parent=11 // pred_check
          %p455 = pneg %p119
        $region22: #{tpu_custom_call.1} parent=11 // pred_check_branch
          %457 = sbr.rel (%p455) target = $region24
        $region23: #{tpu_custom_call.1} parent=11 // pred_region
          _
        $region24: #{tpu_custom_call.1} parent=11 // pred_fallthru
          _
        // Predicated region
        $region25: #{tpu_custom_call.1} parent=11 // pred_check
          %p458 = pneg %p140
        $region26: #{tpu_custom_call.1} parent=11 // pred_check_branch
          %460 = sbr.rel (%p458) target = $region28
        $region27: #{tpu_custom_call.1} parent=11 // pred_region
          _
        $region28: #{tpu_custom_call.1} parent=11 // pred_fallthru
          _
        // Predicated region
        $region29: #{tpu_custom_call.1} parent=11 // pred_check
          %p461 = pneg %p161
        $region30: #{tpu_custom_call.1} parent=11 // pred_check_branch
          %463 = sbr.rel (%p461) target = $region32
        $region31: #{tpu_custom_call.1} parent=11 // pred_region
          _
        $region32: #{tpu_custom_call.1} parent=11 // pred_fallthru
          _
        // Predicated region
        $region33: #{tpu_custom_call.1} parent=11 // pred_check
          %p464 = pneg %p182
        $region34: #{tpu_custom_call.1} parent=11 // pred_check_branch
          %466 = sbr.rel (%p464) target = $region36
        $region35: #{tpu_custom_call.1} parent=11 // pred_region
          %s468 = ssub.s32 16, 16
          %469 = vsyncadd [#allocation6], %s468
          %s471 = sshll.u32 [#allocation7], 4
          %s472 = int_to_ptr.vmem [resolvable:$true] %s471
          %474 = dma.hbm_to_vmem [thread:$0]  %s6, 16, %s472, [#allocation6]
        $region36: #{tpu_custom_call.1} parent=11 // pred_fallthru
          _
        // Predicated region
        $region37: #{tpu_custom_call.1} parent=11 // pred_check
          %p475 = pneg %p203
        $region38: #{tpu_custom_call.1} parent=11 // pred_check_branch
          %477 = sbr.rel (%p475) target = $region40
        $region39: #{tpu_custom_call.1} parent=11 // pred_region
          %s479 = ssub.s32 16, 16
          %480 = vsyncadd [#allocation9], %s479
          %s482 = sshll.u32 [#allocation8], 4
          %s483 = int_to_ptr.vmem [resolvable:$true] %s482
          %485 = dma.hbm_to_vmem [thread:$0]  %s7, 16, %s483, [#allocation9]
        $region40: #{tpu_custom_call.1} parent=11 // pred_fallthru
          _
        // Predicated region
        $region41: #{tpu_custom_call.1} parent=11 // pred_check
          %p486 = pneg %p224
        $region42: #{tpu_custom_call.1} parent=11 // pred_check_branch
          %488 = sbr.rel (%p486) target = $region44
        $region43: #{tpu_custom_call.1} parent=11 // pred_region
          %s490 = ssub.s32 16, 16
          %491 = vsyncadd [#allocation9], %s490
          %s493 = sshll.u32 [#allocation10], 4
          %s494 = int_to_ptr.vmem [resolvable:$true] %s493
          %496 = dma.hbm_to_vmem [thread:$0]  %s8, 16, %s494, [#allocation9]
        $region44: #{tpu_custom_call.1} parent=11 // pred_fallthru
          _
        // Predicated region
        $region45: #{tpu_custom_call.1} parent=11 // pred_check
          %p497 = pneg %p245
        $region46: #{tpu_custom_call.1} parent=11 // pred_check_branch
          %499 = sbr.rel (%p497) target = $region48
        $region47: #{tpu_custom_call.1} parent=11 // pred_region
          _
        $region48: #{tpu_custom_call.1} parent=11 // pred_fallthru
          _
        // Predicated region
        $region49: #{tpu_custom_call.1} parent=11 // pred_check
          %p500 = pneg %p266
        $region50: #{tpu_custom_call.1} parent=11 // pred_check_branch
          %502 = sbr.rel (%p500) target = $region52
        $region51: #{tpu_custom_call.1} parent=11 // pred_region
          _
        $region52: #{tpu_custom_call.1} parent=11 // pred_fallthru
          _
        // Predicated region
        $region53: #{tpu_custom_call.1} parent=11 // pred_check
          %p503 = pneg %p287
        $region54: #{tpu_custom_call.1} parent=11 // pred_check_branch
          %505 = sbr.rel (%p503) target = $region56
        $region55: #{tpu_custom_call.1} parent=11 // pred_region
          _
        $region56: #{tpu_custom_call.1} parent=11 // pred_fallthru
          _
        // Predicated region
        $region57: #{tpu_custom_call.1} parent=11 // pred_check
          %p506 = pneg %p308
        $region58: #{tpu_custom_call.1} parent=11 // pred_check_branch
          %508 = sbr.rel (%p506) target = $region60
        $region59: #{tpu_custom_call.1} parent=11 // pred_region
          _
        $region60: #{tpu_custom_call.1} parent=11 // pred_fallthru
          _
        // Predicated region
        $region61: #{tpu_custom_call.1} parent=11 // pred_check
          %p509 = pneg %p329
        $region62: #{tpu_custom_call.1} parent=11 // pred_check_branch
          %511 = sbr.rel (%p509) target = $region64
        $region63: #{tpu_custom_call.1} parent=11 // pred_region
          %s513 = ssub.s32 256, 256
          %514 = vsyncadd [#allocation12], %s513
          %s515 = sshll.u32 [#allocation11], 4
          %s516 = int_to_ptr.vmem [resolvable:$true] %s515
          %521 = dma.hbm_to_vmem [thread:$0]  %s13, 256, %s516, [#allocation12], 64, 64, 4
        $region64: #{tpu_custom_call.1} parent=11 // pred_fallthru
          _
        // Predicated region
        $region65: #{tpu_custom_call.1} parent=11 // pred_check
          %p522 = pneg %p350
        $region66: #{tpu_custom_call.1} parent=11 // pred_check_branch
          %524 = sbr.rel (%p522) target = $region68
        $region67: #{tpu_custom_call.1} parent=11 // pred_region
          _
        $region68: #{tpu_custom_call.1} parent=11 // pred_fallthru
          _
        // Predicated region
        $region69: #{tpu_custom_call.1} parent=11 // pred_check
          %p525 = pneg %p371
        $region70: #{tpu_custom_call.1} parent=11 // pred_check_branch
          %527 = sbr.rel (%p525) target = $region72
        $region71: #{tpu_custom_call.1} parent=11 // pred_region
          _
        $region72: #{tpu_custom_call.1} parent=11 // pred_fallthru
          _
        // Predicated region
        $region73: #{tpu_custom_call.1} parent=11 // pred_check
          %p528 = pneg %p392
        $region74: #{tpu_custom_call.1} parent=11 // pred_check_branch
          %530 = sbr.rel (%p528) target = $region76
        $region75: #{tpu_custom_call.1} parent=11 // pred_region
          _
        $region76: #{tpu_custom_call.1} parent=11 // pred_fallthru
          _
      $region12: #{tpu_custom_call.1} parent=5 // pred_fallthru
        _
      %p531 = scmp.lt.s32.totalorder %s30, 2
      // Predicated region
      $region77: #{tpu_custom_call.1} parent=5 // pred_check
        %p532 = pneg %p531
      $region78: #{tpu_custom_call.1} parent=5 // pred_check_branch
        %534 = sbr.rel (%p532) target = $region80
      $region79: #{tpu_custom_call.1} parent=5 // pred_region
        // Predicated region
        $region81: #{tpu_custom_call.1} parent=79 // pred_check
          %p535 = pneg %p50
        $region82: #{tpu_custom_call.1} parent=79 // pred_check_branch
          %537 = sbr.rel (%p535) target = $region84
        $region83: #{tpu_custom_call.1} parent=79 // pred_region
          %p538 = scmp.lt.s32.totalorder %s30, 1
          %s539 = scalar_select %p538, %s30, 1
          %s540 = smul.addr %s539, 2
          %s541 = smul.addr %s540, 8
          %s542 = scalar_lea.vmem %s0, %s541
        $region84: #{tpu_custom_call.1} parent=79 // pred_fallthru
          _
      $region80: #{tpu_custom_call.1} parent=5 // pred_fallthru
        _
      %p543 = scmp.le.s32.totalorder 1, %s30
      %p544 = scmp.lt.s32.totalorder %s30, 3
      %p545 = pnand %p543, %p544
      %p546 = pneg %p545
      // Predicated region
      $region85: #{tpu_custom_call.1} parent=5 // pred_check
        _
      $region86: #{tpu_custom_call.1} parent=5 // pred_check_branch
        %548 = sbr.rel (%p545) target = $region88
      $region87: #{tpu_custom_call.1} parent=5 // pred_region
        %s549 = ssub.s32 %s30, 1
        // Predicated region
        $region89: #{tpu_custom_call.1} parent=87 // pred_check
          %p550 = pneg %p77
        $region90: #{tpu_custom_call.1} parent=87 // pred_check_branch
          %552 = sbr.rel (%p550) target = $region92
        $region91: #{tpu_custom_call.1} parent=87 // pred_region
          %553 = dma.done [#allocation3], 16
        $region92: #{tpu_custom_call.1} parent=87 // pred_fallthru
          _
        // Predicated region
        $region93: #{tpu_custom_call.1} parent=87 // pred_check
          %p554 = pneg %p98
        $region94: #{tpu_custom_call.1} parent=87 // pred_check_branch
          %556 = sbr.rel (%p554) target = $region96
        $region95: #{tpu_custom_call.1} parent=87 // pred_region
          %557 = dma.done [#allocation6], 16
        $region96: #{tpu_custom_call.1} parent=87 // pred_fallthru
          _
        // Predicated region
        $region97: #{tpu_custom_call.1} parent=87 // pred_check
          %p558 = pneg %p182
        $region98: #{tpu_custom_call.1} parent=87 // pred_check_branch
          %560 = sbr.rel (%p558) target = $region100
        $region99: #{tpu_custom_call.1} parent=87 // pred_region
          %561 = dma.done [#allocation6], 16
        $region100: #{tpu_custom_call.1} parent=87 // pred_fallthru
          _
        // Predicated region
        $region101: #{tpu_custom_call.1} parent=87 // pred_check
          %p562 = pneg %p203
        $region102: #{tpu_custom_call.1} parent=87 // pred_check_branch
          %564 = sbr.rel (%p562) target = $region104
        $region103: #{tpu_custom_call.1} parent=87 // pred_region
          %565 = dma.done [#allocation9], 16
        $region104: #{tpu_custom_call.1} parent=87 // pred_fallthru
          _
        // Predicated region
        $region105: #{tpu_custom_call.1} parent=87 // pred_check
          %p566 = pneg %p224
        $region106: #{tpu_custom_call.1} parent=87 // pred_check_branch
          %568 = sbr.rel (%p566) target = $region108
        $region107: #{tpu_custom_call.1} parent=87 // pred_region
          %569 = dma.done [#allocation9], 16
        $region108: #{tpu_custom_call.1} parent=87 // pred_fallthru
          _
        // Predicated region
        $region109: #{tpu_custom_call.1} parent=87 // pred_check
          %p570 = pneg %p329
        $region110: #{tpu_custom_call.1} parent=87 // pred_check_branch
          %572 = sbr.rel (%p570) target = $region112
        $region111: #{tpu_custom_call.1} parent=87 // pred_region
          %573 = dma.done [#allocation12], 256
        $region112: #{tpu_custom_call.1} parent=87 // pred_fallthru
          _
        %p574 = scmp.lt.s32.totalorder %s35, 1
        %s575 = scalar_select %p574, %s35, 1
        %s576 = smul.addr %s575, 2
        %s577 = smul.addr %s576, 8
        %s578 = scalar_lea.vmem %s0, %s577
        %p579 = pneg %p56
        %p580 = pneg %p53
        %p581 = pneg %p77
        %p582 = pneg %p74
        %p583 = pneg %p98
        %p584 = pneg %p95
        %p585 = pneg %p119
        %p586 = pneg %p116
        %p587 = pneg %p140
        %p588 = pneg %p137
        %p589 = pneg %p161
        %p590 = pneg %p158
        %p591 = pneg %p182
        %p592 = pneg %p179
        %p593 = pneg %p203
        %p594 = pneg %p200
        %p595 = pneg %p224
        %p596 = pneg %p221
        %p597 = pneg %p245
        %p598 = pneg %p242
        %p599 = pneg %p266
        %p600 = pneg %p263
        %p601 = pneg %p287
        %p602 = pneg %p284
        %p603 = pneg %p308
        %p604 = pneg %p305
        %p605 = pneg %p329
        %p606 = pneg %p326
        %p607 = pneg %p350
        %p608 = pneg %p347
        %p609 = pneg %p371
        %p610 = pneg %p368
        %p611 = pneg %p392
        %p612 = pneg %p389
        %p613 = pneg %p418
        %p614 = pneg %p415
        %s615 = sand.u32 %s405, 1
        %s616 = scalar_lea.sflag [#allocation4], %s615
        %s617 = sand.u32 %s405, 1
        %s618 = smul.addr %s617, 16
        %s619 = scalar_lea.vmem [#allocation13], %s618
        %p620 = scmp.lt.s32.totalorder %s35, 1
        %s621 = scalar_select %p620, %s35, 1
        %s622 = smul.addr %s621, 2
        %s623 = smul.addr %s622, 8
        %s624 = scalar_lea.vmem %s0, %s623
        %v626 = vld [vmem:[%s624] sm:$0xff]
        %v627 = vld [vmem:[%s624 + $0x8] sm:$0xff]
        %v628 = vld [vmem:[#allocation2] sm:$0x1]
        %v629 = vld [vmem:[#allocation5] sm:$0x1]
        %vm630 = vcmask 261120
        %v631 = vsel %vm630, %v626, 0.0
        %632 = vadd.xlane.f32.xlu0 %v631
        %v633 = vpop.xlane.xlu0 %632
        %v634 = vsel %vm630, %v627, 0.0
        %635 = vadd.xlane.f32.xlu0 %v634
        %v636 = vpop.xlane.xlu0 %635
        %v637 = vrcp.pop 32.0
        %v638 = vmul.f32 %v633, %v637
        %v639 = vmul.f32 %v636, %v637
        %v640 = vsub.f32 %v626, %v638
        %v641 = vsub.f32 %v627, %v639
        %v642 = vmul.f32 %v640, %v640
        %v643 = vmul.f32 %v641, %v641
        %v644 = vsel %vm630, %v642, 0.0
        %645 = vadd.xlane.f32.xlu0 %v644
        %v646 = vpop.xlane.xlu0 %645
        %v647 = vsel %vm630, %v643, 0.0
        %648 = vadd.xlane.f32.xlu0 %v647
        %v649 = vpop.xlane.xlu0 %648
        %v650 = vmul.f32 %v646, %v637
        %v651 = vmul.f32 %v649, %v637
        %v652 = vadd.f32 %v650, 1e-05
        %v653 = vadd.f32 %v651, 1e-05
        %v654 = vrsqrt.pop %v652
        %v655 = vrsqrt.pop %v653
        %v656 = vmul.f32 %v640, %v654
        %v657 = vmul.f32 %v641, %v655
        %v659 = vlaneseq
        %v660 = vshrl.u32 %v659, 7
        %v661 = vsub.s32 0, %v660
        %v662 = vrot.slane %v628, %v661
        %v664 = vmul.f32 %v656, %v662
        %v665 = vmul.f32 %v657, %v662
        %v667 = vlaneseq
        %v668 = vshrl.u32 %v667, 7
        %v669 = vsub.s32 0, %v668
        %v670 = vrot.slane %v629, %v669
        %v672 = vadd.f32 %v664, %v670
        %v673 = vadd.f32 %v665, %v670
        %v674 = vpack.c.bf16 %v673, %v672
        %v675 = vld [vmem:[%s3] sm:$0xf]
        %v676 = vld [vmem:[%s3 + $0x4] sm:$0xf]
        %v677 = vld [vmem:[%s3 + $0x8] sm:$0xf]
        %v678 = vld [vmem:[%s3 + $0xc] sm:$0xf]
        %v679 = vld [vmem:[#allocation7] sm:$0x1]
        %v681 = vlaneseq
        %v682 = vshrl.u32 %v681, 7
        %v683 = vsub.s32 0, %v682
        %v684 = vrot.slane %v679, %v683
        %v690 = vunpack.c.l.b16 %v675
        %v691 = vunpack.c.l.b16 %v676
        %v692 = vunpack.c.l.b16 %v677
        %v693 = vunpack.c.l.b16 %v678
        %v694 = vpack.c.b16 %v691, %v690
        %v695 = vpack.c.b16 %v693, %v692
        %v699 = vsel %vm630, %v674, 0
        %701 = vmatprep.subr.bf16.mxu0 0
        %702 = vmatpush1.bf16.msra.mxu0 0
        %703 = vmatprep.subr.bf16.mxu0 0
        %704 = vmatpush1.bf16.msra.mxu0 0
        %705 = vmatprep.subr.bf16.mxu0 0
        %706 = vmatpush1.bf16.msra.mxu0 0
        %707 = vmatprep.subr.bf16.mxu0 0
        %708 = vmatpush1.bf16.msra.mxu0 0
        %709 = vmatprep.subr.bf16.mxu0 0
        %710 = vmatpush1.bf16.msra.mxu0 0
        %711 = vmatprep.subr.bf16.mxu0 0
        %712 = vmatpush1.bf16.msra.mxu0 0
        %713 = vmatprep.subr.bf16.mxu0 0
        %714 = vmatpush1.bf16.msra.mxu0 %v695
        %715 = vmatprep.subr.bf16.mxu0 0
        %716 = vmatpush1.bf16.msra.mxu0 %v694
        %717 = vmatprep.subr.bf16.mxu0 0
        %718 = vmatpush2.bf16.msra.mxu0 0
        %719 = vmatprep.subr.bf16.mxu0 0
        %720 = vmatpush2.bf16.msra.mxu0 0
        %721 = vmatprep.subr.bf16.mxu0 0
        %722 = vmatpush2.bf16.msra.mxu0 0
        %723 = vmatprep.subr.bf16.mxu0 0
        %724 = vmatpush2.bf16.msra.mxu0 0
        %725 = vmatprep.subr.bf16.mxu0 0
        %726 = vmatpush2.bf16.msra.mxu0 0
        %727 = vmatprep.subr.bf16.mxu0 0
        %728 = vmatpush2.bf16.msra.mxu0 0
        %729 = vmatprep.subr.bf16.mxu0 0
        %730 = vmatpush2.bf16.msra.mxu0 0
        %731 = vmatprep.subr.bf16.mxu0 0
        %732 = vmatpush2.bf16.msra.mxu0 0
        %733 = vmatprep.mubr.bf16.mxu0 0
        %734 = vmatmul.mubr.bf16.gmra.mxu0 %v699
        %v735 = vpop.f32.mrf.mxu0
        %v736 = vadd.f32 %v684, %v735
        %v737 = vpop.f32.mrf.mxu0
        %v738 = vpop.f32.mrf.mxu0
        %v739 = vadd.f32 %v684, %v738
        %v740 = vpop.f32.mrf.mxu0
        %741 = vdwg.mxu0
        %v742 = vld [vmem:[%s4] sm:$0xf]
        %v743 = vld [vmem:[%s4 + $0x4] sm:$0xf]
        %v744 = vld [vmem:[%s4 + $0x8] sm:$0xf]
        %v745 = vld [vmem:[%s4 + $0xc] sm:$0xf]
        %v746 = vld [vmem:[#allocation8] sm:$0x1]
        %v748 = vlaneseq
        %v749 = vshrl.u32 %v748, 7
        %v750 = vsub.s32 0, %v749
        %v751 = vrot.slane %v746, %v750
        %v757 = vunpack.c.l.b16 %v742
        %v758 = vunpack.c.l.b16 %v743
        %v759 = vunpack.c.l.b16 %v744
        %v760 = vunpack.c.l.b16 %v745
        %v761 = vpack.c.b16 %v758, %v757
        %v762 = vpack.c.b16 %v760, %v759
        %765 = vmatprep.subr.bf16.mxu0 0
        %766 = vmatpush1.bf16.msra.mxu0 0
        %767 = vmatprep.subr.bf16.mxu0 0
        %768 = vmatpush1.bf16.msra.mxu0 0
        %769 = vmatprep.subr.bf16.mxu0 0
        %770 = vmatpush1.bf16.msra.mxu0 0
        %771 = vmatprep.subr.bf16.mxu0 0
        %772 = vmatpush1.bf16.msra.mxu0 0
        %773 = vmatprep.subr.bf16.mxu0 0
        %774 = vmatpush1.bf16.msra.mxu0 0
        %775 = vmatprep.subr.bf16.mxu0 0
        %776 = vmatpush1.bf16.msra.mxu0 0
        %777 = vmatprep.subr.bf16.mxu0 0
        %778 = vmatpush1.bf16.msra.mxu0 %v762
        %779 = vmatprep.subr.bf16.mxu0 0
        %780 = vmatpush1.bf16.msra.mxu0 %v761
        %781 = vmatprep.subr.bf16.mxu0 0
        %782 = vmatpush2.bf16.msra.mxu0 0
        %783 = vmatprep.subr.bf16.mxu0 0
        %784 = vmatpush2.bf16.msra.mxu0 0
        %785 = vmatprep.subr.bf16.mxu0 0
        %786 = vmatpush2.bf16.msra.mxu0 0
        %787 = vmatprep.subr.bf16.mxu0 0
        %788 = vmatpush2.bf16.msra.mxu0 0
        %789 = vmatprep.subr.bf16.mxu0 0
        %790 = vmatpush2.bf16.msra.mxu0 0
        %791 = vmatprep.subr.bf16.mxu0 0
        %792 = vmatpush2.bf16.msra.mxu0 0
        %793 = vmatprep.subr.bf16.mxu0 0
        %794 = vmatpush2.bf16.msra.mxu0 0
        %795 = vmatprep.subr.bf16.mxu0 0
        %796 = vmatpush2.bf16.msra.mxu0 0
        %797 = vmatprep.mubr.bf16.mxu0 0
        %798 = vmatmul.mubr.bf16.gmra.mxu0 %v699
        %v799 = vpop.f32.mrf.mxu0
        %v800 = vadd.f32 %v751, %v799
        %v801 = vpop.f32.mrf.mxu0
        %v802 = vpop.f32.mrf.mxu0
        %v803 = vadd.f32 %v751, %v802
        %v804 = vpop.f32.mrf.mxu0
        %805 = vdwg.mxu0
        %v806 = vld [vmem:[%s5] sm:$0xf]
        %v807 = vld [vmem:[%s5 + $0x4] sm:$0xf]
        %v808 = vld [vmem:[%s5 + $0x8] sm:$0xf]
        %v809 = vld [vmem:[%s5 + $0xc] sm:$0xf]
        %v810 = vld [vmem:[#allocation10] sm:$0x1]
        %v812 = vlaneseq
        %v813 = vshrl.u32 %v812, 7
        %v814 = vsub.s32 0, %v813
        %v815 = vrot.slane %v810, %v814
        %v821 = vunpack.c.l.b16 %v806
        %v822 = vunpack.c.l.b16 %v807
        %v823 = vunpack.c.l.b16 %v808
        %v824 = vunpack.c.l.b16 %v809
        %v825 = vpack.c.b16 %v822, %v821
        %v826 = vpack.c.b16 %v824, %v823
        %829 = vmatprep.subr.bf16.mxu0 0
        %830 = vmatpush1.bf16.msra.mxu0 0
        %831 = vmatprep.subr.bf16.mxu0 0
        %832 = vmatpush1.bf16.msra.mxu0 0
        %833 = vmatprep.subr.bf16.mxu0 0
        %834 = vmatpush1.bf16.msra.mxu0 0
        %835 = vmatprep.subr.bf16.mxu0 0
        %836 = vmatpush1.bf16.msra.mxu0 0
        %837 = vmatprep.subr.bf16.mxu0 0
        %838 = vmatpush1.bf16.msra.mxu0 0
        %839 = vmatprep.subr.bf16.mxu0 0
        %840 = vmatpush1.bf16.msra.mxu0 0
        %841 = vmatprep.subr.bf16.mxu0 0
        %842 = vmatpush1.bf16.msra.mxu0 %v826
        %843 = vmatprep.subr.bf16.mxu0 0
        %844 = vmatpush1.bf16.msra.mxu0 %v825
        %845 = vmatprep.subr.bf16.mxu0 0
        %846 = vmatpush2.bf16.msra.mxu0 0
        %847 = vmatprep.subr.bf16.mxu0 0
        %848 = vmatpush2.bf16.msra.mxu0 0
        %849 = vmatprep.subr.bf16.mxu0 0
        %850 = vmatpush2.bf16.msra.mxu0 0
        %851 = vmatprep.subr.bf16.mxu0 0
        %852 = vmatpush2.bf16.msra.mxu0 0
        %853 = vmatprep.subr.bf16.mxu0 0
        %854 = vmatpush2.bf16.msra.mxu0 0
        %855 = vmatprep.subr.bf16.mxu0 0
        %856 = vmatpush2.bf16.msra.mxu0 0
        %857 = vmatprep.subr.bf16.mxu0 0
        %858 = vmatpush2.bf16.msra.mxu0 0
        %859 = vmatprep.subr.bf16.mxu0 0
        %860 = vmatpush2.bf16.msra.mxu0 0
        %861 = vmatprep.mubr.bf16.mxu0 0
        %862 = vmatmul.mubr.bf16.gmra.mxu0 %v699
        %v863 = vpop.f32.mrf.mxu0
        %v864 = vadd.f32 %v815, %v863
        %v865 = vpop.f32.mrf.mxu0
        %v866 = vpop.f32.mrf.mxu0
        %v867 = vadd.f32 %v815, %v866
        %v868 = vpop.f32.mrf.mxu0
        %869 = vdwg.mxu0
        %v870 = vmul.f32 %v736, 0.35355338
        %v871 = vmul.f32 %v739, 0.35355338
        %vm872 = vcmask 64512
        %v874 = vsel %vm872, %v870, 0
        %v877 = vsel %vm872, %v871, 0
        %v880 = vsel %vm872, %v800, 0
        %v883 = vsel %vm872, %v803, 0
        %885 = vmatprep.subr.mxu0 0.0
        %886 = vmatpush1.xpose.msra.mxu0 0.0
        %887 = vmatprep.subr.mxu0 0.0
        %888 = vmatpush1.xpose.msra.mxu0 0.0
        %889 = vmatprep.subr.mxu0 0.0
        %890 = vmatpush1.xpose.msra.mxu0 0.0
        %891 = vmatprep.subr.mxu0 0.0
        %892 = vmatpush1.xpose.msra.mxu0 0.0
        %893 = vmatprep.subr.mxu0 0.0
        %894 = vmatpush1.xpose.msra.mxu0 0.0
        %895 = vmatprep.subr.mxu0 0.0
        %896 = vmatpush1.xpose.msra.mxu0 0.0
        %897 = vmatprep.subr.mxu0 0.0
        %898 = vmatpush1.xpose.msra.mxu0 0.0
        %899 = vmatprep.subr.mxu0 0.0
        %900 = vmatpush1.xpose.msra.mxu0 0.0
        %901 = vmatprep.subr.mxu0 0.0
        %902 = vmatpush1.xpose.msra.mxu0 0.0
        %903 = vmatprep.subr.mxu0 0.0
        %904 = vmatpush1.xpose.msra.mxu0 0.0
        %905 = vmatprep.subr.mxu0 0.0
        %906 = vmatpush1.xpose.msra.mxu0 0.0
        %907 = vmatprep.subr.mxu0 0.0
        %908 = vmatpush1.xpose.msra.mxu0 0.0
        %909 = vmatprep.subr.mxu0 0.0
        %910 = vmatpush1.xpose.msra.mxu0 0.0
        %911 = vmatprep.subr.mxu0 0.0
        %912 = vmatpush1.xpose.msra.mxu0 0.0
        %913 = vmatprep.subr.mxu0 0.0
        %914 = vmatpush1.xpose.msra.mxu0 %v883
        %915 = vmatprep.subr.mxu0 0.0
        %916 = vmatpush1.xpose.msra.mxu0 %v880
        %917 = vmatprep.subr.mxu0 0.0
        %918 = vmatpush2.xpose.msra.mxu0 0.0
        %919 = vmatprep.subr.mxu0 0.0
        %920 = vmatpush2.xpose.msra.mxu0 0.0
        %921 = vmatprep.subr.mxu0 0.0
        %922 = vmatpush2.xpose.msra.mxu0 0.0
        %923 = vmatprep.subr.mxu0 0.0
        %924 = vmatpush2.xpose.msra.mxu0 0.0
        %925 = vmatprep.subr.mxu0 0.0
        %926 = vmatpush2.xpose.msra.mxu0 0.0
        %927 = vmatprep.subr.mxu0 0.0
        %928 = vmatpush2.xpose.msra.mxu0 0.0
        %929 = vmatprep.subr.mxu0 0.0
        %930 = vmatpush2.xpose.msra.mxu0 0.0
        %931 = vmatprep.subr.mxu0 0.0
        %932 = vmatpush2.xpose.msra.mxu0 0.0
        %933 = vmatprep.subr.mxu0 0.0
        %934 = vmatpush2.xpose.msra.mxu0 0.0
        %935 = vmatprep.subr.mxu0 0.0
        %936 = vmatpush2.xpose.msra.mxu0 0.0
        %937 = vmatprep.subr.mxu0 0.0
        %938 = vmatpush2.xpose.msra.mxu0 0.0
        %939 = vmatprep.subr.mxu0 0.0
        %940 = vmatpush2.xpose.msra.mxu0 0.0
        %941 = vmatprep.subr.mxu0 0.0
        %942 = vmatpush2.xpose.msra.mxu0 0.0
        %943 = vmatprep.subr.mxu0 0.0
        %944 = vmatpush2.xpose.msra.mxu0 0.0
        %945 = vmatprep.subr.mxu0 0.0
        %946 = vmatpush2.xpose.msra.mxu0 0.0
        %947 = vmatprep.subr.mxu0 0.0
        %948 = vmatpush2.xpose.msra.mxu0 0.0
        %949 = vmatprep.mubr.f32.mxu0 0.0
        %950 = vmatmul.mubr.f32.gmra.mxu0 %v874
        %v951 = vpop.f32.mrf.mxu0
        %v952 = vadd.f32 0.0, %v951
        %v953 = vpop.f32.mrf.mxu0
        %954 = vmatprep.mubr.f32.mxu0 0.0
        %955 = vmatmul.mubr.f32.gmra.mxu0 %v877
        %v956 = vpop.f32.mrf.mxu0
        %v957 = vadd.f32 0.0, %v956
        %v958 = vpop.f32.mrf.mxu0
        %959 = vdwg.mxu0
        %vm960 = vcmask 130048
        %v961 = vsel %vm960, %v952, -inf
        %962 = vmax.xlane.f32.xlu0 %v961
        %v963 = vpop.xlane.xlu0 %962
        %v964 = vsel %vm960, %v957, -inf
        %965 = vmax.xlane.f32.xlu0 %v964
        %v966 = vpop.xlane.xlu0 %965
        %v967 = vsub.f32 %v952, %v963
        %v968 = vsub.f32 %v957, %v966
        %v969 = vmul.f32 %v967, 1.442695
        %v970 = vpow.pop %v969
        %v971 = vmul.f32 %v968, 1.442695
        %v972 = vpow.pop %v971
        %v973 = vsel %vm960, %v970, 0.0
        %974 = vadd.xlane.f32.xlu0 %v973
        %v975 = vpop.xlane.xlu0 %974
        %v976 = vsel %vm960, %v972, 0.0
        %977 = vadd.xlane.f32.xlu0 %v976
        %v978 = vpop.xlane.xlu0 %977
        %v979 = vrcp.pop %v975
        %v980 = vrcp.pop %v978
        %v981 = vmul.f32 %v970, %v979
        %v982 = vmul.f32 %v972, %v980
        %v984 = vsel %vm960, %v981, 0
        %v987 = vsel %vm960, %v982, 0
        %989 = vmatprep.subr.mxu0 0.0
        %990 = vmatpush1.msra.mxu0 0.0
        %991 = vmatprep.subr.mxu0 0.0
        %992 = vmatpush1.msra.mxu0 0.0
        %993 = vmatprep.subr.mxu0 0.0
        %994 = vmatpush1.msra.mxu0 0.0
        %995 = vmatprep.subr.mxu0 0.0
        %996 = vmatpush1.msra.mxu0 0.0
        %997 = vmatprep.subr.mxu0 0.0
        %998 = vmatpush1.msra.mxu0 0.0
        %999 = vmatprep.subr.mxu0 0.0
        %1000 = vmatpush1.msra.mxu0 0.0
        %1001 = vmatprep.subr.mxu0 0.0
        %1002 = vmatpush1.msra.mxu0 0.0
        %1003 = vmatprep.subr.mxu0 0.0
        %1004 = vmatpush1.msra.mxu0 0.0
        %1005 = vmatprep.subr.mxu0 0.0
        %1006 = vmatpush1.msra.mxu0 0.0
        %1007 = vmatprep.subr.mxu0 0.0
        %1008 = vmatpush1.msra.mxu0 0.0
        %1009 = vmatprep.subr.mxu0 0.0
        %1010 = vmatpush1.msra.mxu0 0.0
        %1011 = vmatprep.subr.mxu0 0.0
        %1012 = vmatpush1.msra.mxu0 0.0
        %1013 = vmatprep.subr.mxu0 0.0
        %1014 = vmatpush1.msra.mxu0 0.0
        %1015 = vmatprep.subr.mxu0 0.0
        %1016 = vmatpush1.msra.mxu0 0.0
        %1017 = vmatprep.subr.mxu0 0.0
        %1018 = vmatpush1.msra.mxu0 %v867
        %1019 = vmatprep.subr.mxu0 0.0
        %1020 = vmatpush1.msra.mxu0 %v864
        %1021 = vmatprep.subr.mxu0 0.0
        %1022 = vmatpush2.msra.mxu0 0.0
        %1023 = vmatprep.subr.mxu0 0.0
        %1024 = vmatpush2.msra.mxu0 0.0
        %1025 = vmatprep.subr.mxu0 0.0
        %1026 = vmatpush2.msra.mxu0 0.0
        %1027 = vmatprep.subr.mxu0 0.0
        %1028 = vmatpush2.msra.mxu0 0.0
        %1029 = vmatprep.subr.mxu0 0.0
        %1030 = vmatpush2.msra.mxu0 0.0
        %1031 = vmatprep.subr.mxu0 0.0
        %1032 = vmatpush2.msra.mxu0 0.0
        %1033 = vmatprep.subr.mxu0 0.0
        %1034 = vmatpush2.msra.mxu0 0.0
        %1035 = vmatprep.subr.mxu0 0.0
        %1036 = vmatpush2.msra.mxu0 0.0
        %1037 = vmatprep.subr.mxu0 0.0
        %1038 = vmatpush2.msra.mxu0 0.0
        %1039 = vmatprep.subr.mxu0 0.0
        %1040 = vmatpush2.msra.mxu0 0.0
        %1041 = vmatprep.subr.mxu0 0.0
        %1042 = vmatpush2.msra.mxu0 0.0
        %1043 = vmatprep.subr.mxu0 0.0
        %1044 = vmatpush2.msra.mxu0 0.0
        %1045 = vmatprep.subr.mxu0 0.0
        %1046 = vmatpush2.msra.mxu0 0.0
        %1047 = vmatprep.subr.mxu0 0.0
        %1048 = vmatpush2.msra.mxu0 0.0
        %1049 = vmatprep.subr.mxu0 0.0
        %1050 = vmatpush2.msra.mxu0 0.0
        %1051 = vmatprep.subr.mxu0 0.0
        %1052 = vmatpush2.msra.mxu0 0.0
        %1053 = vmatprep.mubr.f32.mxu0 0.0
        %1054 = vmatmul.mubr.f32.gmra.mxu0 %v984
        %v1055 = vpop.f32.mrf.mxu0
        %v1056 = vadd.f32 0.0, %v1055
        %v1057 = vpop.f32.mrf.mxu0
        %1058 = vmatprep.mubr.f32.mxu0 0.0
        %1059 = vmatmul.mubr.f32.gmra.mxu0 %v987
        %v1060 = vpop.f32.mrf.mxu0
        %v1061 = vadd.f32 0.0, %v1060
        %v1062 = vpop.f32.mrf.mxu0
        %1063 = vdwg.mxu0
        %1064 = vrot.lane.b32.xlu0 %v870, 120
        %v1065 = vpop.permute.xlu0 %1064
        %1066 = vrot.lane.b32.xlu0 %v871, 120
        %v1067 = vpop.permute.xlu0 %1066
        %1068 = vrot.lane.b32.xlu0 %v800, 120
        %v1069 = vpop.permute.xlu0 %1068
        %1070 = vrot.lane.b32.xlu0 %v803, 120
        %v1071 = vpop.permute.xlu0 %1070
        %v1072 = vsel %vm872, %v1065, 0
        %v1074 = vsel %vm872, %v1067, 0
        %v1076 = vsel %vm872, %v1069, 0
        %v1078 = vsel %vm872, %v1071, 0
        %1080 = vmatprep.subr.mxu0 0.0
        %1081 = vmatpush1.xpose.msra.mxu0 0.0
        %1082 = vmatprep.subr.mxu0 0.0
        %1083 = vmatpush1.xpose.msra.mxu0 0.0
        %1084 = vmatprep.subr.mxu0 0.0
        %1085 = vmatpush1.xpose.msra.mxu0 0.0
        %1086 = vmatprep.subr.mxu0 0.0
        %1087 = vmatpush1.xpose.msra.mxu0 0.0
        %1088 = vmatprep.subr.mxu0 0.0
        %1089 = vmatpush1.xpose.msra.mxu0 0.0
        %1090 = vmatprep.subr.mxu0 0.0
        %1091 = vmatpush1.xpose.msra.mxu0 0.0
        %1092 = vmatprep.subr.mxu0 0.0
        %1093 = vmatpush1.xpose.msra.mxu0 0.0
        %1094 = vmatprep.subr.mxu0 0.0
        %1095 = vmatpush1.xpose.msra.mxu0 0.0
        %1096 = vmatprep.subr.mxu0 0.0
        %1097 = vmatpush1.xpose.msra.mxu0 0.0
        %1098 = vmatprep.subr.mxu0 0.0
        %1099 = vmatpush1.xpose.msra.mxu0 0.0
        %1100 = vmatprep.subr.mxu0 0.0
        %1101 = vmatpush1.xpose.msra.mxu0 0.0
        %1102 = vmatprep.subr.mxu0 0.0
        %1103 = vmatpush1.xpose.msra.mxu0 0.0
        %1104 = vmatprep.subr.mxu0 0.0
        %1105 = vmatpush1.xpose.msra.mxu0 0.0
        %1106 = vmatprep.subr.mxu0 0.0
        %1107 = vmatpush1.xpose.msra.mxu0 0.0
        %1108 = vmatprep.subr.mxu0 0.0
        %1109 = vmatpush1.xpose.msra.mxu0 %v1078
        %1110 = vmatprep.subr.mxu0 0.0
        %1111 = vmatpush1.xpose.msra.mxu0 %v1076
        %1112 = vmatprep.subr.mxu0 0.0
        %1113 = vmatpush2.xpose.msra.mxu0 0.0
        %1114 = vmatprep.subr.mxu0 0.0
        %1115 = vmatpush2.xpose.msra.mxu0 0.0
        %1116 = vmatprep.subr.mxu0 0.0
        %1117 = vmatpush2.xpose.msra.mxu0 0.0
        %1118 = vmatprep.subr.mxu0 0.0
        %1119 = vmatpush2.xpose.msra.mxu0 0.0
        %1120 = vmatprep.subr.mxu0 0.0
        %1121 = vmatpush2.xpose.msra.mxu0 0.0
        %1122 = vmatprep.subr.mxu0 0.0
        %1123 = vmatpush2.xpose.msra.mxu0 0.0
        %1124 = vmatprep.subr.mxu0 0.0
        %1125 = vmatpush2.xpose.msra.mxu0 0.0
        %1126 = vmatprep.subr.mxu0 0.0
        %1127 = vmatpush2.xpose.msra.mxu0 0.0
        %1128 = vmatprep.subr.mxu0 0.0
        %1129 = vmatpush2.xpose.msra.mxu0 0.0
        %1130 = vmatprep.subr.mxu0 0.0
        %1131 = vmatpush2.xpose.msra.mxu0 0.0
        %1132 = vmatprep.subr.mxu0 0.0
        %1133 = vmatpush2.xpose.msra.mxu0 0.0
        %1134 = vmatprep.subr.mxu0 0.0
        %1135 = vmatpush2.xpose.msra.mxu0 0.0
        %1136 = vmatprep.subr.mxu0 0.0
        %1137 = vmatpush2.xpose.msra.mxu0 0.0
        %1138 = vmatprep.subr.mxu0 0.0
        %1139 = vmatpush2.xpose.msra.mxu0 0.0
        %1140 = vmatprep.subr.mxu0 0.0
        %1141 = vmatpush2.xpose.msra.mxu0 0.0
        %1142 = vmatprep.subr.mxu0 0.0
        %1143 = vmatpush2.xpose.msra.mxu0 0.0
        %1144 = vmatprep.mubr.f32.mxu0 0.0
        %1145 = vmatmul.mubr.f32.gmra.mxu0 %v1072
        %v1146 = vpop.f32.mrf.mxu0
        %v1147 = vadd.f32 0.0, %v1146
        %v1148 = vpop.f32.mrf.mxu0
        %1149 = vmatprep.mubr.f32.mxu0 0.0
        %1150 = vmatmul.mubr.f32.gmra.mxu0 %v1074
        %v1151 = vpop.f32.mrf.mxu0
        %v1152 = vadd.f32 0.0, %v1151
        %v1153 = vpop.f32.mrf.mxu0
        %1154 = vdwg.mxu0
        %v1155 = vsel %vm960, %v1147, -inf
        %1156 = vmax.xlane.f32.xlu0 %v1155
        %v1157 = vpop.xlane.xlu0 %1156
        %v1158 = vsel %vm960, %v1152, -inf
        %1159 = vmax.xlane.f32.xlu0 %v1158
        %v1160 = vpop.xlane.xlu0 %1159
        %v1161 = vsub.f32 %v1147, %v1157
        %v1162 = vsub.f32 %v1152, %v1160
        %v1163 = vmul.f32 %v1161, 1.442695
        %v1164 = vpow.pop %v1163
        %v1165 = vmul.f32 %v1162, 1.442695
        %v1166 = vpow.pop %v1165
        %v1167 = vsel %vm960, %v1164, 0.0
        %1168 = vadd.xlane.f32.xlu0 %v1167
        %v1169 = vpop.xlane.xlu0 %1168
        %v1170 = vsel %vm960, %v1166, 0.0
        %1171 = vadd.xlane.f32.xlu0 %v1170
        %v1172 = vpop.xlane.xlu0 %1171
        %v1173 = vrcp.pop %v1169
        %v1174 = vrcp.pop %v1172
        %v1175 = vmul.f32 %v1164, %v1173
        %v1176 = vmul.f32 %v1166, %v1174
        %1179 = vrot.lane.b32.xlu0 %v864, 120
        %v1180 = vpop.permute.xlu0 %1179
        %1181 = vrot.lane.b32.xlu0 %v867, 120
        %v1182 = vpop.permute.xlu0 %1181
        %v1186 = vsel %vm960, %v1175, 0
        %v1189 = vsel %vm960, %v1176, 0
        %1191 = vmatprep.subr.mxu0 0.0
        %1192 = vmatpush1.msra.mxu0 0.0
        %1193 = vmatprep.subr.mxu0 0.0
        %1194 = vmatpush1.msra.mxu0 0.0
        %1195 = vmatprep.subr.mxu0 0.0
        %1196 = vmatpush1.msra.mxu0 0.0
        %1197 = vmatprep.subr.mxu0 0.0
        %1198 = vmatpush1.msra.mxu0 0.0
        %1199 = vmatprep.subr.mxu0 0.0
        %1200 = vmatpush1.msra.mxu0 0.0
        %1201 = vmatprep.subr.mxu0 0.0
        %1202 = vmatpush1.msra.mxu0 0.0
        %1203 = vmatprep.subr.mxu0 0.0
        %1204 = vmatpush1.msra.mxu0 0.0
        %1205 = vmatprep.subr.mxu0 0.0
        %1206 = vmatpush1.msra.mxu0 0.0
        %1207 = vmatprep.subr.mxu0 0.0
        %1208 = vmatpush1.msra.mxu0 0.0
        %1209 = vmatprep.subr.mxu0 0.0
        %1210 = vmatpush1.msra.mxu0 0.0
        %1211 = vmatprep.subr.mxu0 0.0
        %1212 = vmatpush1.msra.mxu0 0.0
        %1213 = vmatprep.subr.mxu0 0.0
        %1214 = vmatpush1.msra.mxu0 0.0
        %1215 = vmatprep.subr.mxu0 0.0
        %1216 = vmatpush1.msra.mxu0 0.0
        %1217 = vmatprep.subr.mxu0 0.0
        %1218 = vmatpush1.msra.mxu0 0.0
        %1219 = vmatprep.subr.mxu0 0.0
        %1220 = vmatpush1.msra.mxu0 %v1182
        %1221 = vmatprep.subr.mxu0 0.0
        %1222 = vmatpush1.msra.mxu0 %v1180
        %1223 = vmatprep.subr.mxu0 0.0
        %1224 = vmatpush2.msra.mxu0 0.0
        %1225 = vmatprep.subr.mxu0 0.0
        %1226 = vmatpush2.msra.mxu0 0.0
        %1227 = vmatprep.subr.mxu0 0.0
        %1228 = vmatpush2.msra.mxu0 0.0
        %1229 = vmatprep.subr.mxu0 0.0
        %1230 = vmatpush2.msra.mxu0 0.0
        %1231 = vmatprep.subr.mxu0 0.0
        %1232 = vmatpush2.msra.mxu0 0.0
        %1233 = vmatprep.subr.mxu0 0.0
        %1234 = vmatpush2.msra.mxu0 0.0
        %1235 = vmatprep.subr.mxu0 0.0
        %1236 = vmatpush2.msra.mxu0 0.0
        %1237 = vmatprep.subr.mxu0 0.0
        %1238 = vmatpush2.msra.mxu0 0.0
        %1239 = vmatprep.subr.mxu0 0.0
        %1240 = vmatpush2.msra.mxu0 0.0
        %1241 = vmatprep.subr.mxu0 0.0
        %1242 = vmatpush2.msra.mxu0 0.0
        %1243 = vmatprep.subr.mxu0 0.0
        %1244 = vmatpush2.msra.mxu0 0.0
        %1245 = vmatprep.subr.mxu0 0.0
        %1246 = vmatpush2.msra.mxu0 0.0
        %1247 = vmatprep.subr.mxu0 0.0
        %1248 = vmatpush2.msra.mxu0 0.0
        %1249 = vmatprep.subr.mxu0 0.0
        %1250 = vmatpush2.msra.mxu0 0.0
        %1251 = vmatprep.subr.mxu0 0.0
        %1252 = vmatpush2.msra.mxu0 0.0
        %1253 = vmatprep.subr.mxu0 0.0
        %1254 = vmatpush2.msra.mxu0 0.0
        %1255 = vmatprep.mubr.f32.mxu0 0.0
        %1256 = vmatmul.mubr.f32.gmra.mxu0 %v1186
        %v1257 = vpop.f32.mrf.mxu0
        %v1258 = vadd.f32 0.0, %v1257
        %v1259 = vpop.f32.mrf.mxu0
        %1260 = vmatprep.mubr.f32.mxu0 0.0
        %1261 = vmatmul.mubr.f32.gmra.mxu0 %v1189
        %v1262 = vpop.f32.mrf.mxu0
        %v1263 = vadd.f32 0.0, %v1262
        %v1264 = vpop.f32.mrf.mxu0
        %1265 = vdwg.mxu0
        %1266 = vrot.lane.b32.xlu0 %v870, 112
        %v1267 = vpop.permute.xlu0 %1266
        %1268 = vrot.lane.b32.xlu0 %v871, 112
        %v1269 = vpop.permute.xlu0 %1268
        %1270 = vrot.lane.b32.xlu0 %v800, 112
        %v1271 = vpop.permute.xlu0 %1270
        %1272 = vrot.lane.b32.xlu0 %v803, 112
        %v1273 = vpop.permute.xlu0 %1272
        %v1274 = vsel %vm872, %v1267, 0
        %v1276 = vsel %vm872, %v1269, 0
        %v1278 = vsel %vm872, %v1271, 0
        %v1280 = vsel %vm872, %v1273, 0
        %1282 = vmatprep.subr.mxu0 0.0
        %1283 = vmatpush1.xpose.msra.mxu0 0.0
        %1284 = vmatprep.subr.mxu0 0.0
        %1285 = vmatpush1.xpose.msra.mxu0 0.0
        %1286 = vmatprep.subr.mxu0 0.0
        %1287 = vmatpush1.xpose.msra.mxu0 0.0
        %1288 = vmatprep.subr.mxu0 0.0
        %1289 = vmatpush1.xpose.msra.mxu0 0.0
        %1290 = vmatprep.subr.mxu0 0.0
        %1291 = vmatpush1.xpose.msra.mxu0 0.0
        %1292 = vmatprep.subr.mxu0 0.0
        %1293 = vmatpush1.xpose.msra.mxu0 0.0
        %1294 = vmatprep.subr.mxu0 0.0
        %1295 = vmatpush1.xpose.msra.mxu0 0.0
        %1296 = vmatprep.subr.mxu0 0.0
        %1297 = vmatpush1.xpose.msra.mxu0 0.0
        %1298 = vmatprep.subr.mxu0 0.0
        %1299 = vmatpush1.xpose.msra.mxu0 0.0
        %1300 = vmatprep.subr.mxu0 0.0
        %1301 = vmatpush1.xpose.msra.mxu0 0.0
        %1302 = vmatprep.subr.mxu0 0.0
        %1303 = vmatpush1.xpose.msra.mxu0 0.0
        %1304 = vmatprep.subr.mxu0 0.0
        %1305 = vmatpush1.xpose.msra.mxu0 0.0
        %1306 = vmatprep.subr.mxu0 0.0
        %1307 = vmatpush1.xpose.msra.mxu0 0.0
        %1308 = vmatprep.subr.mxu0 0.0
        %1309 = vmatpush1.xpose.msra.mxu0 0.0
        %1310 = vmatprep.subr.mxu0 0.0
        %1311 = vmatpush1.xpose.msra.mxu0 %v1280
        %1312 = vmatprep.subr.mxu0 0.0
        %1313 = vmatpush1.xpose.msra.mxu0 %v1278
        %1314 = vmatprep.subr.mxu0 0.0
        %1315 = vmatpush2.xpose.msra.mxu0 0.0
        %1316 = vmatprep.subr.mxu0 0.0
        %1317 = vmatpush2.xpose.msra.mxu0 0.0
        %1318 = vmatprep.subr.mxu0 0.0
        %1319 = vmatpush2.xpose.msra.mxu0 0.0
        %1320 = vmatprep.subr.mxu0 0.0
        %1321 = vmatpush2.xpose.msra.mxu0 0.0
        %1322 = vmatprep.subr.mxu0 0.0
        %1323 = vmatpush2.xpose.msra.mxu0 0.0
        %1324 = vmatprep.subr.mxu0 0.0
        %1325 = vmatpush2.xpose.msra.mxu0 0.0
        %1326 = vmatprep.subr.mxu0 0.0
        %1327 = vmatpush2.xpose.msra.mxu0 0.0
        %1328 = vmatprep.subr.mxu0 0.0
        %1329 = vmatpush2.xpose.msra.mxu0 0.0
        %1330 = vmatprep.subr.mxu0 0.0
        %1331 = vmatpush2.xpose.msra.mxu0 0.0
        %1332 = vmatprep.subr.mxu0 0.0
        %1333 = vmatpush2.xpose.msra.mxu0 0.0
        %1334 = vmatprep.subr.mxu0 0.0
        %1335 = vmatpush2.xpose.msra.mxu0 0.0
        %1336 = vmatprep.subr.mxu0 0.0
        %1337 = vmatpush2.xpose.msra.mxu0 0.0
        %1338 = vmatprep.subr.mxu0 0.0
        %1339 = vmatpush2.xpose.msra.mxu0 0.0
        %1340 = vmatprep.subr.mxu0 0.0
        %1341 = vmatpush2.xpose.msra.mxu0 0.0
        %1342 = vmatprep.subr.mxu0 0.0
        %1343 = vmatpush2.xpose.msra.mxu0 0.0
        %1344 = vmatprep.subr.mxu0 0.0
        %1345 = vmatpush2.xpose.msra.mxu0 0.0
        %1346 = vmatprep.mubr.f32.mxu0 0.0
        %1347 = vmatmul.mubr.f32.gmra.mxu0 %v1274
        %v1348 = vpop.f32.mrf.mxu0
        %v1349 = vadd.f32 0.0, %v1348
        %v1350 = vpop.f32.mrf.mxu0
        %1351 = vmatprep.mubr.f32.mxu0 0.0
        %1352 = vmatmul.mubr.f32.gmra.mxu0 %v1276
        %v1353 = vpop.f32.mrf.mxu0
        %v1354 = vadd.f32 0.0, %v1353
        %v1355 = vpop.f32.mrf.mxu0
        %1356 = vdwg.mxu0
        %v1357 = vsel %vm960, %v1349, -inf
        %1358 = vmax.xlane.f32.xlu0 %v1357
        %v1359 = vpop.xlane.xlu0 %1358
        %v1360 = vsel %vm960, %v1354, -inf
        %1361 = vmax.xlane.f32.xlu0 %v1360
        %v1362 = vpop.xlane.xlu0 %1361
        %v1363 = vsub.f32 %v1349, %v1359
        %v1364 = vsub.f32 %v1354, %v1362
        %v1365 = vmul.f32 %v1363, 1.442695
        %v1366 = vpow.pop %v1365
        %v1367 = vmul.f32 %v1364, 1.442695
        %v1368 = vpow.pop %v1367
        %v1369 = vsel %vm960, %v1366, 0.0
        %1370 = vadd.xlane.f32.xlu0 %v1369
        %v1371 = vpop.xlane.xlu0 %1370
        %v1372 = vsel %vm960, %v1368, 0.0
        %1373 = vadd.xlane.f32.xlu0 %v1372
        %v1374 = vpop.xlane.xlu0 %1373
        %v1375 = vrcp.pop %v1371
        %v1376 = vrcp.pop %v1374
        %v1377 = vmul.f32 %v1366, %v1375
        %v1378 = vmul.f32 %v1368, %v1376
        %1379 = vrot.lane.b32.xlu0 %v864, 112
        %v1380 = vpop.permute.xlu0 %1379
        %1381 = vrot.lane.b32.xlu0 %v867, 112
        %v1382 = vpop.permute.xlu0 %1381
        %v1386 = vsel %vm960, %v1377, 0
        %v1389 = vsel %vm960, %v1378, 0
        %1391 = vmatprep.subr.mxu0 0.0
        %1392 = vmatpush1.msra.mxu0 0.0
        %1393 = vmatprep.subr.mxu0 0.0
        %1394 = vmatpush1.msra.mxu0 0.0
        %1395 = vmatprep.subr.mxu0 0.0
        %1396 = vmatpush1.msra.mxu0 0.0
        %1397 = vmatprep.subr.mxu0 0.0
        %1398 = vmatpush1.msra.mxu0 0.0
        %1399 = vmatprep.subr.mxu0 0.0
        %1400 = vmatpush1.msra.mxu0 0.0
        %1401 = vmatprep.subr.mxu0 0.0
        %1402 = vmatpush1.msra.mxu0 0.0
        %1403 = vmatprep.subr.mxu0 0.0
        %1404 = vmatpush1.msra.mxu0 0.0
        %1405 = vmatprep.subr.mxu0 0.0
        %1406 = vmatpush1.msra.mxu0 0.0
        %1407 = vmatprep.subr.mxu0 0.0
        %1408 = vmatpush1.msra.mxu0 0.0
        %1409 = vmatprep.subr.mxu0 0.0
        %1410 = vmatpush1.msra.mxu0 0.0
        %1411 = vmatprep.subr.mxu0 0.0
        %1412 = vmatpush1.msra.mxu0 0.0
        %1413 = vmatprep.subr.mxu0 0.0
        %1414 = vmatpush1.msra.mxu0 0.0
        %1415 = vmatprep.subr.mxu0 0.0
        %1416 = vmatpush1.msra.mxu0 0.0
        %1417 = vmatprep.subr.mxu0 0.0
        %1418 = vmatpush1.msra.mxu0 0.0
        %1419 = vmatprep.subr.mxu0 0.0
        %1420 = vmatpush1.msra.mxu0 %v1382
        %1421 = vmatprep.subr.mxu0 0.0
        %1422 = vmatpush1.msra.mxu0 %v1380
        %1423 = vmatprep.subr.mxu0 0.0
        %1424 = vmatpush2.msra.mxu0 0.0
        %1425 = vmatprep.subr.mxu0 0.0
        %1426 = vmatpush2.msra.mxu0 0.0
        %1427 = vmatprep.subr.mxu0 0.0
        %1428 = vmatpush2.msra.mxu0 0.0
        %1429 = vmatprep.subr.mxu0 0.0
        %1430 = vmatpush2.msra.mxu0 0.0
        %1431 = vmatprep.subr.mxu0 0.0
        %1432 = vmatpush2.msra.mxu0 0.0
        %1433 = vmatprep.subr.mxu0 0.0
        %1434 = vmatpush2.msra.mxu0 0.0
        %1435 = vmatprep.subr.mxu0 0.0
        %1436 = vmatpush2.msra.mxu0 0.0
        %1437 = vmatprep.subr.mxu0 0.0
        %1438 = vmatpush2.msra.mxu0 0.0
        %1439 = vmatprep.subr.mxu0 0.0
        %1440 = vmatpush2.msra.mxu0 0.0
        %1441 = vmatprep.subr.mxu0 0.0
        %1442 = vmatpush2.msra.mxu0 0.0
        %1443 = vmatprep.subr.mxu0 0.0
        %1444 = vmatpush2.msra.mxu0 0.0
        %1445 = vmatprep.subr.mxu0 0.0
        %1446 = vmatpush2.msra.mxu0 0.0
        %1447 = vmatprep.subr.mxu0 0.0
        %1448 = vmatpush2.msra.mxu0 0.0
        %1449 = vmatprep.subr.mxu0 0.0
        %1450 = vmatpush2.msra.mxu0 0.0
        %1451 = vmatprep.subr.mxu0 0.0
        %1452 = vmatpush2.msra.mxu0 0.0
        %1453 = vmatprep.subr.mxu0 0.0
        %1454 = vmatpush2.msra.mxu0 0.0
        %1455 = vmatprep.mubr.f32.mxu0 0.0
        %1456 = vmatmul.mubr.f32.gmra.mxu0 %v1386
        %v1457 = vpop.f32.mrf.mxu0
        %v1458 = vadd.f32 0.0, %v1457
        %v1459 = vpop.f32.mrf.mxu0
        %1460 = vmatprep.mubr.f32.mxu0 0.0
        %1461 = vmatmul.mubr.f32.gmra.mxu0 %v1389
        %v1462 = vpop.f32.mrf.mxu0
        %v1463 = vadd.f32 0.0, %v1462
        %v1464 = vpop.f32.mrf.mxu0
        %1465 = vdwg.mxu0
        %1466 = vrot.lane.b32.xlu0 %v870, 104
        %v1467 = vpop.permute.xlu0 %1466
        %1468 = vrot.lane.b32.xlu0 %v871, 104
        %v1469 = vpop.permute.xlu0 %1468
        %1470 = vrot.lane.b32.xlu0 %v800, 104
        %v1471 = vpop.permute.xlu0 %1470
        %1472 = vrot.lane.b32.xlu0 %v803, 104
        %v1473 = vpop.permute.xlu0 %1472
        %v1474 = vsel %vm872, %v1467, 0
        %v1476 = vsel %vm872, %v1469, 0
        %v1478 = vsel %vm872, %v1471, 0
        %v1480 = vsel %vm872, %v1473, 0
        %1482 = vmatprep.subr.mxu0 0.0
        %1483 = vmatpush1.xpose.msra.mxu0 0.0
        %1484 = vmatprep.subr.mxu0 0.0
        %1485 = vmatpush1.xpose.msra.mxu0 0.0
        %1486 = vmatprep.subr.mxu0 0.0
        %1487 = vmatpush1.xpose.msra.mxu0 0.0
        %1488 = vmatprep.subr.mxu0 0.0
        %1489 = vmatpush1.xpose.msra.mxu0 0.0
        %1490 = vmatprep.subr.mxu0 0.0
        %1491 = vmatpush1.xpose.msra.mxu0 0.0
        %1492 = vmatprep.subr.mxu0 0.0
        %1493 = vmatpush1.xpose.msra.mxu0 0.0
        %1494 = vmatprep.subr.mxu0 0.0
        %1495 = vmatpush1.xpose.msra.mxu0 0.0
        %1496 = vmatprep.subr.mxu0 0.0
        %1497 = vmatpush1.xpose.msra.mxu0 0.0
        %1498 = vmatprep.subr.mxu0 0.0
        %1499 = vmatpush1.xpose.msra.mxu0 0.0
        %1500 = vmatprep.subr.mxu0 0.0
        %1501 = vmatpush1.xpose.msra.mxu0 0.0
        %1502 = vmatprep.subr.mxu0 0.0
        %1503 = vmatpush1.xpose.msra.mxu0 0.0
        %1504 = vmatprep.subr.mxu0 0.0
        %1505 = vmatpush1.xpose.msra.mxu0 0.0
        %1506 = vmatprep.subr.mxu0 0.0
        %1507 = vmatpush1.xpose.msra.mxu0 0.0
        %1508 = vmatprep.subr.mxu0 0.0
        %1509 = vmatpush1.xpose.msra.mxu0 0.0
        %1510 = vmatprep.subr.mxu0 0.0
        %1511 = vmatpush1.xpose.msra.mxu0 %v1480
        %1512 = vmatprep.subr.mxu0 0.0
        %1513 = vmatpush1.xpose.msra.mxu0 %v1478
        %1514 = vmatprep.subr.mxu0 0.0
        %1515 = vmatpush2.xpose.msra.mxu0 0.0
        %1516 = vmatprep.subr.mxu0 0.0
        %1517 = vmatpush2.xpose.msra.mxu0 0.0
        %1518 = vmatprep.subr.mxu0 0.0
        %1519 = vmatpush2.xpose.msra.mxu0 0.0
        %1520 = vmatprep.subr.mxu0 0.0
        %1521 = vmatpush2.xpose.msra.mxu0 0.0
        %1522 = vmatprep.subr.mxu0 0.0
        %1523 = vmatpush2.xpose.msra.mxu0 0.0
        %1524 = vmatprep.subr.mxu0 0.0
        %1525 = vmatpush2.xpose.msra.mxu0 0.0
        %1526 = vmatprep.subr.mxu0 0.0
        %1527 = vmatpush2.xpose.msra.mxu0 0.0
        %1528 = vmatprep.subr.mxu0 0.0
        %1529 = vmatpush2.xpose.msra.mxu0 0.0
        %1530 = vmatprep.subr.mxu0 0.0
        %1531 = vmatpush2.xpose.msra.mxu0 0.0
        %1532 = vmatprep.subr.mxu0 0.0
        %1533 = vmatpush2.xpose.msra.mxu0 0.0
        %1534 = vmatprep.subr.mxu0 0.0
        %1535 = vmatpush2.xpose.msra.mxu0 0.0
        %1536 = vmatprep.subr.mxu0 0.0
        %1537 = vmatpush2.xpose.msra.mxu0 0.0
        %1538 = vmatprep.subr.mxu0 0.0
        %1539 = vmatpush2.xpose.msra.mxu0 0.0
        %1540 = vmatprep.subr.mxu0 0.0
        %1541 = vmatpush2.xpose.msra.mxu0 0.0
        %1542 = vmatprep.subr.mxu0 0.0
        %1543 = vmatpush2.xpose.msra.mxu0 0.0
        %1544 = vmatprep.subr.mxu0 0.0
        %1545 = vmatpush2.xpose.msra.mxu0 0.0
        %1546 = vmatprep.mubr.f32.mxu0 0.0
        %1547 = vmatmul.mubr.f32.gmra.mxu0 %v1474
        %v1548 = vpop.f32.mrf.mxu0
        %v1549 = vadd.f32 0.0, %v1548
        %v1550 = vpop.f32.mrf.mxu0
        %1551 = vmatprep.mubr.f32.mxu0 0.0
        %1552 = vmatmul.mubr.f32.gmra.mxu0 %v1476
        %v1553 = vpop.f32.mrf.mxu0
        %v1554 = vadd.f32 0.0, %v1553
        %v1555 = vpop.f32.mrf.mxu0
        %1556 = vdwg.mxu0
        %v1557 = vsel %vm960, %v1549, -inf
        %1558 = vmax.xlane.f32.xlu0 %v1557
        %v1559 = vpop.xlane.xlu0 %1558
        %v1560 = vsel %vm960, %v1554, -inf
        %1561 = vmax.xlane.f32.xlu0 %v1560
        %v1562 = vpop.xlane.xlu0 %1561
        %v1563 = vsub.f32 %v1549, %v1559
        %v1564 = vsub.f32 %v1554, %v1562
        %v1565 = vmul.f32 %v1563, 1.442695
        %v1566 = vpow.pop %v1565
        %v1567 = vmul.f32 %v1564, 1.442695
        %v1568 = vpow.pop %v1567
        %v1569 = vsel %vm960, %v1566, 0.0
        %1570 = vadd.xlane.f32.xlu0 %v1569
        %v1571 = vpop.xlane.xlu0 %1570
        %v1572 = vsel %vm960, %v1568, 0.0
        %1573 = vadd.xlane.f32.xlu0 %v1572
        %v1574 = vpop.xlane.xlu0 %1573
        %v1575 = vrcp.pop %v1571
        %v1576 = vrcp.pop %v1574
        %v1577 = vmul.f32 %v1566, %v1575
        %v1578 = vmul.f32 %v1568, %v1576
        %1579 = vrot.lane.b32.xlu0 %v864, 104
        %v1580 = vpop.permute.xlu0 %1579
        %1581 = vrot.lane.b32.xlu0 %v867, 104
        %v1582 = vpop.permute.xlu0 %1581
        %v1586 = vsel %vm960, %v1577, 0
        %v1589 = vsel %vm960, %v1578, 0
        %1591 = vmatprep.subr.mxu0 0.0
        %1592 = vmatpush1.msra.mxu0 0.0
        %1593 = vmatprep.subr.mxu0 0.0
        %1594 = vmatpush1.msra.mxu0 0.0
        %1595 = vmatprep.subr.mxu0 0.0
        %1596 = vmatpush1.msra.mxu0 0.0
        %1597 = vmatprep.subr.mxu0 0.0
        %1598 = vmatpush1.msra.mxu0 0.0
        %1599 = vmatprep.subr.mxu0 0.0
        %1600 = vmatpush1.msra.mxu0 0.0
        %1601 = vmatprep.subr.mxu0 0.0
        %1602 = vmatpush1.msra.mxu0 0.0
        %1603 = vmatprep.subr.mxu0 0.0
        %1604 = vmatpush1.msra.mxu0 0.0
        %1605 = vmatprep.subr.mxu0 0.0
        %1606 = vmatpush1.msra.mxu0 0.0
        %1607 = vmatprep.subr.mxu0 0.0
        %1608 = vmatpush1.msra.mxu0 0.0
        %1609 = vmatprep.subr.mxu0 0.0
        %1610 = vmatpush1.msra.mxu0 0.0
        %1611 = vmatprep.subr.mxu0 0.0
        %1612 = vmatpush1.msra.mxu0 0.0
        %1613 = vmatprep.subr.mxu0 0.0
        %1614 = vmatpush1.msra.mxu0 0.0
        %1615 = vmatprep.subr.mxu0 0.0
        %1616 = vmatpush1.msra.mxu0 0.0
        %1617 = vmatprep.subr.mxu0 0.0
        %1618 = vmatpush1.msra.mxu0 0.0
        %1619 = vmatprep.subr.mxu0 0.0
        %1620 = vmatpush1.msra.mxu0 %v1582
        %1621 = vmatprep.subr.mxu0 0.0
        %1622 = vmatpush1.msra.mxu0 %v1580
        %1623 = vmatprep.subr.mxu0 0.0
        %1624 = vmatpush2.msra.mxu0 0.0
        %1625 = vmatprep.subr.mxu0 0.0
        %1626 = vmatpush2.msra.mxu0 0.0
        %1627 = vmatprep.subr.mxu0 0.0
        %1628 = vmatpush2.msra.mxu0 0.0
        %1629 = vmatprep.subr.mxu0 0.0
        %1630 = vmatpush2.msra.mxu0 0.0
        %1631 = vmatprep.subr.mxu0 0.0
        %1632 = vmatpush2.msra.mxu0 0.0
        %1633 = vmatprep.subr.mxu0 0.0
        %1634 = vmatpush2.msra.mxu0 0.0
        %1635 = vmatprep.subr.mxu0 0.0
        %1636 = vmatpush2.msra.mxu0 0.0
        %1637 = vmatprep.subr.mxu0 0.0
        %1638 = vmatpush2.msra.mxu0 0.0
        %1639 = vmatprep.subr.mxu0 0.0
        %1640 = vmatpush2.msra.mxu0 0.0
        %1641 = vmatprep.subr.mxu0 0.0
        %1642 = vmatpush2.msra.mxu0 0.0
        %1643 = vmatprep.subr.mxu0 0.0
        %1644 = vmatpush2.msra.mxu0 0.0
        %1645 = vmatprep.subr.mxu0 0.0
        %1646 = vmatpush2.msra.mxu0 0.0
        %1647 = vmatprep.subr.mxu0 0.0
        %1648 = vmatpush2.msra.mxu0 0.0
        %1649 = vmatprep.subr.mxu0 0.0
        %1650 = vmatpush2.msra.mxu0 0.0
        %1651 = vmatprep.subr.mxu0 0.0
        %1652 = vmatpush2.msra.mxu0 0.0
        %1653 = vmatprep.subr.mxu0 0.0
        %1654 = vmatpush2.msra.mxu0 0.0
        %1655 = vmatprep.mubr.f32.mxu0 0.0
        %1656 = vmatmul.mubr.f32.gmra.mxu0 %v1586
        %v1657 = vpop.f32.mrf.mxu0
        %v1658 = vadd.f32 0.0, %v1657
        %v1659 = vpop.f32.mrf.mxu0
        %1660 = vmatprep.mubr.f32.mxu0 0.0
        %1661 = vmatmul.mubr.f32.gmra.mxu0 %v1589
        %v1662 = vpop.f32.mrf.mxu0
        %v1663 = vadd.f32 0.0, %v1662
        %v1664 = vpop.f32.mrf.mxu0
        %1665 = vdwg.mxu0
        %1668 = vrot.lane.b32.xlu0 %v1258, 8
        %v1669 = vpop.permute.xlu0 %1668
        %1670 = vrot.lane.b32.xlu0 %v1263, 8
        %v1671 = vpop.permute.xlu0 %1670
        %1676 = vrot.lane.b32.xlu0 %v1458, 16
        %v1677 = vpop.permute.xlu0 %1676
        %1678 = vrot.lane.b32.xlu0 %v1463, 16
        %v1679 = vpop.permute.xlu0 %1678
        %1684 = vrot.lane.b32.xlu0 %v1658, 24
        %v1685 = vpop.permute.xlu0 %1684
        %1686 = vrot.lane.b32.xlu0 %v1663, 24
        %v1687 = vpop.permute.xlu0 %1686
        %v1690 = vsel %vm872, %v1056, %v1669
        %v1691 = vsel %vm872, %v1061, %v1671
        %v1692 = vsel %vm960, %v1690, %v1677
        %v1693 = vsel %vm960, %v1691, %v1679
        %vm1694 = vcmask 195584
        %v1695 = vsel %vm1694, %v1692, %v1685
        %v1696 = vsel %vm1694, %v1693, %v1687
        %v1697 = vpack.c.bf16 %v1696, %v1695
        %v1698 = vld [vmem:[%s9] sm:$0xf]
        %v1699 = vld [vmem:[%s9 + $0x4] sm:$0xf]
        %v1700 = vld [vmem:[%s9 + $0x8] sm:$0xf]
        %v1701 = vld [vmem:[%s9 + $0xc] sm:$0xf]
        %v1702 = vld [vmem:[%s10] sm:$0x1]
        %v1704 = vlaneseq
        %v1705 = vshrl.u32 %v1704, 7
        %v1706 = vsub.s32 0, %v1705
        %v1707 = vrot.slane %v1702, %v1706
        %v1713 = vunpack.c.l.b16 %v1698
        %v1714 = vunpack.c.l.b16 %v1699
        %v1715 = vunpack.c.l.b16 %v1700
        %v1716 = vunpack.c.l.b16 %v1701
        %v1717 = vpack.c.b16 %v1714, %v1713
        %v1718 = vpack.c.b16 %v1716, %v1715
        %v1722 = vsel %vm630, %v1697, 0
        %1724 = vmatprep.subr.bf16.mxu0 0
        %1725 = vmatpush1.bf16.msra.mxu0 0
        %1726 = vmatprep.subr.bf16.mxu0 0
        %1727 = vmatpush1.bf16.msra.mxu0 0
        %1728 = vmatprep.subr.bf16.mxu0 0
        %1729 = vmatpush1.bf16.msra.mxu0 0
        %1730 = vmatprep.subr.bf16.mxu0 0
        %1731 = vmatpush1.bf16.msra.mxu0 0
        %1732 = vmatprep.subr.bf16.mxu0 0
        %1733 = vmatpush1.bf16.msra.mxu0 0
        %1734 = vmatprep.subr.bf16.mxu0 0
        %1735 = vmatpush1.bf16.msra.mxu0 0
        %1736 = vmatprep.subr.bf16.mxu0 0
        %1737 = vmatpush1.bf16.msra.mxu0 %v1718
        %1738 = vmatprep.subr.bf16.mxu0 0
        %1739 = vmatpush1.bf16.msra.mxu0 %v1717
        %1740 = vmatprep.subr.bf16.mxu0 0
        %1741 = vmatpush2.bf16.msra.mxu0 0
        %1742 = vmatprep.subr.bf16.mxu0 0
        %1743 = vmatpush2.bf16.msra.mxu0 0
        %1744 = vmatprep.subr.bf16.mxu0 0
        %1745 = vmatpush2.bf16.msra.mxu0 0
        %1746 = vmatprep.subr.bf16.mxu0 0
        %1747 = vmatpush2.bf16.msra.mxu0 0
        %1748 = vmatprep.subr.bf16.mxu0 0
        %1749 = vmatpush2.bf16.msra.mxu0 0
        %1750 = vmatprep.subr.bf16.mxu0 0
        %1751 = vmatpush2.bf16.msra.mxu0 0
        %1752 = vmatprep.subr.bf16.mxu0 0
        %1753 = vmatpush2.bf16.msra.mxu0 0
        %1754 = vmatprep.subr.bf16.mxu0 0
        %1755 = vmatpush2.bf16.msra.mxu0 0
        %1756 = vmatprep.mubr.bf16.mxu0 0
        %1757 = vmatmul.mubr.bf16.gmra.mxu0 %v1722
        %v1758 = vpop.f32.mrf.mxu0
        %v1759 = vadd.f32 %v1707, %v1758
        %v1760 = vpop.f32.mrf.mxu0
        %v1761 = vpop.f32.mrf.mxu0
        %v1762 = vadd.f32 %v1707, %v1761
        %v1763 = vpop.f32.mrf.mxu0
        %1764 = vdwg.mxu0
        %v1765 = vadd.f32 %v626, %v1759
        %v1766 = vadd.f32 %v627, %v1762
        %v1767 = vld [vmem:[%s11] sm:$0x1]
        %v1768 = vld [vmem:[%s12] sm:$0x1]
        %v1769 = vsel %vm630, %v1765, 0.0
        %1770 = vadd.xlane.f32.xlu0 %v1769
        %v1771 = vpop.xlane.xlu0 %1770
        %v1772 = vsel %vm630, %v1766, 0.0
        %1773 = vadd.xlane.f32.xlu0 %v1772
        %v1774 = vpop.xlane.xlu0 %1773
        %v1775 = vmul.f32 %v1771, %v637
        %v1776 = vmul.f32 %v1774, %v637
        %v1777 = vsub.f32 %v1765, %v1775
        %v1778 = vsub.f32 %v1766, %v1776
        %v1779 = vmul.f32 %v1777, %v1777
        %v1780 = vmul.f32 %v1778, %v1778
        %v1781 = vsel %vm630, %v1779, 0.0
        %1782 = vadd.xlane.f32.xlu0 %v1781
        %v1783 = vpop.xlane.xlu0 %1782
        %v1784 = vsel %vm630, %v1780, 0.0
        %1785 = vadd.xlane.f32.xlu0 %v1784
        %v1786 = vpop.xlane.xlu0 %1785
        %v1787 = vmul.f32 %v1783, %v637
        %v1788 = vmul.f32 %v1786, %v637
        %v1789 = vadd.f32 %v1787, 1e-05
        %v1790 = vadd.f32 %v1788, 1e-05
        %v1791 = vrsqrt.pop %v1789
        %v1792 = vrsqrt.pop %v1790
        %v1793 = vmul.f32 %v1777, %v1791
        %v1794 = vmul.f32 %v1778, %v1792
        %v1796 = vlaneseq
        %v1797 = vshrl.u32 %v1796, 7
        %v1798 = vsub.s32 0, %v1797
        %v1799 = vrot.slane %v1767, %v1798
        %v1801 = vmul.f32 %v1793, %v1799
        %v1802 = vmul.f32 %v1794, %v1799
        %v1804 = vlaneseq
        %v1805 = vshrl.u32 %v1804, 7
        %v1806 = vsub.s32 0, %v1805
        %v1807 = vrot.slane %v1768, %v1806
        %v1809 = vadd.f32 %v1801, %v1807
        %v1810 = vadd.f32 %v1802, %v1807
        %v1811 = vpack.c.bf16 %v1810, %v1809
        %v1812 = vld [vmem:[#allocation11] sm:$0xf]
        %v1813 = vld [vmem:[#allocation11 + $0x4] sm:$0xf]
        %v1814 = vld [vmem:[#allocation11 + $0x8] sm:$0xf]
        %v1815 = vld [vmem:[#allocation11 + $0xc] sm:$0xf]
        %v1816 = vld [vmem:[%s14] sm:$0x1]
        %v1818 = vlaneseq
        %v1819 = vshrl.u32 %v1818, 7
        %v1820 = vsub.s32 0, %v1819
        %v1821 = vrot.slane %v1816, %v1820
        %v1827 = vunpack.c.l.b16 %v1812
        %v1828 = vunpack.c.l.b16 %v1813
        %v1829 = vunpack.c.l.b16 %v1814
        %v1830 = vunpack.c.l.b16 %v1815
        %v1831 = vpack.c.b16 %v1828, %v1827
        %v1832 = vpack.c.b16 %v1830, %v1829
        %v1836 = vsel %vm630, %v1811, 0
        %1838 = vmatprep.subr.bf16.mxu0 0
        %1839 = vmatpush1.bf16.msra.mxu0 0
        %1840 = vmatprep.subr.bf16.mxu0 0
        %1841 = vmatpush1.bf16.msra.mxu0 0
        %1842 = vmatprep.subr.bf16.mxu0 0
        %1843 = vmatpush1.bf16.msra.mxu0 0
        %1844 = vmatprep.subr.bf16.mxu0 0
        %1845 = vmatpush1.bf16.msra.mxu0 0
        %1846 = vmatprep.subr.bf16.mxu0 0
        %1847 = vmatpush1.bf16.msra.mxu0 0
        %1848 = vmatprep.subr.bf16.mxu0 0
        %1849 = vmatpush1.bf16.msra.mxu0 0
        %1850 = vmatprep.subr.bf16.mxu0 0
        %1851 = vmatpush1.bf16.msra.mxu0 %v1832
        %1852 = vmatprep.subr.bf16.mxu0 0
        %1853 = vmatpush1.bf16.msra.mxu0 %v1831
        %1854 = vmatprep.subr.bf16.mxu0 0
        %1855 = vmatpush2.bf16.msra.mxu0 0
        %1856 = vmatprep.subr.bf16.mxu0 0
        %1857 = vmatpush2.bf16.msra.mxu0 0
        %1858 = vmatprep.subr.bf16.mxu0 0
        %1859 = vmatpush2.bf16.msra.mxu0 0
        %1860 = vmatprep.subr.bf16.mxu0 0
        %1861 = vmatpush2.bf16.msra.mxu0 0
        %1862 = vmatprep.subr.bf16.mxu0 0
        %1863 = vmatpush2.bf16.msra.mxu0 0
        %1864 = vmatprep.subr.bf16.mxu0 0
        %1865 = vmatpush2.bf16.msra.mxu0 0
        %1866 = vmatprep.subr.bf16.mxu0 0
        %1867 = vmatpush2.bf16.msra.mxu0 0
        %1868 = vmatprep.subr.bf16.mxu0 0
        %1869 = vmatpush2.bf16.msra.mxu0 0
        %1870 = vmatprep.mubr.bf16.mxu0 0
        %1871 = vmatmul.mubr.bf16.gmra.mxu0 %v1836
        %v1872 = vpop.f32.mrf.mxu0
        %v1873 = vadd.f32 %v1821, %v1872
        %v1874 = vpop.f32.mrf.mxu0
        %v1875 = vpop.f32.mrf.mxu0
        %v1876 = vadd.f32 %v1821, %v1875
        %v1877 = vpop.f32.mrf.mxu0
        %1878 = vdwg.mxu0
        %v1879 = vmax.f32 %v1873, 0.0
        %v1880 = vmax.f32 %v1876, 0.0
        %v1881 = vpack.c.bf16 %v1880, %v1879
        %v1882 = vld [vmem:[%s15] sm:$0xf]
        %v1883 = vld [vmem:[%s15 + $0x4] sm:$0xf]
        %v1884 = vld [vmem:[%s15 + $0x8] sm:$0xf]
        %v1885 = vld [vmem:[%s15 + $0xc] sm:$0xf]
        %v1886 = vld [vmem:[%s15 + $0x10] sm:$0xf]
        %v1887 = vld [vmem:[%s15 + $0x14] sm:$0xf]
        %v1888 = vld [vmem:[%s15 + $0x18] sm:$0xf]
        %v1889 = vld [vmem:[%s15 + $0x1c] sm:$0xf]
        %v1890 = vld [vmem:[%s15 + $0x20] sm:$0xf]
        %v1891 = vld [vmem:[%s15 + $0x24] sm:$0xf]
        %v1892 = vld [vmem:[%s15 + $0x28] sm:$0xf]
        %v1893 = vld [vmem:[%s15 + $0x2c] sm:$0xf]
        %v1894 = vld [vmem:[%s15 + $0x30] sm:$0xf]
        %v1895 = vld [vmem:[%s15 + $0x34] sm:$0xf]
        %v1896 = vld [vmem:[%s15 + $0x38] sm:$0xf]
        %v1897 = vld [vmem:[%s15 + $0x3c] sm:$0xf]
        %v1898 = vld [vmem:[%s16] sm:$0x1]
        %v1900 = vlaneseq
        %v1901 = vshrl.u32 %v1900, 7
        %v1902 = vsub.s32 0, %v1901
        %v1903 = vrot.slane %v1898, %v1902
        %v1921 = vunpack.c.l.b16 %v1882
        %v1922 = vunpack.c.l.b16 %v1883
        %v1923 = vunpack.c.l.b16 %v1884
        %v1924 = vunpack.c.l.b16 %v1885
        %v1925 = vunpack.c.l.b16 %v1886
        %v1926 = vunpack.c.l.b16 %v1887
        %v1927 = vunpack.c.l.b16 %v1888
        %v1928 = vunpack.c.l.b16 %v1889
        %v1929 = vunpack.c.l.b16 %v1890
        %v1930 = vunpack.c.l.b16 %v1891
        %v1931 = vunpack.c.l.b16 %v1892
        %v1932 = vunpack.c.l.b16 %v1893
        %v1933 = vunpack.c.l.b16 %v1894
        %v1934 = vunpack.c.l.b16 %v1895
        %v1935 = vunpack.c.l.b16 %v1896
        %v1936 = vunpack.c.l.b16 %v1897
        %v1937 = vpack.c.b16 %v1922, %v1921
        %v1938 = vpack.c.b16 %v1924, %v1923
        %v1939 = vpack.c.b16 %v1926, %v1925
        %v1940 = vpack.c.b16 %v1928, %v1927
        %v1941 = vpack.c.b16 %v1930, %v1929
        %v1942 = vpack.c.b16 %v1932, %v1931
        %v1943 = vpack.c.b16 %v1934, %v1933
        %v1944 = vpack.c.b16 %v1936, %v1935
        %1953 = vmatprep.subr.bf16.mxu0 0
        %1954 = vmatpush1.bf16.msra.mxu0 %v1944
        %1955 = vmatprep.subr.bf16.mxu0 0
        %1956 = vmatpush1.bf16.msra.mxu0 %v1943
        %1957 = vmatprep.subr.bf16.mxu0 0
        %1958 = vmatpush1.bf16.msra.mxu0 %v1942
        %1959 = vmatprep.subr.bf16.mxu0 0
        %1960 = vmatpush1.bf16.msra.mxu0 %v1941
        %1961 = vmatprep.subr.bf16.mxu0 0
        %1962 = vmatpush1.bf16.msra.mxu0 %v1940
        %1963 = vmatprep.subr.bf16.mxu0 0
        %1964 = vmatpush1.bf16.msra.mxu0 %v1939
        %1965 = vmatprep.subr.bf16.mxu0 0
        %1966 = vmatpush1.bf16.msra.mxu0 %v1938
        %1967 = vmatprep.subr.bf16.mxu0 0
        %1968 = vmatpush1.bf16.msra.mxu0 %v1937
        %1969 = vmatprep.subr.bf16.mxu0 0
        %1970 = vmatpush2.bf16.msra.mxu0 0
        %1971 = vmatprep.subr.bf16.mxu0 0
        %1972 = vmatpush2.bf16.msra.mxu0 0
        %1973 = vmatprep.subr.bf16.mxu0 0
        %1974 = vmatpush2.bf16.msra.mxu0 0
        %1975 = vmatprep.subr.bf16.mxu0 0
        %1976 = vmatpush2.bf16.msra.mxu0 0
        %1977 = vmatprep.subr.bf16.mxu0 0
        %1978 = vmatpush2.bf16.msra.mxu0 0
        %1979 = vmatprep.subr.bf16.mxu0 0
        %1980 = vmatpush2.bf16.msra.mxu0 0
        %1981 = vmatprep.subr.bf16.mxu0 0
        %1982 = vmatpush2.bf16.msra.mxu0 0
        %1983 = vmatprep.subr.bf16.mxu0 0
        %1984 = vmatpush2.bf16.msra.mxu0 0
        %1985 = vmatprep.mubr.bf16.mxu0 0
        %1986 = vmatmul.mubr.bf16.gmra.mxu0 %v1881
        %v1987 = vpop.f32.mrf.mxu0
        %v1988 = vadd.f32 %v1903, %v1987
        %v1989 = vpop.f32.mrf.mxu0
        %v1990 = vpop.f32.mrf.mxu0
        %v1991 = vadd.f32 %v1903, %v1990
        %v1992 = vpop.f32.mrf.mxu0
        %1993 = vdwg.mxu0
        %v1994 = vadd.f32 %v1765, %v1988
        %v1995 = vadd.f32 %v1766, %v1991
        %1996 = vst.msk [vmem:[%s619] sm:$0xff] %vm630, %v1994
        %1997 = vst.msk [vmem:[%s619 + $0x8] sm:$0xff] %vm630, %v1995
        %s1998 = sand.u32 %s405, 1
        %s1999 = scalar_lea.sflag [#allocation4], %s1998
        %s2000 = sand.u32 %s405, 1
        %s2001 = smul.addr %s2000, 16
        %s2002 = scalar_lea.vmem [#allocation13], %s2001
        // Predicated region
        $region113: #{tpu_custom_call.1} parent=87 // pred_check
          %p2003 = pneg %p415
        $region114: #{tpu_custom_call.1} parent=87 // pred_check_branch
          %2005 = sbr.rel (%p2003) target = $region116
        $region115: #{tpu_custom_call.1} parent=87 // pred_region
          %s2007 = ssub.s32 256, 256
          %2008 = vsyncadd %s1999, %s2007
          %s2009 = smul.addr %s35, 2
          %s2010 = smul.addr %s2009, 128
          %s2011 = scalar_lea.hbm %s17, %s2010
          %s2012 = sshll.u32 %s2002, 4
          %s2013 = int_to_ptr.vmem [resolvable:$true] %s2012
          %2018 = dma.vmem_to_hbm [thread:$0]  %s2013, 256, %s2011, %s1999, 128, 128, 8
        $region116: #{tpu_custom_call.1} parent=87 // pred_fallthru
          _
      $region88: #{tpu_custom_call.1} parent=5 // pred_fallthru
        _
      %p2019 = scmp.le.s32.totalorder 2, %s30
      // Predicated region
      $region117: #{tpu_custom_call.1} parent=5 // pred_check
        %p2020 = pneg %p2019
      $region118: #{tpu_custom_call.1} parent=5 // pred_check_branch
        %2022 = sbr.rel (%p2020) target = $region120
      $region119: #{tpu_custom_call.1} parent=5 // pred_region
        %s2023 = ssub.s32 %s30, 2
        // Predicated region
        $region121: #{tpu_custom_call.1} parent=119 // pred_check
          %p2024 = pneg %p421
        $region122: #{tpu_custom_call.1} parent=119 // pred_check_branch
          %2026 = sbr.rel (%p2024) target = $region124
        $region123: #{tpu_custom_call.1} parent=119 // pred_region
          %s2027 = sand.u32 %s406, 1
          %s2028 = scalar_lea.sflag [#allocation4], %s2027
          %s2029 = sand.u32 %s406, 1
          %s2030 = smul.addr %s2029, 16
          %s2031 = scalar_lea.vmem [#allocation13], %s2030
          %2032 = dma.done %s2028, 256
        $region124: #{tpu_custom_call.1} parent=119 // pred_fallthru
          _
      $region120: #{tpu_custom_call.1} parent=5 // pred_fallthru
        _
    $region6: #{tpu_custom_call.1} parent=1 // loop_footer
      %s34 = sadd.s32 1, %s30
    $region7: #{tpu_custom_call.1} parent=1 // loop_footer_branch
      %29 = sbr.rel target = $region3
    $region8: #{tpu_custom_call.1} parent=1 // loop_exit
      _
    %2033 = vsyncpa [#allocation3], 1
    %s2034 = scalar_lea.sflag [#allocation3], 1
    %2035 = vsyncpa %s2034, 1
    %2036 = vsyncpa [#allocation6], 1
    %2037 = vsyncpa [#allocation9], 1
    %2038 = vsyncpa [#allocation12], 1
    %2039 = vsyncpa [#allocation4], 1
    %s2040 = scalar_lea.sflag [#allocation4], 1
    %2041 = vsyncpa %s2040, 1

</llo_original>
